<compile_context>
chip_gen: v6e
topology: v6e:2x2x1
jax: 0.10.0
libtpu: 0.0.40
codegen_flags: <defaults>
</compile_context>

<pallas_src>
import jax
import jax.numpy as jnp
from jax.experimental import pallas as pl
from jax.experimental.pallas import tpu as pltpu

HID = 1024
OUT_PAD = 128  # Linear(1024,1) padded to 128 lanes for a dense, unmasked store


def _round_up(x, m):
    return (x + m - 1) // m * m


# ------------------------------ Pallas kernel -------------------------------


def _mlp_kernel(x_ref, w1_ref, b1_ref, w2_ref, b2_ref, w3_ref, b3_ref, o_ref):
    # x: (TB, P) bf16      w1: (P, HID) bf16       b1: (1, HID) f32
    # w2: (HID, HID) bf16  b2: (1, HID) f32
    # w3: (HID, OUT_PAD) bf16   b3: (1, OUT_PAD) f32   o: (TB, OUT_PAD) f32
    h = jnp.dot(x_ref[...], w1_ref[...], preferred_element_type=jnp.float32)
    h = jnp.maximum(h + b1_ref[...], 0.0)           # Dropout (eval) == identity
    h = h.astype(jnp.bfloat16)                      # bf16 into the next MXU pass
    h = jnp.dot(h, w2_ref[...], preferred_element_type=jnp.float32)
    h = jnp.maximum(h + b2_ref[...], 0.0)
    h = h.astype(jnp.bfloat16)
    z = jnp.dot(h, w3_ref[...], preferred_element_type=jnp.float32) + b3_ref[...]
    # sigmoid: exp on the EUP, approximate reciprocal also on the EUP slot.
    o_ref[...] = pl.reciprocal(1.0 + jnp.exp(-z), approx=True).astype(o_ref.dtype)


def only_cluster_labels_forward(params, inputs, labels):
    """Replicates OnlyClusterLabels.forward: ignores `inputs`, MLP on labels."""
    del inputs  # the module's forward never uses `inputs`
    # labels are {0,1}: the bf16 cast is exact and halves the input DMA.
    x = labels.astype(jnp.bfloat16)
    B, P = x.shape

    # Row tile: multiple of 16 (bf16 packs 2 rows / sublane), capped at 512,
    # and sized so we get >= 2 batch tiles once B allows it (v7x megacore).
    TB = min(512, max(16, _round_up(pl.cdiv(B, 2), 16)))
    grid = (pl.cdiv(B, TB),)  # last block may be partial; Pallas masks the store

    out = pl.pallas_call(
        _mlp_kernel,
        out_shape=jax.ShapeDtypeStruct((B, OUT_PAD), jnp.float32),
        grid=grid,
        in_specs=[
            pl.BlockSpec((TB, P), lambda i: (i, 0)),          # activations
            pl.BlockSpec((P, HID), lambda i: (0, 0)),          # w1 (VMEM resident)
            pl.BlockSpec((1, HID), lambda i: (0, 0)),          # b1
            pl.BlockSpec((HID, HID), lambda i: (0, 0)),        # w2 (VMEM resident)
            pl.BlockSpec((1, HID), lambda i: (0, 0)),          # b2
            pl.BlockSpec((HID, OUT_PAD), lambda i: (0, 0)),    # w3 (lane-padded)
            pl.BlockSpec((1, OUT_PAD), lambda i: (0, 0)),      # b3 (lane-padded)
        ],
        out_specs=pl.BlockSpec((TB, OUT_PAD), lambda i: (i, 0)),
        compiler_params=pltpu.CompilerParams(
            dimension_semantics=("parallel",),  # batch tiles -> megacore on v7x
        ),
    )(x, params["w1_bf"], params["b1"], params["w2_bf"], params["b2"],
      params["w3p_bf"], params["b3p"])

    return out[:B, :1]  # real output column, shape (B, 1)


# ------------------------------ parameters ----------------------------------


def init_params(key, n_cluster_params):
    """Deterministic synthetic params; torch Linear weights stored as (in, out)."""
    ks = jax.random.split(key, 6)
    s1 = 1.0 / float(n_cluster_params) ** 0.5
    s2 = 1.0 / float(HID) ** 0.5
    w1 = jax.random.uniform(ks[0], (n_cluster_params, HID), jnp.float32, -s1, s1)
    b1 = jax.random.uniform(ks[1], (1, HID), jnp.float32, -s1, s1)
    w2 = jax.random.uniform(ks[2], (HID, HID), jnp.float32, -s2, s2)
    b2 = jax.random.uniform(ks[3], (1, HID), jnp.float32, -s2, s2)
    w3 = jax.random.uniform(ks[4], (HID, 1), jnp.float32, -s2, s2)
    b3 = jax.random.uniform(ks[5], (1, 1), jnp.float32, -s2, s2)
    # Last layer zero-padded to 128 lanes: lane 0 is the real column, lanes
    # 1..127 are discarded by the wrapper slice.
    w3p = jnp.pad(w3, ((0, 0), (0, OUT_PAD - 1)))
    b3p = jnp.pad(b3, ((0, 0), (0, OUT_PAD - 1)))
    return {
        # f32 master copies (reference)
        "w1": w1, "b1": b1, "w2": w2, "b2": b2, "w3": w3, "b3": b3, "b3p": b3p,
        # kernel-side copies: bf16 weights (half the HBM->VMEM DMA, native MXU
        # path); biases stay f32 and are added to the f32 accumulator.
        "w1_bf": w1.astype(jnp.bfloat16),
        "w2_bf": w2.astype(jnp.bfloat16),
        "w3p_bf": w3p.astype(jnp.bfloat16),
    }


# ------------------------- pure-JAX reference check --------------------------


def forward_ref(params, inputs, labels):
    del inputs
    x = labels.astype(jnp.float32)
    hp = jax.lax.Precision.HIGHEST
    h = jnp.maximum(jnp.dot(x, params["w1"], precision=hp) + params["b1"], 0.0)
    h = jnp.maximum(jnp.dot(h, params["w2"], precision=hp) + params["b2"], 0.0)
    z = jnp.dot(h, params["w3"], precision=hp) + params["b3"]
    return jax.nn.sigmoid(z)


# ----------------------------------- main ------------------------------------

if __name__ == "__main__":
    B, N_CLUSTER_PARAMS = 2, 32
    key = jax.random.PRNGKey(0)
    pkey, lkey, ikey = jax.random.split(key, 3)

    params = init_params(pkey, N_CLUSTER_PARAMS)
    labels = jax.random.bernoulli(lkey, 0.3, (B, N_CLUSTER_PARAMS)).astype(jnp.int32)
    inputs = jax.random.normal(ikey, (B, 8), jnp.float32)  # unused by forward

    out = jax.block_until_ready(only_cluster_labels_forward(params, inputs, labels))
    assert out.shape == (B, 1), out.shape
    # Finite-ness checked on the valid (sliced) rows only; padded rows of the
    # partial batch block never reach HBM.
    assert bool(jnp.isfinite(out).all())

    ref = jax.block_until_ready(forward_ref(params, inputs, labels))
    # bf16 weights/activations vs. the f32 HIGHEST-precision reference: allow ~1e-2.
    max_err = float(jnp.max(jnp.abs(out - ref)))
    assert max_err < 1e-2, max_err
    print("KERNEL_OK")
</pallas_src>

<mosaic_0001>
module attributes {stable_mosaic.version = 11 : i64} {
  func.func @_mlp_kernel(%arg0: i32, %arg1: memref<16x32xbf16, #tpu.memory_space<vmem>>, %arg2: memref<32x1024xbf16, #tpu.memory_space<vmem>>, %arg3: memref<1x1024xf32, #tpu.memory_space<vmem>>, %arg4: memref<1024x1024xbf16, #tpu.memory_space<vmem>>, %arg5: memref<1x1024xf32, #tpu.memory_space<vmem>>, %arg6: memref<1024x128xbf16, #tpu.memory_space<vmem>>, %arg7: memref<1x128xf32, #tpu.memory_space<vmem>>, %arg8: memref<16x128xf32, #tpu.memory_space<vmem>>) attributes {dimension_semantics = [#tpu.dimension_semantics<parallel>], iteration_bounds = array<i64: 1>, scalar_prefetch = 0 : i64, scratch_operands = 0 : i64, tpu.core_type = #tpu.core_type<tc>, window_params = [{transform_indices = @transform_0, window_bounds = array<i64: 16, 32>}, {pipeline_mode = #tpu.pipeline_mode<synchronous>, transform_indices = @transform_1, window_bounds = array<i64: 32, 1024>}, {pipeline_mode = #tpu.pipeline_mode<synchronous>, transform_indices = @transform_2, window_bounds = array<i64: 1, 1024>}, {pipeline_mode = #tpu.pipeline_mode<synchronous>, transform_indices = @transform_3, window_bounds = array<i64: 1024, 1024>}, {pipeline_mode = #tpu.pipeline_mode<synchronous>, transform_indices = @transform_4, window_bounds = array<i64: 1, 1024>}, {pipeline_mode = #tpu.pipeline_mode<synchronous>, transform_indices = @transform_5, window_bounds = array<i64: 1024, 128>}, {pipeline_mode = #tpu.pipeline_mode<synchronous>, transform_indices = @transform_6, window_bounds = array<i64: 1, 128>}, {transform_indices = @transform_7, window_bounds = array<i64: 16, 128>}]} {
    %c0 = arith.constant 0 : index
    %c0_0 = arith.constant 0 : index
    %0 = vector.load %arg1[%c0, %c0_0] : memref<16x32xbf16, #tpu.memory_space<vmem>>, vector<16x32xbf16>
    %c0_1 = arith.constant 0 : index
    %c0_2 = arith.constant 0 : index
    %1 = vector.load %arg2[%c0_1, %c0_2] : memref<32x1024xbf16, #tpu.memory_space<vmem>>, vector<32x1024xbf16>
    %cst = arith.constant dense<0.000000e+00> : vector<16x1024xf32>
    %2 = tpu.matmul %0, %1, %cst {dimension_numbers = #tpu.dot_dimension_numbers<[1], [0], [0], [1], [0, 0, 1, 1], [], []>} : vector<16x32xbf16>, vector<32x1024xbf16>, vector<16x1024xf32> -> vector<16x1024xf32>
    %c0_3 = arith.constant 0 : index
    %c0_4 = arith.constant 0 : index
    %3 = vector.load %arg3[%c0_3, %c0_4] : memref<1x1024xf32, #tpu.memory_space<vmem>>, vector<1x1024xf32>
    %4 = vector.broadcast %3 : vector<1x1024xf32> to vector<16x1024xf32>
    %5 = arith.addf %2, %4 : vector<16x1024xf32>
    %cst_5 = arith.constant 0.000000e+00 : f32
    %6 = vector.broadcast %cst_5 : f32 to vector<16x1024xf32>
    %7 = arith.maximumf %5, %6 : vector<16x1024xf32>
    %8 = arith.truncf %7 : vector<16x1024xf32> to vector<16x1024xbf16>
    %c0_6 = arith.constant 0 : index
    %c0_7 = arith.constant 0 : index
    %9 = vector.load %arg4[%c0_6, %c0_7] : memref<1024x1024xbf16, #tpu.memory_space<vmem>>, vector<1024x1024xbf16>
    %cst_8 = arith.constant dense<0.000000e+00> : vector<16x1024xf32>
    %10 = tpu.matmul %8, %9, %cst_8 {dimension_numbers = #tpu.dot_dimension_numbers<[1], [0], [0], [1], [0, 0, 1, 1], [], []>} : vector<16x1024xbf16>, vector<1024x1024xbf16>, vector<16x1024xf32> -> vector<16x1024xf32>
    %c0_9 = arith.constant 0 : index
    %c0_10 = arith.constant 0 : index
    %11 = vector.load %arg5[%c0_9, %c0_10] : memref<1x1024xf32, #tpu.memory_space<vmem>>, vector<1x1024xf32>
    %12 = vector.broadcast %11 : vector<1x1024xf32> to vector<16x1024xf32>
    %13 = arith.addf %10, %12 : vector<16x1024xf32>
    %cst_11 = arith.constant 0.000000e+00 : f32
    %14 = vector.broadcast %cst_11 : f32 to vector<16x1024xf32>
    %15 = arith.maximumf %13, %14 : vector<16x1024xf32>
    %16 = arith.truncf %15 : vector<16x1024xf32> to vector<16x1024xbf16>
    %c0_12 = arith.constant 0 : index
    %c0_13 = arith.constant 0 : index
    %17 = vector.load %arg6[%c0_12, %c0_13] : memref<1024x128xbf16, #tpu.memory_space<vmem>>, vector<1024x128xbf16>
    %cst_14 = arith.constant dense<0.000000e+00> : vector<16x128xf32>
    %18 = tpu.matmul %16, %17, %cst_14 {dimension_numbers = #tpu.dot_dimension_numbers<[1], [0], [0], [1], [0, 0, 1, 1], [], []>} : vector<16x1024xbf16>, vector<1024x128xbf16>, vector<16x128xf32> -> vector<16x128xf32>
    %c0_15 = arith.constant 0 : index
    %c0_16 = arith.constant 0 : index
    %19 = vector.load %arg7[%c0_15, %c0_16] : memref<1x128xf32, #tpu.memory_space<vmem>>, vector<1x128xf32>
    %20 = vector.broadcast %19 : vector<1x128xf32> to vector<16x128xf32>
    %21 = arith.addf %18, %20 : vector<16x128xf32>
    %cst_17 = arith.constant 0.000000e+00 : f32
    %22 = vector.broadcast %cst_17 : f32 to vector<16x128xf32>
    %23 = arith.subf %22, %21 : vector<16x128xf32>
    %24 = math.exp %23 : vector<16x128xf32>
    %cst_18 = arith.constant 1.000000e+00 : f32
    %25 = vector.broadcast %cst_18 : f32 to vector<16x128xf32>
    %26 = arith.addf %25, %24 : vector<16x128xf32>
    %27 = tpu.reciprocal %26 {approx = true} : vector<16x128xf32> -> vector<16x128xf32>
    %c0_19 = arith.constant 0 : index
    %c0_20 = arith.constant 0 : index
    %28 = vector.load %arg8[%c0_19, %c0_20] : memref<16x128xf32, #tpu.memory_space<vmem>>, vector<16x128xf32>
    tpu.vector_store %arg8[%c0_19, %c0_20], %27 {strides = array<i32>} : memref<16x128xf32, #tpu.memory_space<vmem>>, vector<16x128xf32>,
    return
  }
  func.func @transform_0(%arg0: i32) -> (i32, i32) {
    %c0_i32 = arith.constant 0 : i32
    %c0_i32_0 = arith.constant 0 : i32
    return %arg0, %c0_i32 : i32, i32
  }
  func.func @transform_1(%arg0: i32) -> (i32, i32) {
    %c0_i32 = arith.constant 0 : i32
    %c0_i32_0 = arith.constant 0 : i32
    %c0_i32_1 = arith.constant 0 : i32
    return %c0_i32, %c0_i32_0 : i32, i32
  }
  func.func @transform_2(%arg0: i32) -> (i32, i32) {
    %c0_i32 = arith.constant 0 : i32
    %c0_i32_0 = arith.constant 0 : i32
    %c0_i32_1 = arith.constant 0 : i32
    return %c0_i32, %c0_i32_0 : i32, i32
  }
  func.func @transform_3(%arg0: i32) -> (i32, i32) {
    %c0_i32 = arith.constant 0 : i32
    %c0_i32_0 = arith.constant 0 : i32
    %c0_i32_1 = arith.constant 0 : i32
    return %c0_i32, %c0_i32_0 : i32, i32
  }
  func.func @transform_4(%arg0: i32) -> (i32, i32) {
    %c0_i32 = arith.constant 0 : i32
    %c0_i32_0 = arith.constant 0 : i32
    %c0_i32_1 = arith.constant 0 : i32
    return %c0_i32, %c0_i32_0 : i32, i32
  }
  func.func @transform_5(%arg0: i32) -> (i32, i32) {
    %c0_i32 = arith.constant 0 : i32
    %c0_i32_0 = arith.constant 0 : i32
    %c0_i32_1 = arith.constant 0 : i32
    return %c0_i32, %c0_i32_0 : i32, i32
  }
  func.func @transform_6(%arg0: i32) -> (i32, i32) {
    %c0_i32 = arith.constant 0 : i32
    %c0_i32_0 = arith.constant 0 : i32
    %c0_i32_1 = arith.constant 0 : i32
    return %c0_i32, %c0_i32_0 : i32, i32
  }
  func.func @transform_7(%arg0: i32) -> (i32, i32) {
    %c0_i32 = arith.constant 0 : i32
    %c0_i32_0 = arith.constant 0 : i32
    return %arg0, %c0_i32 : i32, i32
  }
}

</mosaic_0001>

<llo_original>
// kernel: tpu_custom_call.1
$region0: #{tpu_custom_call.1}
  #allocation0 [shape = 'u32[]', space=smem, size = 0x4, offset = 0x4, fixed_abs, tag = 'smem constant byte address 0x4 - core index']
  #allocation1 [shape = 'u32[144,128]{1,0:T(1,128)}', space=vmem, size = 0x12000, scoped, tag = 'internal scratch']
  %s0 = inlined_call_operand.hbm [shape: bf16[2,32], index: 0, kind: input, shape index: {}]
  %s1 = inlined_call_operand.hbm [shape: bf16[32,1024], index: 1, kind: input, shape index: {}]
  %s2 = inlined_call_operand.hbm [shape: f32[1,1024], index: 2, kind: input, shape index: {}]
  %s3 = inlined_call_operand.hbm [shape: bf16[1024,1024], index: 3, kind: input, shape index: {}]
  %s4 = inlined_call_operand.hbm [shape: f32[1,1024], index: 4, kind: input, shape index: {}]
  %s5 = inlined_call_operand.hbm [shape: bf16[1024,128], index: 5, kind: input, shape index: {}]
  %s6 = inlined_call_operand.hbm [shape: f32[1,128], index: 6, kind: input, shape index: {}]
  %s7 = inlined_call_operand.hbm [shape: f32[2,128], index: 7, kind: output, shape index: {}]
  %s8 = sld [smem:[#allocation0]]
  $region66: #{tpu_custom_call.1} parent=0
    _
  %s10 = ssub.s32 1, %s8
  %s11 = scalar_select 0, %s10, %s8
  $region1: #{tpu_custom_call.1} parent=0
    #allocation2 [shape = 'u8[4096]{0}', space=vmem, size = 0x1000, scoped, tag = 'input window, operand 0, single buffered']
    #allocation3 [shape = 's32[1]{0}', space=sflag, size = 0x4, scoped, tag = 'scoped memory for tpu_custom_call.1']
    #allocation4 [shape = 's32[1]{0}', space=sflag, size = 0x4, scoped, tag = 'scoped memory for tpu_custom_call.1']
    #allocation5 [shape = 'u8[65536]{0}', space=vmem, size = 0x10000, scoped, tag = 'input window, operand 1, single buffered']
    #allocation6 [shape = 's32[1]{0}', space=sflag, size = 0x4, scoped, tag = 'scoped memory for tpu_custom_call.1']
    #allocation7 [shape = 'u8[4096]{0}', space=vmem, size = 0x1000, scoped, tag = 'input window, operand 2, single buffered']
    #allocation8 [shape = 'u8[2097152]{0}', space=vmem, size = 0x200000, scoped, tag = 'input window, operand 3, single buffered']
    #allocation9 [shape = 's32[1]{0}', space=sflag, size = 0x4, scoped, tag = 'scoped memory for tpu_custom_call.1']
    #allocation10 [shape = 'u8[4096]{0}', space=vmem, size = 0x1000, scoped, tag = 'input window, operand 4, single buffered']
    #allocation11 [shape = 'u8[262144]{0}', space=vmem, size = 0x40000, scoped, tag = 'input window, operand 5, single buffered']
    #allocation12 [shape = 's32[1]{0}', space=sflag, size = 0x4, scoped, tag = 'scoped memory for tpu_custom_call.1']
    #allocation13 [shape = 'u8[512]{0}', space=vmem, size = 0x400, scoped, tag = 'input window, operand 6, single buffered']
    #allocation14 [shape = 'u8[8192]{0}', space=vmem, size = 0x2000, scoped, tag = 'output window, operand 0, single buffered']
    %12 = vsyncpa [#allocation3], 0
    %13 = vsyncpa [#allocation6], 0
    %14 = vsyncpa [#allocation9], 0
    %15 = vsyncpa [#allocation12], 0
    %16 = vsyncpa [#allocation4], 0
    // Predicated region
    $region2: #{tpu_custom_call.1} parent=1 // pred_check
      _
    $region3: #{tpu_custom_call.1} parent=1 // pred_check_branch
      %18 = sbr.rel (0) target = $region5
    $region4: #{tpu_custom_call.1} parent=1 // pred_region
      %s20 = ssub.s32 128, 16
      %21 = vsyncadd [#allocation3], %s20
      %s22 = sshll.u32 [#allocation2], 4
      %s23 = int_to_ptr.vmem [resolvable:$true] %s22
      %28 = dma.hbm_to_vmem [thread:$0]  %s0, 16, %s23, [#allocation3], 16, 16, 1
    $region5: #{tpu_custom_call.1} parent=1 // pred_fallthru
      _
    // Predicated region
    $region6: #{tpu_custom_call.1} parent=1 // pred_check
      _
    $region7: #{tpu_custom_call.1} parent=1 // pred_check_branch
      %30 = sbr.rel (0) target = $region9
    $region8: #{tpu_custom_call.1} parent=1 // pred_region
      %s32 = ssub.s32 2048, 2048
      %33 = vsyncadd [#allocation6], %s32
      %s34 = sshll.u32 [#allocation5], 4
      %s35 = int_to_ptr.vmem [resolvable:$true] %s34
      %40 = dma.hbm_to_vmem [thread:$0]  %s1, 2048, %s35, [#allocation6], 512, 512, 32
    $region9: #{tpu_custom_call.1} parent=1 // pred_fallthru
      _
    // Predicated region
    $region10: #{tpu_custom_call.1} parent=1 // pred_check
      _
    $region11: #{tpu_custom_call.1} parent=1 // pred_check_branch
      %42 = sbr.rel (0) target = $region13
    $region12: #{tpu_custom_call.1} parent=1 // pred_region
      %s44 = ssub.s32 128, 128
      %45 = vsyncadd [#allocation6], %s44
      %s47 = sshll.u32 [#allocation7], 4
      %s48 = int_to_ptr.vmem [resolvable:$true] %s47
      %50 = dma.hbm_to_vmem [thread:$0]  %s2, 128, %s48, [#allocation6]
    $region13: #{tpu_custom_call.1} parent=1 // pred_fallthru
      _
    // Predicated region
    $region14: #{tpu_custom_call.1} parent=1 // pred_check
      _
    $region15: #{tpu_custom_call.1} parent=1 // pred_check_branch
      %52 = sbr.rel (0) target = $region17
    $region16: #{tpu_custom_call.1} parent=1 // pred_region
      %s54 = ssub.s32 65536, 65536
      %55 = vsyncadd [#allocation9], %s54
      %s56 = sshll.u32 [#allocation8], 4
      %s57 = int_to_ptr.vmem [resolvable:$true] %s56
      %62 = dma.hbm_to_vmem [thread:$0]  %s3, 65536, %s57, [#allocation9], 512, 512, 32
    $region17: #{tpu_custom_call.1} parent=1 // pred_fallthru
      _
    // Predicated region
    $region18: #{tpu_custom_call.1} parent=1 // pred_check
      _
    $region19: #{tpu_custom_call.1} parent=1 // pred_check_branch
      %64 = sbr.rel (0) target = $region21
    $region20: #{tpu_custom_call.1} parent=1 // pred_region
      %s66 = ssub.s32 128, 128
      %67 = vsyncadd [#allocation9], %s66
      %s69 = sshll.u32 [#allocation10], 4
      %s70 = int_to_ptr.vmem [resolvable:$true] %s69
      %72 = dma.hbm_to_vmem [thread:$0]  %s4, 128, %s70, [#allocation9]
    $region21: #{tpu_custom_call.1} parent=1 // pred_fallthru
      _
    // Predicated region
    $region22: #{tpu_custom_call.1} parent=1 // pred_check
      _
    $region23: #{tpu_custom_call.1} parent=1 // pred_check_branch
      %74 = sbr.rel (0) target = $region25
    $region24: #{tpu_custom_call.1} parent=1 // pred_region
      %s76 = ssub.s32 8192, 8192
      %77 = vsyncadd [#allocation12], %s76
      %s78 = sshll.u32 [#allocation11], 4
      %s79 = int_to_ptr.vmem [resolvable:$true] %s78
      %84 = dma.hbm_to_vmem [thread:$0]  %s5, 8192, %s79, [#allocation12], 64, 64, 4
    $region25: #{tpu_custom_call.1} parent=1 // pred_fallthru
      _
    // Predicated region
    $region26: #{tpu_custom_call.1} parent=1 // pred_check
      _
    $region27: #{tpu_custom_call.1} parent=1 // pred_check_branch
      %86 = sbr.rel (0) target = $region29
    $region28: #{tpu_custom_call.1} parent=1 // pred_region
      %s88 = ssub.s32 16, 16
      %89 = vsyncadd [#allocation12], %s88
      %s91 = sshll.u32 [#allocation13], 4
      %s92 = int_to_ptr.vmem [resolvable:$true] %s91
      %94 = dma.hbm_to_vmem [thread:$0]  %s6, 16, %s92, [#allocation12]
    $region29: #{tpu_custom_call.1} parent=1 // pred_fallthru
      _
    // Predicated region
    $region30: #{tpu_custom_call.1} parent=1 // pred_check
      _
    $region31: #{tpu_custom_call.1} parent=1 // pred_check_branch
      %96 = sbr.rel (0) target = $region33
    $region32: #{tpu_custom_call.1} parent=1 // pred_region
      %97 = dma.done [#allocation3], 128
    $region33: #{tpu_custom_call.1} parent=1 // pred_fallthru
      _
    // Predicated region
    $region34: #{tpu_custom_call.1} parent=1 // pred_check
      _
    $region35: #{tpu_custom_call.1} parent=1 // pred_check_branch
      %99 = sbr.rel (0) target = $region37
    $region36: #{tpu_custom_call.1} parent=1 // pred_region
      %100 = dma.done [#allocation6], 2048
    $region37: #{tpu_custom_call.1} parent=1 // pred_fallthru
      _
    // Predicated region
    $region38: #{tpu_custom_call.1} parent=1 // pred_check
      _
    $region39: #{tpu_custom_call.1} parent=1 // pred_check_branch
      %102 = sbr.rel (0) target = $region41
    $region40: #{tpu_custom_call.1} parent=1 // pred_region
      %103 = dma.done [#allocation6], 128
    $region41: #{tpu_custom_call.1} parent=1 // pred_fallthru
      _
    // Predicated region
    $region42: #{tpu_custom_call.1} parent=1 // pred_check
      _
    $region43: #{tpu_custom_call.1} parent=1 // pred_check_branch
      %105 = sbr.rel (0) target = $region45
    $region44: #{tpu_custom_call.1} parent=1 // pred_region
      %106 = dma.done [#allocation9], 65536
    $region45: #{tpu_custom_call.1} parent=1 // pred_fallthru
      _
    // Predicated region
    $region46: #{tpu_custom_call.1} parent=1 // pred_check
      _
    $region47: #{tpu_custom_call.1} parent=1 // pred_check_branch
      %108 = sbr.rel (0) target = $region49
    $region48: #{tpu_custom_call.1} parent=1 // pred_region
      %109 = dma.done [#allocation9], 128
    $region49: #{tpu_custom_call.1} parent=1 // pred_fallthru
      _
    // Predicated region
    $region50: #{tpu_custom_call.1} parent=1 // pred_check
      _
    $region51: #{tpu_custom_call.1} parent=1 // pred_check_branch
      %111 = sbr.rel (0) target = $region53
    $region52: #{tpu_custom_call.1} parent=1 // pred_region
      %112 = dma.done [#allocation12], 8192
    $region53: #{tpu_custom_call.1} parent=1 // pred_fallthru
      _
    // Predicated region
    $region54: #{tpu_custom_call.1} parent=1 // pred_check
      _
    $region55: #{tpu_custom_call.1} parent=1 // pred_check_branch
      %114 = sbr.rel (0) target = $region57
    $region56: #{tpu_custom_call.1} parent=1 // pred_region
      %115 = dma.done [#allocation12], 16
    $region57: #{tpu_custom_call.1} parent=1 // pred_fallthru
      _
    %v117 = vld [vmem:[#allocation2] sm:$0x1]
    %v118 = vld [vmem:[#allocation2 + $0x1] sm:$0x1]
    %v119 = vld [vmem:[#allocation2 + $0x2] sm:$0x1]
    %v120 = vld [vmem:[#allocation2 + $0x3] sm:$0x1]
    %v121 = vld [vmem:[#allocation2 + $0x4] sm:$0x1]
    %v122 = vld [vmem:[#allocation2 + $0x5] sm:$0x1]
    %v123 = vld [vmem:[#allocation2 + $0x6] sm:$0x1]
    %v124 = vld [vmem:[#allocation2 + $0x7] sm:$0x1]
    %v125 = vld [vmem:[#allocation5] sm:$0xff]
    %v126 = vld [vmem:[#allocation5 + $0x8] sm:$0xff]
    %v127 = vld [vmem:[#allocation5 + $0x10] sm:$0xff]
    %v128 = vld [vmem:[#allocation5 + $0x18] sm:$0xff]
    %v129 = vld [vmem:[#allocation5 + $0x20] sm:$0xff]
    %v130 = vld [vmem:[#allocation5 + $0x28] sm:$0xff]
    %v131 = vld [vmem:[#allocation5 + $0x30] sm:$0xff]
    %v132 = vld [vmem:[#allocation5 + $0x38] sm:$0xff]
    %v133 = vld [vmem:[#allocation5 + $0x40] sm:$0xff]
    %v134 = vld [vmem:[#allocation5 + $0x48] sm:$0xff]
    %v135 = vld [vmem:[#allocation5 + $0x50] sm:$0xff]
    %v136 = vld [vmem:[#allocation5 + $0x58] sm:$0xff]
    %v137 = vld [vmem:[#allocation5 + $0x60] sm:$0xff]
    %v138 = vld [vmem:[#allocation5 + $0x68] sm:$0xff]
    %v139 = vld [vmem:[#allocation5 + $0x70] sm:$0xff]
    %v140 = vld [vmem:[#allocation5 + $0x78] sm:$0xff]
    %v141 = vld [vmem:[#allocation7] sm:$0xff]
    %v143 = vlaneseq
    %v144 = vshrl.u32 %v143, 7
    %v145 = vsub.s32 0, %v144
    %v146 = vrot.slane %v141, %v145
    %v147 = vlaneseq
    %v148 = vshrl.u32 %v147, 7
    %v149 = vsub.s32 1, %v148
    %v150 = vrot.slane %v141, %v149
    %v151 = vlaneseq
    %v152 = vshrl.u32 %v151, 7
    %v153 = vsub.s32 2, %v152
    %v154 = vrot.slane %v141, %v153
    %v155 = vlaneseq
    %v156 = vshrl.u32 %v155, 7
    %v157 = vsub.s32 3, %v156
    %v158 = vrot.slane %v141, %v157
    %v159 = vlaneseq
    %v160 = vshrl.u32 %v159, 7
    %v161 = vsub.s32 4, %v160
    %v162 = vrot.slane %v141, %v161
    %v163 = vlaneseq
    %v164 = vshrl.u32 %v163, 7
    %v165 = vsub.s32 5, %v164
    %v166 = vrot.slane %v141, %v165
    %v167 = vlaneseq
    %v168 = vshrl.u32 %v167, 7
    %v169 = vsub.s32 6, %v168
    %v170 = vrot.slane %v141, %v169
    %v171 = vlaneseq
    %v172 = vshrl.u32 %v171, 7
    %v173 = vsub.s32 7, %v172
    %v174 = vrot.slane %v141, %v173
    %v191 = vcombine.low %v117, %v118
    %v192 = vcombine.low %v119, %v120
    %v193 = vcombine.low %v121, %v122
    %v194 = vcombine.low %v123, %v124
    %v196 = vunpack.c.l.s4 1966171168
    %v197 = vunpack.c.0.s8 %v196
    %v198 = vlaneseq
    %v199 = vshrl.u32 %v198, 7
    %v200 = vsub.s32 %v197, %v199
    %v201 = vrot.slane %v191, %v200
    %v203 = vunpack.c.l.s4 1966171168
    %v204 = vunpack.c.0.s8 %v203
    %v205 = vlaneseq
    %v206 = vshrl.u32 %v205, 7
    %v207 = vsub.s32 %v204, %v206
    %v208 = vrot.slane %v192, %v207
    %v210 = vunpack.c.l.s4 1966171168
    %v211 = vunpack.c.0.s8 %v210
    %v212 = vlaneseq
    %v213 = vshrl.u32 %v212, 7
    %v214 = vsub.s32 %v211, %v213
    %v215 = vrot.slane %v193, %v214
    %v217 = vunpack.c.l.s4 1966171168
    %v218 = vunpack.c.0.s8 %v217
    %v219 = vlaneseq
    %v220 = vshrl.u32 %v219, 7
    %v221 = vsub.s32 %v218, %v220
    %v222 = vrot.slane %v194, %v221
    %v223 = vcombine.low %v201, %v208
    %v224 = vcombine.low %v215, %v222
    %v226 = vunpack.c.l.s4 1966171168
    %v227 = vunpack.c.0.s8 %v226
    %v228 = vlaneseq
    %v229 = vshrl.u32 %v228, 7
    %v230 = vsub.s32 %v227, %v229
    %v231 = vrot.slane %v223, %v230
    %v233 = vunpack.c.l.s4 1966171168
    %v234 = vunpack.c.0.s8 %v233
    %v235 = vlaneseq
    %v236 = vshrl.u32 %v235, 7
    %v237 = vsub.s32 %v234, %v236
    %v238 = vrot.slane %v224, %v237
    %v239 = vcombine.low %v231, %v238
    %v256 = vunpack.c.l.b16 %v125
    %v257 = vunpack.c.h.b16 %v125
    %v258 = vunpack.c.l.b16 %v126
    %v259 = vunpack.c.h.b16 %v126
    %v260 = vunpack.c.l.b16 %v127
    %v261 = vunpack.c.h.b16 %v127
    %v262 = vunpack.c.l.b16 %v128
    %v263 = vunpack.c.h.b16 %v128
    %v264 = vunpack.c.l.b16 %v129
    %v265 = vunpack.c.h.b16 %v129
    %v266 = vunpack.c.l.b16 %v130
    %v267 = vunpack.c.h.b16 %v130
    %v268 = vunpack.c.l.b16 %v131
    %v269 = vunpack.c.h.b16 %v131
    %v270 = vunpack.c.l.b16 %v132
    %v271 = vunpack.c.h.b16 %v132
    %v272 = vunpack.c.l.b16 %v133
    %v273 = vunpack.c.h.b16 %v133
    %v274 = vunpack.c.l.b16 %v134
    %v275 = vunpack.c.h.b16 %v134
    %v276 = vunpack.c.l.b16 %v135
    %v277 = vunpack.c.h.b16 %v135
    %v278 = vunpack.c.l.b16 %v136
    %v279 = vunpack.c.h.b16 %v136
    %v280 = vunpack.c.l.b16 %v137
    %v281 = vunpack.c.h.b16 %v137
    %v282 = vunpack.c.l.b16 %v138
    %v283 = vunpack.c.h.b16 %v138
    %v284 = vunpack.c.l.b16 %v139
    %v285 = vunpack.c.h.b16 %v139
    %v286 = vunpack.c.l.b16 %v140
    %v287 = vunpack.c.h.b16 %v140
    %v288 = vpack.c.b16 %v264, %v256
    %v289 = vpack.c.b16 %v265, %v257
    %v290 = vpack.c.b16 %v266, %v258
    %v291 = vpack.c.b16 %v267, %v259
    %v292 = vpack.c.b16 %v268, %v260
    %v293 = vpack.c.b16 %v269, %v261
    %v294 = vpack.c.b16 %v270, %v262
    %v295 = vpack.c.b16 %v271, %v263
    %v296 = vpack.c.b16 %v280, %v272
    %v297 = vpack.c.b16 %v281, %v273
    %v298 = vpack.c.b16 %v282, %v274
    %v299 = vpack.c.b16 %v283, %v275
    %v300 = vpack.c.b16 %v284, %v276
    %v301 = vpack.c.b16 %v285, %v277
    %v302 = vpack.c.b16 %v286, %v278
    %v303 = vpack.c.b16 %v287, %v279
    %vm320 = vcmask 261120
    %v322 = vsel %vm320, %v239, 0
    %324 = vmatprep.subr.bf16.mxu0 0
    %325 = vmatpush1.bf16.msra.mxu0 0
    %326 = vmatprep.subr.bf16.mxu0 0
    %327 = vmatpush1.bf16.msra.mxu0 0
    %328 = vmatprep.subr.bf16.mxu0 0
    %329 = vmatpush1.bf16.msra.mxu0 0
    %330 = vmatprep.subr.bf16.mxu0 0
    %331 = vmatpush1.bf16.msra.mxu0 0
    %332 = vmatprep.subr.bf16.mxu0 0
    %333 = vmatpush1.bf16.msra.mxu0 0
    %334 = vmatprep.subr.bf16.mxu0 0
    %335 = vmatpush1.bf16.msra.mxu0 0
    %336 = vmatprep.subr.bf16.mxu0 %v297
    %337 = vmatpush1.bf16.msra.mxu0 %v296
    %338 = vmatprep.subr.bf16.mxu0 %v289
    %339 = vmatpush1.bf16.msra.mxu0 %v288
    %340 = vmatprep.subr.bf16.mxu0 0
    %341 = vmatpush2.bf16.msra.mxu0 0
    %342 = vmatprep.subr.bf16.mxu0 0
    %343 = vmatpush2.bf16.msra.mxu0 0
    %344 = vmatprep.subr.bf16.mxu0 0
    %345 = vmatpush2.bf16.msra.mxu0 0
    %346 = vmatprep.subr.bf16.mxu0 0
    %347 = vmatpush2.bf16.msra.mxu0 0
    %348 = vmatprep.subr.bf16.mxu0 0
    %349 = vmatpush2.bf16.msra.mxu0 0
    %350 = vmatprep.subr.bf16.mxu0 0
    %351 = vmatpush2.bf16.msra.mxu0 0
    %352 = vmatprep.subr.bf16.mxu0 0
    %353 = vmatpush2.bf16.msra.mxu0 0
    %354 = vmatprep.subr.bf16.mxu0 0
    %355 = vmatpush2.bf16.msra.mxu0 0
    %356 = vmatprep.mubr.bf16.mxu0 0
    %357 = vmatmul.mubr.bf16.gmra.mxu0 %v322
    %v358 = vpop.f32.mrf.mxu0
    %v359 = vadd.f32 %v146, %v358
    %v360 = vpop.f32.mrf.mxu0
    %v361 = vadd.f32 %v150, %v360
    %v362 = vpop.f32.mrf.mxu0
    %v363 = vadd.f32 %v146, %v362
    %v364 = vpop.f32.mrf.mxu0
    %v365 = vadd.f32 %v150, %v364
    %366 = vdwg.mxu0
    %367 = vmatprep.subr.bf16.mxu0 0
    %368 = vmatpush1.bf16.msra.mxu0 0
    %369 = vmatprep.subr.bf16.mxu0 0
    %370 = vmatpush1.bf16.msra.mxu0 0
    %371 = vmatprep.subr.bf16.mxu0 0
    %372 = vmatpush1.bf16.msra.mxu0 0
    %373 = vmatprep.subr.bf16.mxu0 0
    %374 = vmatpush1.bf16.msra.mxu0 0
    %375 = vmatprep.subr.bf16.mxu0 0
    %376 = vmatpush1.bf16.msra.mxu0 0
    %377 = vmatprep.subr.bf16.mxu0 0
    %378 = vmatpush1.bf16.msra.mxu0 0
    %379 = vmatprep.subr.bf16.mxu0 %v299
    %380 = vmatpush1.bf16.msra.mxu0 %v298
    %381 = vmatprep.subr.bf16.mxu0 %v291
    %382 = vmatpush1.bf16.msra.mxu0 %v290
    %383 = vmatprep.subr.bf16.mxu0 0
    %384 = vmatpush2.bf16.msra.mxu0 0
    %385 = vmatprep.subr.bf16.mxu0 0
    %386 = vmatpush2.bf16.msra.mxu0 0
    %387 = vmatprep.subr.bf16.mxu0 0
    %388 = vmatpush2.bf16.msra.mxu0 0
    %389 = vmatprep.subr.bf16.mxu0 0
    %390 = vmatpush2.bf16.msra.mxu0 0
    %391 = vmatprep.subr.bf16.mxu0 0
    %392 = vmatpush2.bf16.msra.mxu0 0
    %393 = vmatprep.subr.bf16.mxu0 0
    %394 = vmatpush2.bf16.msra.mxu0 0
    %395 = vmatprep.subr.bf16.mxu0 0
    %396 = vmatpush2.bf16.msra.mxu0 0
    %397 = vmatprep.subr.bf16.mxu0 0
    %398 = vmatpush2.bf16.msra.mxu0 0
    %399 = vmatprep.mubr.bf16.mxu0 0
    %400 = vmatmul.mubr.bf16.gmra.mxu0 %v322
    %v401 = vpop.f32.mrf.mxu0
    %v402 = vadd.f32 %v154, %v401
    %v403 = vpop.f32.mrf.mxu0
    %v404 = vadd.f32 %v158, %v403
    %v405 = vpop.f32.mrf.mxu0
    %v406 = vadd.f32 %v154, %v405
    %v407 = vpop.f32.mrf.mxu0
    %v408 = vadd.f32 %v158, %v407
    %409 = vdwg.mxu0
    %410 = vmatprep.subr.bf16.mxu0 0
    %411 = vmatpush1.bf16.msra.mxu0 0
    %412 = vmatprep.subr.bf16.mxu0 0
    %413 = vmatpush1.bf16.msra.mxu0 0
    %414 = vmatprep.subr.bf16.mxu0 0
    %415 = vmatpush1.bf16.msra.mxu0 0
    %416 = vmatprep.subr.bf16.mxu0 0
    %417 = vmatpush1.bf16.msra.mxu0 0
    %418 = vmatprep.subr.bf16.mxu0 0
    %419 = vmatpush1.bf16.msra.mxu0 0
    %420 = vmatprep.subr.bf16.mxu0 0
    %421 = vmatpush1.bf16.msra.mxu0 0
    %422 = vmatprep.subr.bf16.mxu0 %v301
    %423 = vmatpush1.bf16.msra.mxu0 %v300
    %424 = vmatprep.subr.bf16.mxu0 %v293
    %425 = vmatpush1.bf16.msra.mxu0 %v292
    %426 = vmatprep.subr.bf16.mxu0 0
    %427 = vmatpush2.bf16.msra.mxu0 0
    %428 = vmatprep.subr.bf16.mxu0 0
    %429 = vmatpush2.bf16.msra.mxu0 0
    %430 = vmatprep.subr.bf16.mxu0 0
    %431 = vmatpush2.bf16.msra.mxu0 0
    %432 = vmatprep.subr.bf16.mxu0 0
    %433 = vmatpush2.bf16.msra.mxu0 0
    %434 = vmatprep.subr.bf16.mxu0 0
    %435 = vmatpush2.bf16.msra.mxu0 0
    %436 = vmatprep.subr.bf16.mxu0 0
    %437 = vmatpush2.bf16.msra.mxu0 0
    %438 = vmatprep.subr.bf16.mxu0 0
    %439 = vmatpush2.bf16.msra.mxu0 0
    %440 = vmatprep.subr.bf16.mxu0 0
    %441 = vmatpush2.bf16.msra.mxu0 0
    %442 = vmatprep.mubr.bf16.mxu0 0
    %443 = vmatmul.mubr.bf16.gmra.mxu0 %v322
    %v444 = vpop.f32.mrf.mxu0
    %v445 = vadd.f32 %v162, %v444
    %v446 = vpop.f32.mrf.mxu0
    %v447 = vadd.f32 %v166, %v446
    %v448 = vpop.f32.mrf.mxu0
    %v449 = vadd.f32 %v162, %v448
    %v450 = vpop.f32.mrf.mxu0
    %v451 = vadd.f32 %v166, %v450
    %452 = vdwg.mxu0
    %453 = vmatprep.subr.bf16.mxu0 0
    %454 = vmatpush1.bf16.msra.mxu0 0
    %455 = vmatprep.subr.bf16.mxu0 0
    %456 = vmatpush1.bf16.msra.mxu0 0
    %457 = vmatprep.subr.bf16.mxu0 0
    %458 = vmatpush1.bf16.msra.mxu0 0
    %459 = vmatprep.subr.bf16.mxu0 0
    %460 = vmatpush1.bf16.msra.mxu0 0
    %461 = vmatprep.subr.bf16.mxu0 0
    %462 = vmatpush1.bf16.msra.mxu0 0
    %463 = vmatprep.subr.bf16.mxu0 0
    %464 = vmatpush1.bf16.msra.mxu0 0
    %465 = vmatprep.subr.bf16.mxu0 %v303
    %466 = vmatpush1.bf16.msra.mxu0 %v302
    %467 = vmatprep.subr.bf16.mxu0 %v295
    %468 = vmatpush1.bf16.msra.mxu0 %v294
    %469 = vmatprep.subr.bf16.mxu0 0
    %470 = vmatpush2.bf16.msra.mxu0 0
    %471 = vmatprep.subr.bf16.mxu0 0
    %472 = vmatpush2.bf16.msra.mxu0 0
    %473 = vmatprep.subr.bf16.mxu0 0
    %474 = vmatpush2.bf16.msra.mxu0 0
    %475 = vmatprep.subr.bf16.mxu0 0
    %476 = vmatpush2.bf16.msra.mxu0 0
    %477 = vmatprep.subr.bf16.mxu0 0
    %478 = vmatpush2.bf16.msra.mxu0 0
    %479 = vmatprep.subr.bf16.mxu0 0
    %480 = vmatpush2.bf16.msra.mxu0 0
    %481 = vmatprep.subr.bf16.mxu0 0
    %482 = vmatpush2.bf16.msra.mxu0 0
    %483 = vmatprep.subr.bf16.mxu0 0
    %484 = vmatpush2.bf16.msra.mxu0 0
    %485 = vmatprep.mubr.bf16.mxu0 0
    %486 = vmatmul.mubr.bf16.gmra.mxu0 %v322
    %v487 = vpop.f32.mrf.mxu0
    %v488 = vadd.f32 %v170, %v487
    %v489 = vpop.f32.mrf.mxu0
    %v490 = vadd.f32 %v174, %v489
    %v491 = vpop.f32.mrf.mxu0
    %v492 = vadd.f32 %v170, %v491
    %v493 = vpop.f32.mrf.mxu0
    %v494 = vadd.f32 %v174, %v493
    %495 = vdwg.mxu0
    %v496 = vmax.f32 %v359, 0.0
    %v497 = vmax.f32 %v361, 0.0
    %v498 = vmax.f32 %v402, 0.0
    %v499 = vmax.f32 %v404, 0.0
    %v500 = vmax.f32 %v445, 0.0
    %v501 = vmax.f32 %v447, 0.0
    %v502 = vmax.f32 %v488, 0.0
    %v503 = vmax.f32 %v490, 0.0
    %v504 = vmax.f32 %v363, 0.0
    %v505 = vmax.f32 %v365, 0.0
    %v506 = vmax.f32 %v406, 0.0
    %v507 = vmax.f32 %v408, 0.0
    %v508 = vmax.f32 %v449, 0.0
    %v509 = vmax.f32 %v451, 0.0
    %v510 = vmax.f32 %v492, 0.0
    %v511 = vmax.f32 %v494, 0.0
    %v512 = vpack.c.bf16 %v504, %v496
    %v513 = vpack.c.bf16 %v505, %v497
    %v514 = vpack.c.bf16 %v506, %v498
    %v515 = vpack.c.bf16 %v507, %v499
    %v516 = vpack.c.bf16 %v508, %v500
    %v517 = vpack.c.bf16 %v509, %v501
    %v518 = vpack.c.bf16 %v510, %v502
    %v519 = vpack.c.bf16 %v511, %v503
    %v520 = vld [vmem:[#allocation8] sm:$0xff]
    %v521 = vld [vmem:[#allocation8 + $0x8] sm:$0xff]
    %v522 = vld [vmem:[#allocation8 + $0x10] sm:$0xff]
    %v523 = vld [vmem:[#allocation8 + $0x18] sm:$0xff]
    %v524 = vld [vmem:[#allocation8 + $0x20] sm:$0xff]
    %v525 = vld [vmem:[#allocation8 + $0x28] sm:$0xff]
    %v526 = vld [vmem:[#allocation8 + $0x30] sm:$0xff]
    %v527 = vld [vmem:[#allocation8 + $0x38] sm:$0xff]
    %v528 = vld [vmem:[#allocation8 + $0x40] sm:$0xff]
    %v529 = vld [vmem:[#allocation8 + $0x48] sm:$0xff]
    %v530 = vld [vmem:[#allocation8 + $0x50] sm:$0xff]
    %v531 = vld [vmem:[#allocation8 + $0x58] sm:$0xff]
    %v532 = vld [vmem:[#allocation8 + $0x60] sm:$0xff]
    %v533 = vld [vmem:[#allocation8 + $0x68] sm:$0xff]
    %v534 = vld [vmem:[#allocation8 + $0x70] sm:$0xff]
    %v535 = vld [vmem:[#allocation8 + $0x78] sm:$0xff]
    %v536 = vld [vmem:[#allocation8 + $0x80] sm:$0xff]
    %v537 = vld [vmem:[#allocation8 + $0x88] sm:$0xff]
    %v538 = vld [vmem:[#allocation8 + $0x90] sm:$0xff]
    %v539 = vld [vmem:[#allocation8 + $0x98] sm:$0xff]
    %v540 = vld [vmem:[#allocation8 + $0xa0] sm:$0xff]
    %v541 = vld [vmem:[#allocation8 + $0xa8] sm:$0xff]
    %v542 = vld [vmem:[#allocation8 + $0xb0] sm:$0xff]
    %v543 = vld [vmem:[#allocation8 + $0xb8] sm:$0xff]
    %v544 = vld [vmem:[#allocation8 + $0xc0] sm:$0xff]
    %v545 = vld [vmem:[#allocation8 + $0xc8] sm:$0xff]
    %v546 = vld [vmem:[#allocation8 + $0xd0] sm:$0xff]
    %v547 = vld [vmem:[#allocation8 + $0xd8] sm:$0xff]
    %v548 = vld [vmem:[#allocation8 + $0xe0] sm:$0xff]
    %v549 = vld [vmem:[#allocation8 + $0xe8] sm:$0xff]
    %v550 = vld [vmem:[#allocation8 + $0xf0] sm:$0xff]
    %v551 = vld [vmem:[#allocation8 + $0xf8] sm:$0xff]
    %v552 = vld [vmem:[#allocation8 + $0x100] sm:$0xff]
    %v553 = vld [vmem:[#allocation8 + $0x108] sm:$0xff]
    %v554 = vld [vmem:[#allocation8 + $0x110] sm:$0xff]
    %v555 = vld [vmem:[#allocation8 + $0x118] sm:$0xff]
    %v556 = vld [vmem:[#allocation8 + $0x120] sm:$0xff]
    %v557 = vld [vmem:[#allocation8 + $0x128] sm:$0xff]
    %v558 = vld [vmem:[#allocation8 + $0x130] sm:$0xff]
    %v559 = vld [vmem:[#allocation8 + $0x138] sm:$0xff]
    %v560 = vld [vmem:[#allocation8 + $0x140] sm:$0xff]
    %v561 = vld [vmem:[#allocation8 + $0x148] sm:$0xff]
    %v562 = vld [vmem:[#allocation8 + $0x150] sm:$0xff]
    %v563 = vld [vmem:[#allocation8 + $0x158] sm:$0xff]
    %v564 = vld [vmem:[#allocation8 + $0x160] sm:$0xff]
    %v565 = vld [vmem:[#allocation8 + $0x168] sm:$0xff]
    %v566 = vld [vmem:[#allocation8 + $0x170] sm:$0xff]
    %v567 = vld [vmem:[#allocation8 + $0x178] sm:$0xff]
    %v568 = vld [vmem:[#allocation8 + $0x180] sm:$0xff]
    %v569 = vld [vmem:[#allocation8 + $0x188] sm:$0xff]
    %v570 = vld [vmem:[#allocation8 + $0x190] sm:$0xff]
    %v571 = vld [vmem:[#allocation8 + $0x198] sm:$0xff]
    %v572 = vld [vmem:[#allocation8 + $0x1a0] sm:$0xff]
    %v573 = vld [vmem:[#allocation8 + $0x1a8] sm:$0xff]
    %v574 = vld [vmem:[#allocation8 + $0x1b0] sm:$0xff]
    %v575 = vld [vmem:[#allocation8 + $0x1b8] sm:$0xff]
    %v576 = vld [vmem:[#allocation8 + $0x1c0] sm:$0xff]
    %v577 = vld [vmem:[#allocation8 + $0x1c8] sm:$0xff]
    %v578 = vld [vmem:[#allocation8 + $0x1d0] sm:$0xff]
    %v579 = vld [vmem:[#allocation8 + $0x1d8] sm:$0xff]
    %v580 = vld [vmem:[#allocation8 + $0x1e0] sm:$0xff]
    %v581 = vld [vmem:[#allocation8 + $0x1e8] sm:$0xff]
    %v582 = vld [vmem:[#allocation8 + $0x1f0] sm:$0xff]
    %v583 = vld [vmem:[#allocation8 + $0x1f8] sm:$0xff]
    %v584 = vld [vmem:[#allocation8 + $0x200] sm:$0xff]
    %v585 = vld [vmem:[#allocation8 + $0x208] sm:$0xff]
    %v586 = vld [vmem:[#allocation8 + $0x210] sm:$0xff]
    %v587 = vld [vmem:[#allocation8 + $0x218] sm:$0xff]
    %v588 = vld [vmem:[#allocation8 + $0x220] sm:$0xff]
    %v589 = vld [vmem:[#allocation8 + $0x228] sm:$0xff]
    %v590 = vld [vmem:[#allocation8 + $0x230] sm:$0xff]
    %v591 = vld [vmem:[#allocation8 + $0x238] sm:$0xff]
    %v592 = vld [vmem:[#allocation8 + $0x240] sm:$0xff]
    %v593 = vld [vmem:[#allocation8 + $0x248] sm:$0xff]
    %v594 = vld [vmem:[#allocation8 + $0x250] sm:$0xff]
    %v595 = vld [vmem:[#allocation8 + $0x258] sm:$0xff]
    %v596 = vld [vmem:[#allocation8 + $0x260] sm:$0xff]
    %v597 = vld [vmem:[#allocation8 + $0x268] sm:$0xff]
    %v598 = vld [vmem:[#allocation8 + $0x270] sm:$0xff]
    %v599 = vld [vmem:[#allocation8 + $0x278] sm:$0xff]
    %v600 = vld [vmem:[#allocation8 + $0x280] sm:$0xff]
    %v601 = vld [vmem:[#allocation8 + $0x288] sm:$0xff]
    %v602 = vld [vmem:[#allocation8 + $0x290] sm:$0xff]
    %v603 = vld [vmem:[#allocation8 + $0x298] sm:$0xff]
    %v604 = vld [vmem:[#allocation8 + $0x2a0] sm:$0xff]
    %v605 = vld [vmem:[#allocation8 + $0x2a8] sm:$0xff]
    %v606 = vld [vmem:[#allocation8 + $0x2b0] sm:$0xff]
    %v607 = vld [vmem:[#allocation8 + $0x2b8] sm:$0xff]
    %v608 = vld [vmem:[#allocation8 + $0x2c0] sm:$0xff]
    %v609 = vld [vmem:[#allocation8 + $0x2c8] sm:$0xff]
    %v610 = vld [vmem:[#allocation8 + $0x2d0] sm:$0xff]
    %v611 = vld [vmem:[#allocation8 + $0x2d8] sm:$0xff]
    %v612 = vld [vmem:[#allocation8 + $0x2e0] sm:$0xff]
    %v613 = vld [vmem:[#allocation8 + $0x2e8] sm:$0xff]
    %v614 = vld [vmem:[#allocation8 + $0x2f0] sm:$0xff]
    %v615 = vld [vmem:[#allocation8 + $0x2f8] sm:$0xff]
    %v616 = vld [vmem:[#allocation8 + $0x300] sm:$0xff]
    %v617 = vld [vmem:[#allocation8 + $0x308] sm:$0xff]
    %v618 = vld [vmem:[#allocation8 + $0x310] sm:$0xff]
    %v619 = vld [vmem:[#allocation8 + $0x318] sm:$0xff]
    %v620 = vld [vmem:[#allocation8 + $0x320] sm:$0xff]
    %v621 = vld [vmem:[#allocation8 + $0x328] sm:$0xff]
    %v622 = vld [vmem:[#allocation8 + $0x330] sm:$0xff]
    %v623 = vld [vmem:[#allocation8 + $0x338] sm:$0xff]
    %v624 = vld [vmem:[#allocation8 + $0x340] sm:$0xff]
    %v625 = vld [vmem:[#allocation8 + $0x348] sm:$0xff]
    %v626 = vld [vmem:[#allocation8 + $0x350] sm:$0xff]
    %v627 = vld [vmem:[#allocation8 + $0x358] sm:$0xff]
    %v628 = vld [vmem:[#allocation8 + $0x360] sm:$0xff]
    %v629 = vld [vmem:[#allocation8 + $0x368] sm:$0xff]
    %v630 = vld [vmem:[#allocation8 + $0x370] sm:$0xff]
    %v631 = vld [vmem:[#allocation8 + $0x378] sm:$0xff]
    %v632 = vld [vmem:[#allocation8 + $0x380] sm:$0xff]
    %v633 = vld [vmem:[#allocation8 + $0x388] sm:$0xff]
    %v634 = vld [vmem:[#allocation8 + $0x390] sm:$0xff]
    %v635 = vld [vmem:[#allocation8 + $0x398] sm:$0xff]
    %v636 = vld [vmem:[#allocation8 + $0x3a0] sm:$0xff]
    %v637 = vld [vmem:[#allocation8 + $0x3a8] sm:$0xff]
    %v638 = vld [vmem:[#allocation8 + $0x3b0] sm:$0xff]
    %v639 = vld [vmem:[#allocation8 + $0x3b8] sm:$0xff]
    %v640 = vld [vmem:[#allocation8 + $0x3c0] sm:$0xff]
    %v641 = vld [vmem:[#allocation8 + $0x3c8] sm:$0xff]
    %v642 = vld [vmem:[#allocation8 + $0x3d0] sm:$0xff]
    %v643 = vld [vmem:[#allocation8 + $0x3d8] sm:$0xff]
    %v644 = vld [vmem:[#allocation8 + $0x3e0] sm:$0xff]
    %v645 = vld [vmem:[#allocation8 + $0x3e8] sm:$0xff]
    %v646 = vld [vmem:[#allocation8 + $0x3f0] sm:$0xff]
    %v647 = vld [vmem:[#allocation8 + $0x3f8] sm:$0xff]
    %v648 = vld [vmem:[#allocation8 + $0x400] sm:$0xff]
    %v649 = vld [vmem:[#allocation8 + $0x408] sm:$0xff]
    %v650 = vld [vmem:[#allocation8 + $0x410] sm:$0xff]
    %v651 = vld [vmem:[#allocation8 + $0x418] sm:$0xff]
    %v652 = vld [vmem:[#allocation8 + $0x420] sm:$0xff]
    %v653 = vld [vmem:[#allocation8 + $0x428] sm:$0xff]
    %v654 = vld [vmem:[#allocation8 + $0x430] sm:$0xff]
    %v655 = vld [vmem:[#allocation8 + $0x438] sm:$0xff]
    %v656 = vld [vmem:[#allocation8 + $0x440] sm:$0xff]
    %v657 = vld [vmem:[#allocation8 + $0x448] sm:$0xff]
    %v658 = vld [vmem:[#allocation8 + $0x450] sm:$0xff]
    %v659 = vld [vmem:[#allocation8 + $0x458] sm:$0xff]
    %v660 = vld [vmem:[#allocation8 + $0x460] sm:$0xff]
    %v661 = vld [vmem:[#allocation8 + $0x468] sm:$0xff]
    %v662 = vld [vmem:[#allocation8 + $0x470] sm:$0xff]
    %v663 = vld [vmem:[#allocation8 + $0x478] sm:$0xff]
    %v664 = vld [vmem:[#allocation8 + $0x480] sm:$0xff]
    %v665 = vld [vmem:[#allocation8 + $0x488] sm:$0xff]
    %v666 = vld [vmem:[#allocation8 + $0x490] sm:$0xff]
    %v667 = vld [vmem:[#allocation8 + $0x498] sm:$0xff]
    %v668 = vld [vmem:[#allocation8 + $0x4a0] sm:$0xff]
    %v669 = vld [vmem:[#allocation8 + $0x4a8] sm:$0xff]
    %v670 = vld [vmem:[#allocation8 + $0x4b0] sm:$0xff]
    %v671 = vld [vmem:[#allocation8 + $0x4b8] sm:$0xff]
    %v672 = vld [vmem:[#allocation8 + $0x4c0] sm:$0xff]
    %v673 = vld [vmem:[#allocation8 + $0x4c8] sm:$0xff]
    %v674 = vld [vmem:[#allocation8 + $0x4d0] sm:$0xff]
    %v675 = vld [vmem:[#allocation8 + $0x4d8] sm:$0xff]
    %v676 = vld [vmem:[#allocation8 + $0x4e0] sm:$0xff]
    %v677 = vld [vmem:[#allocation8 + $0x4e8] sm:$0xff]
    %v678 = vld [vmem:[#allocation8 + $0x4f0] sm:$0xff]
    %v679 = vld [vmem:[#allocation8 + $0x4f8] sm:$0xff]
    %v680 = vld [vmem:[#allocation8 + $0x500] sm:$0xff]
    %v681 = vld [vmem:[#allocation8 + $0x508] sm:$0xff]
    %v682 = vld [vmem:[#allocation8 + $0x510] sm:$0xff]
    %v683 = vld [vmem:[#allocation8 + $0x518] sm:$0xff]
    %v684 = vld [vmem:[#allocation8 + $0x520] sm:$0xff]
    %v685 = vld [vmem:[#allocation8 + $0x528] sm:$0xff]
    %v686 = vld [vmem:[#allocation8 + $0x530] sm:$0xff]
    %v687 = vld [vmem:[#allocation8 + $0x538] sm:$0xff]
    %v688 = vld [vmem:[#allocation8 + $0x540] sm:$0xff]
    %v689 = vld [vmem:[#allocation8 + $0x548] sm:$0xff]
    %v690 = vld [vmem:[#allocation8 + $0x550] sm:$0xff]
    %v691 = vld [vmem:[#allocation8 + $0x558] sm:$0xff]
    %v692 = vld [vmem:[#allocation8 + $0x560] sm:$0xff]
    %v693 = vld [vmem:[#allocation8 + $0x568] sm:$0xff]
    %v694 = vld [vmem:[#allocation8 + $0x570] sm:$0xff]
    %v695 = vld [vmem:[#allocation8 + $0x578] sm:$0xff]
    %v696 = vld [vmem:[#allocation8 + $0x580] sm:$0xff]
    %v697 = vld [vmem:[#allocation8 + $0x588] sm:$0xff]
    %v698 = vld [vmem:[#allocation8 + $0x590] sm:$0xff]
    %v699 = vld [vmem:[#allocation8 + $0x598] sm:$0xff]
    %v700 = vld [vmem:[#allocation8 + $0x5a0] sm:$0xff]
    %v701 = vld [vmem:[#allocation8 + $0x5a8] sm:$0xff]
    %v702 = vld [vmem:[#allocation8 + $0x5b0] sm:$0xff]
    %v703 = vld [vmem:[#allocation8 + $0x5b8] sm:$0xff]
    %v704 = vld [vmem:[#allocation8 + $0x5c0] sm:$0xff]
    %v705 = vld [vmem:[#allocation8 + $0x5c8] sm:$0xff]
    %v706 = vld [vmem:[#allocation8 + $0x5d0] sm:$0xff]
    %v707 = vld [vmem:[#allocation8 + $0x5d8] sm:$0xff]
    %v708 = vld [vmem:[#allocation8 + $0x5e0] sm:$0xff]
    %v709 = vld [vmem:[#allocation8 + $0x5e8] sm:$0xff]
    %v710 = vld [vmem:[#allocation8 + $0x5f0] sm:$0xff]
    %v711 = vld [vmem:[#allocation8 + $0x5f8] sm:$0xff]
    %v712 = vld [vmem:[#allocation8 + $0x600] sm:$0xff]
    %v713 = vld [vmem:[#allocation8 + $0x608] sm:$0xff]
    %v714 = vld [vmem:[#allocation8 + $0x610] sm:$0xff]
    %v715 = vld [vmem:[#allocation8 + $0x618] sm:$0xff]
    %v716 = vld [vmem:[#allocation8 + $0x620] sm:$0xff]
    %v717 = vld [vmem:[#allocation8 + $0x628] sm:$0xff]
    %v718 = vld [vmem:[#allocation8 + $0x630] sm:$0xff]
    %v719 = vld [vmem:[#allocation8 + $0x638] sm:$0xff]
    %v720 = vld [vmem:[#allocation8 + $0x640] sm:$0xff]
    %v721 = vld [vmem:[#allocation8 + $0x648] sm:$0xff]
    %v722 = vld [vmem:[#allocation8 + $0x650] sm:$0xff]
    %v723 = vld [vmem:[#allocation8 + $0x658] sm:$0xff]
    %v724 = vld [vmem:[#allocation8 + $0x660] sm:$0xff]
    %v725 = vld [vmem:[#allocation8 + $0x668] sm:$0xff]
    %v726 = vld [vmem:[#allocation8 + $0x670] sm:$0xff]
    %v727 = vld [vmem:[#allocation8 + $0x678] sm:$0xff]
    %v728 = vld [vmem:[#allocation8 + $0x680] sm:$0xff]
    %v729 = vld [vmem:[#allocation8 + $0x688] sm:$0xff]
    %v730 = vld [vmem:[#allocation8 + $0x690] sm:$0xff]
    %v731 = vld [vmem:[#allocation8 + $0x698] sm:$0xff]
    %v732 = vld [vmem:[#allocation8 + $0x6a0] sm:$0xff]
    %v733 = vld [vmem:[#allocation8 + $0x6a8] sm:$0xff]
    %v734 = vld [vmem:[#allocation8 + $0x6b0] sm:$0xff]
    %v735 = vld [vmem:[#allocation8 + $0x6b8] sm:$0xff]
    %v736 = vld [vmem:[#allocation8 + $0x6c0] sm:$0xff]
    %v737 = vld [vmem:[#allocation8 + $0x6c8] sm:$0xff]
    %v738 = vld [vmem:[#allocation8 + $0x6d0] sm:$0xff]
    %v739 = vld [vmem:[#allocation8 + $0x6d8] sm:$0xff]
    %v740 = vld [vmem:[#allocation8 + $0x6e0] sm:$0xff]
    %v741 = vld [vmem:[#allocation8 + $0x6e8] sm:$0xff]
    %v742 = vld [vmem:[#allocation8 + $0x6f0] sm:$0xff]
    %v743 = vld [vmem:[#allocation8 + $0x6f8] sm:$0xff]
    %v744 = vld [vmem:[#allocation8 + $0x700] sm:$0xff]
    %v745 = vld [vmem:[#allocation8 + $0x708] sm:$0xff]
    %v746 = vld [vmem:[#allocation8 + $0x710] sm:$0xff]
    %v747 = vld [vmem:[#allocation8 + $0x718] sm:$0xff]
    %v748 = vld [vmem:[#allocation8 + $0x720] sm:$0xff]
    %v749 = vld [vmem:[#allocation8 + $0x728] sm:$0xff]
    %v750 = vld [vmem:[#allocation8 + $0x730] sm:$0xff]
    %v751 = vld [vmem:[#allocation8 + $0x738] sm:$0xff]
    %v752 = vld [vmem:[#allocation8 + $0x740] sm:$0xff]
    %v753 = vld [vmem:[#allocation8 + $0x748] sm:$0xff]
    %v754 = vld [vmem:[#allocation8 + $0x750] sm:$0xff]
    %v755 = vld [vmem:[#allocation8 + $0x758] sm:$0xff]
    %v756 = vld [vmem:[#allocation8 + $0x760] sm:$0xff]
    %v757 = vld [vmem:[#allocation8 + $0x768] sm:$0xff]
    %v758 = vld [vmem:[#allocation8 + $0x770] sm:$0xff]
    %v759 = vld [vmem:[#allocation8 + $0x778] sm:$0xff]
    %v760 = vld [vmem:[#allocation8 + $0x780] sm:$0xff]
    %v761 = vld [vmem:[#allocation8 + $0x788] sm:$0xff]
    %v762 = vld [vmem:[#allocation8 + $0x790] sm:$0xff]
    %v763 = vld [vmem:[#allocation8 + $0x798] sm:$0xff]
    %v764 = vld [vmem:[#allocation8 + $0x7a0] sm:$0xff]
    %v765 = vld [vmem:[#allocation8 + $0x7a8] sm:$0xff]
    %v766 = vld [vmem:[#allocation8 + $0x7b0] sm:$0xff]
    %v767 = vld [vmem:[#allocation8 + $0x7b8] sm:$0xff]
    %v768 = vld [vmem:[#allocation8 + $0x7c0] sm:$0xff]
    %v769 = vld [vmem:[#allocation8 + $0x7c8] sm:$0xff]
    %v770 = vld [vmem:[#allocation8 + $0x7d0] sm:$0xff]
    %v771 = vld [vmem:[#allocation8 + $0x7d8] sm:$0xff]
    %v772 = vld [vmem:[#allocation8 + $0x7e0] sm:$0xff]
    %v773 = vld [vmem:[#allocation8 + $0x7e8] sm:$0xff]
    %v774 = vld [vmem:[#allocation8 + $0x7f0] sm:$0xff]
    %v775 = vld [vmem:[#allocation8 + $0x7f8] sm:$0xff]
    %v776 = vld [vmem:[#allocation8 + $0x800] sm:$0xff]
    %v777 = vld [vmem:[#allocation8 + $0x808] sm:$0xff]
    %v778 = vld [vmem:[#allocation8 + $0x810] sm:$0xff]
    %v779 = vld [vmem:[#allocation8 + $0x818] sm:$0xff]
    %v780 = vld [vmem:[#allocation8 + $0x820] sm:$0xff]
    %v781 = vld [vmem:[#allocation8 + $0x828] sm:$0xff]
    %v782 = vld [vmem:[#allocation8 + $0x830] sm:$0xff]
    %v783 = vld [vmem:[#allocation8 + $0x838] sm:$0xff]
    %v784 = vld [vmem:[#allocation8 + $0x840] sm:$0xff]
    %v785 = vld [vmem:[#allocation8 + $0x848] sm:$0xff]
    %v786 = vld [vmem:[#allocation8 + $0x850] sm:$0xff]
    %v787 = vld [vmem:[#allocation8 + $0x858] sm:$0xff]
    %v788 = vld [vmem:[#allocation8 + $0x860] sm:$0xff]
    %v789 = vld [vmem:[#allocation8 + $0x868] sm:$0xff]
    %v790 = vld [vmem:[#allocation8 + $0x870] sm:$0xff]
    %v791 = vld [vmem:[#allocation8 + $0x878] sm:$0xff]
    %v792 = vld [vmem:[#allocation8 + $0x880] sm:$0xff]
    %v793 = vld [vmem:[#allocation8 + $0x888] sm:$0xff]
    %v794 = vld [vmem:[#allocation8 + $0x890] sm:$0xff]
    %v795 = vld [vmem:[#allocation8 + $0x898] sm:$0xff]
    %v796 = vld [vmem:[#allocation8 + $0x8a0] sm:$0xff]
    %v797 = vld [vmem:[#allocation8 + $0x8a8] sm:$0xff]
    %v798 = vld [vmem:[#allocation8 + $0x8b0] sm:$0xff]
    %v799 = vld [vmem:[#allocation8 + $0x8b8] sm:$0xff]
    %v800 = vld [vmem:[#allocation8 + $0x8c0] sm:$0xff]
    %v801 = vld [vmem:[#allocation8 + $0x8c8] sm:$0xff]
    %v802 = vld [vmem:[#allocation8 + $0x8d0] sm:$0xff]
    %v803 = vld [vmem:[#allocation8 + $0x8d8] sm:$0xff]
    %v804 = vld [vmem:[#allocation8 + $0x8e0] sm:$0xff]
    %v805 = vld [vmem:[#allocation8 + $0x8e8] sm:$0xff]
    %v806 = vld [vmem:[#allocation8 + $0x8f0] sm:$0xff]
    %v807 = vld [vmem:[#allocation8 + $0x8f8] sm:$0xff]
    %v808 = vld [vmem:[#allocation8 + $0x900] sm:$0xff]
    %v809 = vld [vmem:[#allocation8 + $0x908] sm:$0xff]
    %v810 = vld [vmem:[#allocation8 + $0x910] sm:$0xff]
    %v811 = vld [vmem:[#allocation8 + $0x918] sm:$0xff]
    %v812 = vld [vmem:[#allocation8 + $0x920] sm:$0xff]
    %v813 = vld [vmem:[#allocation8 + $0x928] sm:$0xff]
    %v814 = vld [vmem:[#allocation8 + $0x930] sm:$0xff]
    %v815 = vld [vmem:[#allocation8 + $0x938] sm:$0xff]
    %v816 = vld [vmem:[#allocation8 + $0x940] sm:$0xff]
    %v817 = vld [vmem:[#allocation8 + $0x948] sm:$0xff]
    %v818 = vld [vmem:[#allocation8 + $0x950] sm:$0xff]
    %v819 = vld [vmem:[#allocation8 + $0x958] sm:$0xff]
    %v820 = vld [vmem:[#allocation8 + $0x960] sm:$0xff]
    %v821 = vld [vmem:[#allocation8 + $0x968] sm:$0xff]
    %v822 = vld [vmem:[#allocation8 + $0x970] sm:$0xff]
    %v823 = vld [vmem:[#allocation8 + $0x978] sm:$0xff]
    %v824 = vld [vmem:[#allocation8 + $0x980] sm:$0xff]
    %v825 = vld [vmem:[#allocation8 + $0x988] sm:$0xff]
    %v826 = vld [vmem:[#allocation8 + $0x990] sm:$0xff]
    %v827 = vld [vmem:[#allocation8 + $0x998] sm:$0xff]
    %v828 = vld [vmem:[#allocation8 + $0x9a0] sm:$0xff]
    %v829 = vld [vmem:[#allocation8 + $0x9a8] sm:$0xff]
    %v830 = vld [vmem:[#allocation8 + $0x9b0] sm:$0xff]
    %v831 = vld [vmem:[#allocation8 + $0x9b8] sm:$0xff]
    %v832 = vld [vmem:[#allocation8 + $0x9c0] sm:$0xff]
    %v833 = vld [vmem:[#allocation8 + $0x9c8] sm:$0xff]
    %v834 = vld [vmem:[#allocation8 + $0x9d0] sm:$0xff]
    %v835 = vld [vmem:[#allocation8 + $0x9d8] sm:$0xff]
    %v836 = vld [vmem:[#allocation8 + $0x9e0] sm:$0xff]
    %v837 = vld [vmem:[#allocation8 + $0x9e8] sm:$0xff]
    %v838 = vld [vmem:[#allocation8 + $0x9f0] sm:$0xff]
    %v839 = vld [vmem:[#allocation8 + $0x9f8] sm:$0xff]
    %v840 = vld [vmem:[#allocation8 + $0xa00] sm:$0xff]
    %v841 = vld [vmem:[#allocation8 + $0xa08] sm:$0xff]
    %v842 = vld [vmem:[#allocation8 + $0xa10] sm:$0xff]
    %v843 = vld [vmem:[#allocation8 + $0xa18] sm:$0xff]
    %v844 = vld [vmem:[#allocation8 + $0xa20] sm:$0xff]
    %v845 = vld [vmem:[#allocation8 + $0xa28] sm:$0xff]
    %v846 = vld [vmem:[#allocation8 + $0xa30] sm:$0xff]
    %v847 = vld [vmem:[#allocation8 + $0xa38] sm:$0xff]
    %v848 = vld [vmem:[#allocation8 + $0xa40] sm:$0xff]
    %v849 = vld [vmem:[#allocation8 + $0xa48] sm:$0xff]
    %v850 = vld [vmem:[#allocation8 + $0xa50] sm:$0xff]
    %v851 = vld [vmem:[#allocation8 + $0xa58] sm:$0xff]
    %v852 = vld [vmem:[#allocation8 + $0xa60] sm:$0xff]
    %v853 = vld [vmem:[#allocation8 + $0xa68] sm:$0xff]
    %v854 = vld [vmem:[#allocation8 + $0xa70] sm:$0xff]
    %v855 = vld [vmem:[#allocation8 + $0xa78] sm:$0xff]
    %v856 = vld [vmem:[#allocation8 + $0xa80] sm:$0xff]
    %v857 = vld [vmem:[#allocation8 + $0xa88] sm:$0xff]
    %v858 = vld [vmem:[#allocation8 + $0xa90] sm:$0xff]
    %v859 = vld [vmem:[#allocation8 + $0xa98] sm:$0xff]
    %v860 = vld [vmem:[#allocation8 + $0xaa0] sm:$0xff]
    %v861 = vld [vmem:[#allocation8 + $0xaa8] sm:$0xff]
    %v862 = vld [vmem:[#allocation8 + $0xab0] sm:$0xff]
    %v863 = vld [vmem:[#allocation8 + $0xab8] sm:$0xff]
    %v864 = vld [vmem:[#allocation8 + $0xac0] sm:$0xff]
    %v865 = vld [vmem:[#allocation8 + $0xac8] sm:$0xff]
    %v866 = vld [vmem:[#allocation8 + $0xad0] sm:$0xff]
    %v867 = vld [vmem:[#allocation8 + $0xad8] sm:$0xff]
    %v868 = vld [vmem:[#allocation8 + $0xae0] sm:$0xff]
    %v869 = vld [vmem:[#allocation8 + $0xae8] sm:$0xff]
    %v870 = vld [vmem:[#allocation8 + $0xaf0] sm:$0xff]
    %v871 = vld [vmem:[#allocation8 + $0xaf8] sm:$0xff]
    %v872 = vld [vmem:[#allocation8 + $0xb00] sm:$0xff]
    %v873 = vld [vmem:[#allocation8 + $0xb08] sm:$0xff]
    %v874 = vld [vmem:[#allocation8 + $0xb10] sm:$0xff]
    %v875 = vld [vmem:[#allocation8 + $0xb18] sm:$0xff]
    %v876 = vld [vmem:[#allocation8 + $0xb20] sm:$0xff]
    %v877 = vld [vmem:[#allocation8 + $0xb28] sm:$0xff]
    %v878 = vld [vmem:[#allocation8 + $0xb30] sm:$0xff]
    %v879 = vld [vmem:[#allocation8 + $0xb38] sm:$0xff]
    %v880 = vld [vmem:[#allocation8 + $0xb40] sm:$0xff]
    %v881 = vld [vmem:[#allocation8 + $0xb48] sm:$0xff]
    %v882 = vld [vmem:[#allocation8 + $0xb50] sm:$0xff]
    %v883 = vld [vmem:[#allocation8 + $0xb58] sm:$0xff]
    %v884 = vld [vmem:[#allocation8 + $0xb60] sm:$0xff]
    %v885 = vld [vmem:[#allocation8 + $0xb68] sm:$0xff]
    %v886 = vld [vmem:[#allocation8 + $0xb70] sm:$0xff]
    %v887 = vld [vmem:[#allocation8 + $0xb78] sm:$0xff]
    %v888 = vld [vmem:[#allocation8 + $0xb80] sm:$0xff]
    %v889 = vld [vmem:[#allocation8 + $0xb88] sm:$0xff]
    %v890 = vld [vmem:[#allocation8 + $0xb90] sm:$0xff]
    %v891 = vld [vmem:[#allocation8 + $0xb98] sm:$0xff]
    %v892 = vld [vmem:[#allocation8 + $0xba0] sm:$0xff]
    %v893 = vld [vmem:[#allocation8 + $0xba8] sm:$0xff]
    %v894 = vld [vmem:[#allocation8 + $0xbb0] sm:$0xff]
    %v895 = vld [vmem:[#allocation8 + $0xbb8] sm:$0xff]
    %v896 = vld [vmem:[#allocation8 + $0xbc0] sm:$0xff]
    %v897 = vld [vmem:[#allocation8 + $0xbc8] sm:$0xff]
    %v898 = vld [vmem:[#allocation8 + $0xbd0] sm:$0xff]
    %v899 = vld [vmem:[#allocation8 + $0xbd8] sm:$0xff]
    %v900 = vld [vmem:[#allocation8 + $0xbe0] sm:$0xff]
    %v901 = vld [vmem:[#allocation8 + $0xbe8] sm:$0xff]
    %v902 = vld [vmem:[#allocation8 + $0xbf0] sm:$0xff]
    %v903 = vld [vmem:[#allocation8 + $0xbf8] sm:$0xff]
    %v904 = vld [vmem:[#allocation8 + $0xc00] sm:$0xff]
    %v905 = vld [vmem:[#allocation8 + $0xc08] sm:$0xff]
    %v906 = vld [vmem:[#allocation8 + $0xc10] sm:$0xff]
    %v907 = vld [vmem:[#allocation8 + $0xc18] sm:$0xff]
    %v908 = vld [vmem:[#allocation8 + $0xc20] sm:$0xff]
    %v909 = vld [vmem:[#allocation8 + $0xc28] sm:$0xff]
    %v910 = vld [vmem:[#allocation8 + $0xc30] sm:$0xff]
    %v911 = vld [vmem:[#allocation8 + $0xc38] sm:$0xff]
    %v912 = vld [vmem:[#allocation8 + $0xc40] sm:$0xff]
    %v913 = vld [vmem:[#allocation8 + $0xc48] sm:$0xff]
    %v914 = vld [vmem:[#allocation8 + $0xc50] sm:$0xff]
    %v915 = vld [vmem:[#allocation8 + $0xc58] sm:$0xff]
    %v916 = vld [vmem:[#allocation8 + $0xc60] sm:$0xff]
    %v917 = vld [vmem:[#allocation8 + $0xc68] sm:$0xff]
    %v918 = vld [vmem:[#allocation8 + $0xc70] sm:$0xff]
    %v919 = vld [vmem:[#allocation8 + $0xc78] sm:$0xff]
    %v920 = vld [vmem:[#allocation8 + $0xc80] sm:$0xff]
    %v921 = vld [vmem:[#allocation8 + $0xc88] sm:$0xff]
    %v922 = vld [vmem:[#allocation8 + $0xc90] sm:$0xff]
    %v923 = vld [vmem:[#allocation8 + $0xc98] sm:$0xff]
    %v924 = vld [vmem:[#allocation8 + $0xca0] sm:$0xff]
    %v925 = vld [vmem:[#allocation8 + $0xca8] sm:$0xff]
    %v926 = vld [vmem:[#allocation8 + $0xcb0] sm:$0xff]
    %v927 = vld [vmem:[#allocation8 + $0xcb8] sm:$0xff]
    %v928 = vld [vmem:[#allocation8 + $0xcc0] sm:$0xff]
    %v929 = vld [vmem:[#allocation8 + $0xcc8] sm:$0xff]
    %v930 = vld [vmem:[#allocation8 + $0xcd0] sm:$0xff]
    %v931 = vld [vmem:[#allocation8 + $0xcd8] sm:$0xff]
    %v932 = vld [vmem:[#allocation8 + $0xce0] sm:$0xff]
    %v933 = vld [vmem:[#allocation8 + $0xce8] sm:$0xff]
    %v934 = vld [vmem:[#allocation8 + $0xcf0] sm:$0xff]
    %v935 = vld [vmem:[#allocation8 + $0xcf8] sm:$0xff]
    %v936 = vld [vmem:[#allocation8 + $0xd00] sm:$0xff]
    %v937 = vld [vmem:[#allocation8 + $0xd08] sm:$0xff]
    %v938 = vld [vmem:[#allocation8 + $0xd10] sm:$0xff]
    %v939 = vld [vmem:[#allocation8 + $0xd18] sm:$0xff]
    %v940 = vld [vmem:[#allocation8 + $0xd20] sm:$0xff]
    %v941 = vld [vmem:[#allocation8 + $0xd28] sm:$0xff]
    %v942 = vld [vmem:[#allocation8 + $0xd30] sm:$0xff]
    %v943 = vld [vmem:[#allocation8 + $0xd38] sm:$0xff]
    %v944 = vld [vmem:[#allocation8 + $0xd40] sm:$0xff]
    %v945 = vld [vmem:[#allocation8 + $0xd48] sm:$0xff]
    %v946 = vld [vmem:[#allocation8 + $0xd50] sm:$0xff]
    %v947 = vld [vmem:[#allocation8 + $0xd58] sm:$0xff]
    %v948 = vld [vmem:[#allocation8 + $0xd60] sm:$0xff]
    %v949 = vld [vmem:[#allocation8 + $0xd68] sm:$0xff]
    %v950 = vld [vmem:[#allocation8 + $0xd70] sm:$0xff]
    %v951 = vld [vmem:[#allocation8 + $0xd78] sm:$0xff]
    %v952 = vld [vmem:[#allocation8 + $0xd80] sm:$0xff]
    %v953 = vld [vmem:[#allocation8 + $0xd88] sm:$0xff]
    %v954 = vld [vmem:[#allocation8 + $0xd90] sm:$0xff]
    %v955 = vld [vmem:[#allocation8 + $0xd98] sm:$0xff]
    %v956 = vld [vmem:[#allocation8 + $0xda0] sm:$0xff]
    %v957 = vld [vmem:[#allocation8 + $0xda8] sm:$0xff]
    %v958 = vld [vmem:[#allocation8 + $0xdb0] sm:$0xff]
    %v959 = vld [vmem:[#allocation8 + $0xdb8] sm:$0xff]
    %v960 = vld [vmem:[#allocation8 + $0xdc0] sm:$0xff]
    %v961 = vld [vmem:[#allocation8 + $0xdc8] sm:$0xff]
    %v962 = vld [vmem:[#allocation8 + $0xdd0] sm:$0xff]
    %v963 = vld [vmem:[#allocation8 + $0xdd8] sm:$0xff]
    %v964 = vld [vmem:[#allocation8 + $0xde0] sm:$0xff]
    %v965 = vld [vmem:[#allocation8 + $0xde8] sm:$0xff]
    %v966 = vld [vmem:[#allocation8 + $0xdf0] sm:$0xff]
    %v967 = vld [vmem:[#allocation8 + $0xdf8] sm:$0xff]
    %v968 = vld [vmem:[#allocation8 + $0xe00] sm:$0xff]
    %v969 = vld [vmem:[#allocation8 + $0xe08] sm:$0xff]
    %v970 = vld [vmem:[#allocation8 + $0xe10] sm:$0xff]
    %v971 = vld [vmem:[#allocation8 + $0xe18] sm:$0xff]
    %v972 = vld [vmem:[#allocation8 + $0xe20] sm:$0xff]
    %v973 = vld [vmem:[#allocation8 + $0xe28] sm:$0xff]
    %v974 = vld [vmem:[#allocation8 + $0xe30] sm:$0xff]
    %v975 = vld [vmem:[#allocation8 + $0xe38] sm:$0xff]
    %v976 = vld [vmem:[#allocation8 + $0xe40] sm:$0xff]
    %v977 = vld [vmem:[#allocation8 + $0xe48] sm:$0xff]
    %v978 = vld [vmem:[#allocation8 + $0xe50] sm:$0xff]
    %v979 = vld [vmem:[#allocation8 + $0xe58] sm:$0xff]
    %v980 = vld [vmem:[#allocation8 + $0xe60] sm:$0xff]
    %v981 = vld [vmem:[#allocation8 + $0xe68] sm:$0xff]
    %v982 = vld [vmem:[#allocation8 + $0xe70] sm:$0xff]
    %v983 = vld [vmem:[#allocation8 + $0xe78] sm:$0xff]
    %v984 = vld [vmem:[#allocation8 + $0xe80] sm:$0xff]
    %v985 = vld [vmem:[#allocation8 + $0xe88] sm:$0xff]
    %v986 = vld [vmem:[#allocation8 + $0xe90] sm:$0xff]
    %v987 = vld [vmem:[#allocation8 + $0xe98] sm:$0xff]
    %v988 = vld [vmem:[#allocation8 + $0xea0] sm:$0xff]
    %v989 = vld [vmem:[#allocation8 + $0xea8] sm:$0xff]
    %v990 = vld [vmem:[#allocation8 + $0xeb0] sm:$0xff]
    %v991 = vld [vmem:[#allocation8 + $0xeb8] sm:$0xff]
    %v992 = vld [vmem:[#allocation8 + $0xec0] sm:$0xff]
    %v993 = vld [vmem:[#allocation8 + $0xec8] sm:$0xff]
    %v994 = vld [vmem:[#allocation8 + $0xed0] sm:$0xff]
    %v995 = vld [vmem:[#allocation8 + $0xed8] sm:$0xff]
    %v996 = vld [vmem:[#allocation8 + $0xee0] sm:$0xff]
    %v997 = vld [vmem:[#allocation8 + $0xee8] sm:$0xff]
    %v998 = vld [vmem:[#allocation8 + $0xef0] sm:$0xff]
    %v999 = vld [vmem:[#allocation8 + $0xef8] sm:$0xff]
    %v1000 = vld [vmem:[#allocation8 + $0xf00] sm:$0xff]
    %v1001 = vld [vmem:[#allocation8 + $0xf08] sm:$0xff]
    %v1002 = vld [vmem:[#allocation8 + $0xf10] sm:$0xff]
    %v1003 = vld [vmem:[#allocation8 + $0xf18] sm:$0xff]
    %v1004 = vld [vmem:[#allocation8 + $0xf20] sm:$0xff]
    %v1005 = vld [vmem:[#allocation8 + $0xf28] sm:$0xff]
    %v1006 = vld [vmem:[#allocation8 + $0xf30] sm:$0xff]
    %v1007 = vld [vmem:[#allocation8 + $0xf38] sm:$0xff]
    %v1008 = vld [vmem:[#allocation8 + $0xf40] sm:$0xff]
    %v1009 = vld [vmem:[#allocation8 + $0xf48] sm:$0xff]
    %v1010 = vld [vmem:[#allocation8 + $0xf50] sm:$0xff]
    %v1011 = vld [vmem:[#allocation8 + $0xf58] sm:$0xff]
    %v1012 = vld [vmem:[#allocation8 + $0xf60] sm:$0xff]
    %v1013 = vld [vmem:[#allocation8 + $0xf68] sm:$0xff]
    %v1014 = vld [vmem:[#allocation8 + $0xf70] sm:$0xff]
    %v1015 = vld [vmem:[#allocation8 + $0xf78] sm:$0xff]
    %v1016 = vld [vmem:[#allocation8 + $0xf80] sm:$0xff]
    %v1017 = vld [vmem:[#allocation8 + $0xf88] sm:$0xff]
    %v1018 = vld [vmem:[#allocation8 + $0xf90] sm:$0xff]
    %v1019 = vld [vmem:[#allocation8 + $0xf98] sm:$0xff]
    %v1020 = vld [vmem:[#allocation8 + $0xfa0] sm:$0xff]
    %v1021 = vld [vmem:[#allocation8 + $0xfa8] sm:$0xff]
    %v1022 = vld [vmem:[#allocation8 + $0xfb0] sm:$0xff]
    %v1023 = vld [vmem:[#allocation8 + $0xfb8] sm:$0xff]
    %v1024 = vld [vmem:[#allocation8 + $0xfc0] sm:$0xff]
    %v1025 = vld [vmem:[#allocation8 + $0xfc8] sm:$0xff]
    %v1026 = vld [vmem:[#allocation8 + $0xfd0] sm:$0xff]
    %v1027 = vld [vmem:[#allocation8 + $0xfd8] sm:$0xff]
    %v1028 = vld [vmem:[#allocation8 + $0xfe0] sm:$0xff]
    %v1029 = vld [vmem:[#allocation8 + $0xfe8] sm:$0xff]
    %v1030 = vld [vmem:[#allocation8 + $0xff0] sm:$0xff]
    %v1031 = vld [vmem:[#allocation8 + $0xff8] sm:$0xff]
    %v1032 = vld [vmem:[#allocation10] sm:$0xff]
    %v1034 = vlaneseq
    %v1035 = vshrl.u32 %v1034, 7
    %v1036 = vsub.s32 0, %v1035
    %v1037 = vrot.slane %v1032, %v1036
    %v1038 = vlaneseq
    %v1039 = vshrl.u32 %v1038, 7
    %v1040 = vsub.s32 1, %v1039
    %v1041 = vrot.slane %v1032, %v1040
    %v1042 = vlaneseq
    %v1043 = vshrl.u32 %v1042, 7
    %v1044 = vsub.s32 2, %v1043
    %v1045 = vrot.slane %v1032, %v1044
    %v1046 = vlaneseq
    %v1047 = vshrl.u32 %v1046, 7
    %v1048 = vsub.s32 3, %v1047
    %v1049 = vrot.slane %v1032, %v1048
    %v1050 = vlaneseq
    %v1051 = vshrl.u32 %v1050, 7
    %v1052 = vsub.s32 4, %v1051
    %v1053 = vrot.slane %v1032, %v1052
    %v1054 = vlaneseq
    %v1055 = vshrl.u32 %v1054, 7
    %v1056 = vsub.s32 5, %v1055
    %v1057 = vrot.slane %v1032, %v1056
    %v1058 = vlaneseq
    %v1059 = vshrl.u32 %v1058, 7
    %v1060 = vsub.s32 6, %v1059
    %v1061 = vrot.slane %v1032, %v1060
    %v1062 = vlaneseq
    %v1063 = vshrl.u32 %v1062, 7
    %v1064 = vsub.s32 7, %v1063
    %v1065 = vrot.slane %v1032, %v1064
    %v1586 = vunpack.c.l.b16 %v520
    %v1587 = vunpack.c.h.b16 %v520
    %v1588 = vunpack.c.l.b16 %v521
    %v1589 = vunpack.c.h.b16 %v521
    %v1590 = vunpack.c.l.b16 %v522
    %v1591 = vunpack.c.h.b16 %v522
    %v1592 = vunpack.c.l.b16 %v523
    %v1593 = vunpack.c.h.b16 %v523
    %v1594 = vunpack.c.l.b16 %v524
    %v1595 = vunpack.c.h.b16 %v524
    %v1596 = vunpack.c.l.b16 %v525
    %v1597 = vunpack.c.h.b16 %v525
    %v1598 = vunpack.c.l.b16 %v526
    %v1599 = vunpack.c.h.b16 %v526
    %v1600 = vunpack.c.l.b16 %v527
    %v1601 = vunpack.c.h.b16 %v527
    %v1602 = vunpack.c.l.b16 %v528
    %v1603 = vunpack.c.h.b16 %v528
    %v1604 = vunpack.c.l.b16 %v529
    %v1605 = vunpack.c.h.b16 %v529
    %v1606 = vunpack.c.l.b16 %v530
    %v1607 = vunpack.c.h.b16 %v530
    %v1608 = vunpack.c.l.b16 %v531
    %v1609 = vunpack.c.h.b16 %v531
    %v1610 = vunpack.c.l.b16 %v532
    %v1611 = vunpack.c.h.b16 %v532
    %v1612 = vunpack.c.l.b16 %v533
    %v1613 = vunpack.c.h.b16 %v533
    %v1614 = vunpack.c.l.b16 %v534
    %v1615 = vunpack.c.h.b16 %v534
    %v1616 = vunpack.c.l.b16 %v535
    %v1617 = vunpack.c.h.b16 %v535
    %v1618 = vunpack.c.l.b16 %v536
    %v1619 = vunpack.c.h.b16 %v536
    %v1620 = vunpack.c.l.b16 %v537
    %v1621 = vunpack.c.h.b16 %v537
    %v1622 = vunpack.c.l.b16 %v538
    %v1623 = vunpack.c.h.b16 %v538
    %v1624 = vunpack.c.l.b16 %v539
    %v1625 = vunpack.c.h.b16 %v539
    %v1626 = vunpack.c.l.b16 %v540
    %v1627 = vunpack.c.h.b16 %v540
    %v1628 = vunpack.c.l.b16 %v541
    %v1629 = vunpack.c.h.b16 %v541
    %v1630 = vunpack.c.l.b16 %v542
    %v1631 = vunpack.c.h.b16 %v542
    %v1632 = vunpack.c.l.b16 %v543
    %v1633 = vunpack.c.h.b16 %v543
    %v1634 = vunpack.c.l.b16 %v544
    %v1635 = vunpack.c.h.b16 %v544
    %v1636 = vunpack.c.l.b16 %v545
    %v1637 = vunpack.c.h.b16 %v545
    %v1638 = vunpack.c.l.b16 %v546
    %v1639 = vunpack.c.h.b16 %v546
    %v1640 = vunpack.c.l.b16 %v547
    %v1641 = vunpack.c.h.b16 %v547
    %v1642 = vunpack.c.l.b16 %v548
    %v1643 = vunpack.c.h.b16 %v548
    %v1644 = vunpack.c.l.b16 %v549
    %v1645 = vunpack.c.h.b16 %v549
    %v1646 = vunpack.c.l.b16 %v550
    %v1647 = vunpack.c.h.b16 %v550
    %v1648 = vunpack.c.l.b16 %v551
    %v1649 = vunpack.c.h.b16 %v551
    %v1650 = vunpack.c.l.b16 %v552
    %v1651 = vunpack.c.h.b16 %v552
    %v1652 = vunpack.c.l.b16 %v553
    %v1653 = vunpack.c.h.b16 %v553
    %v1654 = vunpack.c.l.b16 %v554
    %v1655 = vunpack.c.h.b16 %v554
    %v1656 = vunpack.c.l.b16 %v555
    %v1657 = vunpack.c.h.b16 %v555
    %v1658 = vunpack.c.l.b16 %v556
    %v1659 = vunpack.c.h.b16 %v556
    %v1660 = vunpack.c.l.b16 %v557
    %v1661 = vunpack.c.h.b16 %v557
    %v1662 = vunpack.c.l.b16 %v558
    %v1663 = vunpack.c.h.b16 %v558
    %v1664 = vunpack.c.l.b16 %v559
    %v1665 = vunpack.c.h.b16 %v559
    %v1666 = vunpack.c.l.b16 %v560
    %v1667 = vunpack.c.h.b16 %v560
    %v1668 = vunpack.c.l.b16 %v561
    %v1669 = vunpack.c.h.b16 %v561
    %v1670 = vunpack.c.l.b16 %v562
    %v1671 = vunpack.c.h.b16 %v562
    %v1672 = vunpack.c.l.b16 %v563
    %v1673 = vunpack.c.h.b16 %v563
    %v1674 = vunpack.c.l.b16 %v564
    %v1675 = vunpack.c.h.b16 %v564
    %v1676 = vunpack.c.l.b16 %v565
    %v1677 = vunpack.c.h.b16 %v565
    %v1678 = vunpack.c.l.b16 %v566
    %v1679 = vunpack.c.h.b16 %v566
    %v1680 = vunpack.c.l.b16 %v567
    %v1681 = vunpack.c.h.b16 %v567
    %v1682 = vunpack.c.l.b16 %v568
    %v1683 = vunpack.c.h.b16 %v568
    %v1684 = vunpack.c.l.b16 %v569
    %v1685 = vunpack.c.h.b16 %v569
    %v1686 = vunpack.c.l.b16 %v570
    %v1687 = vunpack.c.h.b16 %v570
    %v1688 = vunpack.c.l.b16 %v571
    %v1689 = vunpack.c.h.b16 %v571
    %v1690 = vunpack.c.l.b16 %v572
    %v1691 = vunpack.c.h.b16 %v572
    %v1692 = vunpack.c.l.b16 %v573
    %v1693 = vunpack.c.h.b16 %v573
    %v1694 = vunpack.c.l.b16 %v574
    %v1695 = vunpack.c.h.b16 %v574
    %v1696 = vunpack.c.l.b16 %v575
    %v1697 = vunpack.c.h.b16 %v575
    %v1698 = vunpack.c.l.b16 %v576
    %v1699 = vunpack.c.h.b16 %v576
    %v1700 = vunpack.c.l.b16 %v577
    %v1701 = vunpack.c.h.b16 %v577
    %v1702 = vunpack.c.l.b16 %v578
    %v1703 = vunpack.c.h.b16 %v578
    %v1704 = vunpack.c.l.b16 %v579
    %v1705 = vunpack.c.h.b16 %v579
    %v1706 = vunpack.c.l.b16 %v580
    %v1707 = vunpack.c.h.b16 %v580
    %v1708 = vunpack.c.l.b16 %v581
    %v1709 = vunpack.c.h.b16 %v581
    %v1710 = vunpack.c.l.b16 %v582
    %v1711 = vunpack.c.h.b16 %v582
    %v1712 = vunpack.c.l.b16 %v583
    %v1713 = vunpack.c.h.b16 %v583
    %v1714 = vunpack.c.l.b16 %v584
    %v1715 = vunpack.c.h.b16 %v584
    %v1716 = vunpack.c.l.b16 %v585
    %v1717 = vunpack.c.h.b16 %v585
    %v1718 = vunpack.c.l.b16 %v586
    %v1719 = vunpack.c.h.b16 %v586
    %v1720 = vunpack.c.l.b16 %v587
    %v1721 = vunpack.c.h.b16 %v587
    %v1722 = vunpack.c.l.b16 %v588
    %v1723 = vunpack.c.h.b16 %v588
    %v1724 = vunpack.c.l.b16 %v589
    %v1725 = vunpack.c.h.b16 %v589
    %v1726 = vunpack.c.l.b16 %v590
    %v1727 = vunpack.c.h.b16 %v590
    %v1728 = vunpack.c.l.b16 %v591
    %v1729 = vunpack.c.h.b16 %v591
    %v1730 = vunpack.c.l.b16 %v592
    %v1731 = vunpack.c.h.b16 %v592
    %v1732 = vunpack.c.l.b16 %v593
    %v1733 = vunpack.c.h.b16 %v593
    %v1734 = vunpack.c.l.b16 %v594
    %v1735 = vunpack.c.h.b16 %v594
    %v1736 = vunpack.c.l.b16 %v595
    %v1737 = vunpack.c.h.b16 %v595
    %v1738 = vunpack.c.l.b16 %v596
    %v1739 = vunpack.c.h.b16 %v596
    %v1740 = vunpack.c.l.b16 %v597
    %v1741 = vunpack.c.h.b16 %v597
    %v1742 = vunpack.c.l.b16 %v598
    %v1743 = vunpack.c.h.b16 %v598
    %v1744 = vunpack.c.l.b16 %v599
    %v1745 = vunpack.c.h.b16 %v599
    %v1746 = vunpack.c.l.b16 %v600
    %v1747 = vunpack.c.h.b16 %v600
    %v1748 = vunpack.c.l.b16 %v601
    %v1749 = vunpack.c.h.b16 %v601
    %v1750 = vunpack.c.l.b16 %v602
    %v1751 = vunpack.c.h.b16 %v602
    %v1752 = vunpack.c.l.b16 %v603
    %v1753 = vunpack.c.h.b16 %v603
    %v1754 = vunpack.c.l.b16 %v604
    %v1755 = vunpack.c.h.b16 %v604
    %v1756 = vunpack.c.l.b16 %v605
    %v1757 = vunpack.c.h.b16 %v605
    %v1758 = vunpack.c.l.b16 %v606
    %v1759 = vunpack.c.h.b16 %v606
    %v1760 = vunpack.c.l.b16 %v607
    %v1761 = vunpack.c.h.b16 %v607
    %v1762 = vunpack.c.l.b16 %v608
    %v1763 = vunpack.c.h.b16 %v608
    %v1764 = vunpack.c.l.b16 %v609
    %v1765 = vunpack.c.h.b16 %v609
    %v1766 = vunpack.c.l.b16 %v610
    %v1767 = vunpack.c.h.b16 %v610
    %v1768 = vunpack.c.l.b16 %v611
    %v1769 = vunpack.c.h.b16 %v611
    %v1770 = vunpack.c.l.b16 %v612
    %v1771 = vunpack.c.h.b16 %v612
    %v1772 = vunpack.c.l.b16 %v613
    %v1773 = vunpack.c.h.b16 %v613
    %v1774 = vunpack.c.l.b16 %v614
    %v1775 = vunpack.c.h.b16 %v614
    %v1776 = vunpack.c.l.b16 %v615
    %v1777 = vunpack.c.h.b16 %v615
    %v1778 = vunpack.c.l.b16 %v616
    %v1779 = vunpack.c.h.b16 %v616
    %v1780 = vunpack.c.l.b16 %v617
    %v1781 = vunpack.c.h.b16 %v617
    %v1782 = vunpack.c.l.b16 %v618
    %v1783 = vunpack.c.h.b16 %v618
    %v1784 = vunpack.c.l.b16 %v619
    %v1785 = vunpack.c.h.b16 %v619
    %v1786 = vunpack.c.l.b16 %v620
    %v1787 = vunpack.c.h.b16 %v620
    %v1788 = vunpack.c.l.b16 %v621
    %v1789 = vunpack.c.h.b16 %v621
    %v1790 = vunpack.c.l.b16 %v622
    %v1791 = vunpack.c.h.b16 %v622
    %v1792 = vunpack.c.l.b16 %v623
    %v1793 = vunpack.c.h.b16 %v623
    %v1794 = vunpack.c.l.b16 %v624
    %v1795 = vunpack.c.h.b16 %v624
    %v1796 = vunpack.c.l.b16 %v625
    %v1797 = vunpack.c.h.b16 %v625
    %v1798 = vunpack.c.l.b16 %v626
    %v1799 = vunpack.c.h.b16 %v626
    %v1800 = vunpack.c.l.b16 %v627
    %v1801 = vunpack.c.h.b16 %v627
    %v1802 = vunpack.c.l.b16 %v628
    %v1803 = vunpack.c.h.b16 %v628
    %v1804 = vunpack.c.l.b16 %v629
    %v1805 = vunpack.c.h.b16 %v629
    %v1806 = vunpack.c.l.b16 %v630
    %v1807 = vunpack.c.h.b16 %v630
    %v1808 = vunpack.c.l.b16 %v631
    %v1809 = vunpack.c.h.b16 %v631
    %v1810 = vunpack.c.l.b16 %v632
    %v1811 = vunpack.c.h.b16 %v632
    %v1812 = vunpack.c.l.b16 %v633
    %v1813 = vunpack.c.h.b16 %v633
    %v1814 = vunpack.c.l.b16 %v634
    %v1815 = vunpack.c.h.b16 %v634
    %v1816 = vunpack.c.l.b16 %v635
    %v1817 = vunpack.c.h.b16 %v635
    %v1818 = vunpack.c.l.b16 %v636
    %v1819 = vunpack.c.h.b16 %v636
    %v1820 = vunpack.c.l.b16 %v637
    %v1821 = vunpack.c.h.b16 %v637
    %v1822 = vunpack.c.l.b16 %v638
    %v1823 = vunpack.c.h.b16 %v638
    %v1824 = vunpack.c.l.b16 %v639
    %v1825 = vunpack.c.h.b16 %v639
    %v1826 = vunpack.c.l.b16 %v640
    %v1827 = vunpack.c.h.b16 %v640
    %v1828 = vunpack.c.l.b16 %v641
    %v1829 = vunpack.c.h.b16 %v641
    %v1830 = vunpack.c.l.b16 %v642
    %v1831 = vunpack.c.h.b16 %v642
    %v1832 = vunpack.c.l.b16 %v643
    %v1833 = vunpack.c.h.b16 %v643
    %v1834 = vunpack.c.l.b16 %v644
    %v1835 = vunpack.c.h.b16 %v644
    %v1836 = vunpack.c.l.b16 %v645
    %v1837 = vunpack.c.h.b16 %v645
    %v1838 = vunpack.c.l.b16 %v646
    %v1839 = vunpack.c.h.b16 %v646
    %v1840 = vunpack.c.l.b16 %v647
    %v1841 = vunpack.c.h.b16 %v647
    %v1842 = vunpack.c.l.b16 %v648
    %v1843 = vunpack.c.h.b16 %v648
    %v1844 = vunpack.c.l.b16 %v649
    %v1845 = vunpack.c.h.b16 %v649
    %v1846 = vunpack.c.l.b16 %v650
    %v1847 = vunpack.c.h.b16 %v650
    %v1848 = vunpack.c.l.b16 %v651
    %v1849 = vunpack.c.h.b16 %v651
    %v1850 = vunpack.c.l.b16 %v652
    %v1851 = vunpack.c.h.b16 %v652
    %v1852 = vunpack.c.l.b16 %v653
    %v1853 = vunpack.c.h.b16 %v653
    %v1854 = vunpack.c.l.b16 %v654
    %v1855 = vunpack.c.h.b16 %v654
    %v1856 = vunpack.c.l.b16 %v655
    %v1857 = vunpack.c.h.b16 %v655
    %v1858 = vunpack.c.l.b16 %v656
    %v1859 = vunpack.c.h.b16 %v656
    %v1860 = vunpack.c.l.b16 %v657
    %v1861 = vunpack.c.h.b16 %v657
    %v1862 = vunpack.c.l.b16 %v658
    %v1863 = vunpack.c.h.b16 %v658
    %v1864 = vunpack.c.l.b16 %v659
    %v1865 = vunpack.c.h.b16 %v659
    %v1866 = vunpack.c.l.b16 %v660
    %v1867 = vunpack.c.h.b16 %v660
    %v1868 = vunpack.c.l.b16 %v661
    %v1869 = vunpack.c.h.b16 %v661
    %v1870 = vunpack.c.l.b16 %v662
    %v1871 = vunpack.c.h.b16 %v662
    %v1872 = vunpack.c.l.b16 %v663
    %v1873 = vunpack.c.h.b16 %v663
    %v1874 = vunpack.c.l.b16 %v664
    %v1875 = vunpack.c.h.b16 %v664
    %v1876 = vunpack.c.l.b16 %v665
    %v1877 = vunpack.c.h.b16 %v665
    %v1878 = vunpack.c.l.b16 %v666
    %v1879 = vunpack.c.h.b16 %v666
    %v1880 = vunpack.c.l.b16 %v667
    %v1881 = vunpack.c.h.b16 %v667
    %v1882 = vunpack.c.l.b16 %v668
    %v1883 = vunpack.c.h.b16 %v668
    %v1884 = vunpack.c.l.b16 %v669
    %v1885 = vunpack.c.h.b16 %v669
    %v1886 = vunpack.c.l.b16 %v670
    %v1887 = vunpack.c.h.b16 %v670
    %v1888 = vunpack.c.l.b16 %v671
    %v1889 = vunpack.c.h.b16 %v671
    %v1890 = vunpack.c.l.b16 %v672
    %v1891 = vunpack.c.h.b16 %v672
    %v1892 = vunpack.c.l.b16 %v673
    %v1893 = vunpack.c.h.b16 %v673
    %v1894 = vunpack.c.l.b16 %v674
    %v1895 = vunpack.c.h.b16 %v674
    %v1896 = vunpack.c.l.b16 %v675
    %v1897 = vunpack.c.h.b16 %v675
    %v1898 = vunpack.c.l.b16 %v676
    %v1899 = vunpack.c.h.b16 %v676
    %v1900 = vunpack.c.l.b16 %v677
    %v1901 = vunpack.c.h.b16 %v677
    %v1902 = vunpack.c.l.b16 %v678
    %v1903 = vunpack.c.h.b16 %v678
    %v1904 = vunpack.c.l.b16 %v679
    %v1905 = vunpack.c.h.b16 %v679
    %v1906 = vunpack.c.l.b16 %v680
    %v1907 = vunpack.c.h.b16 %v680
    %v1908 = vunpack.c.l.b16 %v681
    %v1909 = vunpack.c.h.b16 %v681
    %v1910 = vunpack.c.l.b16 %v682
    %v1911 = vunpack.c.h.b16 %v682
    %v1912 = vunpack.c.l.b16 %v683
    %v1913 = vunpack.c.h.b16 %v683
    %v1914 = vunpack.c.l.b16 %v684
    %v1915 = vunpack.c.h.b16 %v684
    %v1916 = vunpack.c.l.b16 %v685
    %v1917 = vunpack.c.h.b16 %v685
    %v1918 = vunpack.c.l.b16 %v686
    %v1919 = vunpack.c.h.b16 %v686
    %v1920 = vunpack.c.l.b16 %v687
    %v1921 = vunpack.c.h.b16 %v687
    %v1922 = vunpack.c.l.b16 %v688
    %v1923 = vunpack.c.h.b16 %v688
    %v1924 = vunpack.c.l.b16 %v689
    %v1925 = vunpack.c.h.b16 %v689
    %v1926 = vunpack.c.l.b16 %v690
    %v1927 = vunpack.c.h.b16 %v690
    %v1928 = vunpack.c.l.b16 %v691
    %v1929 = vunpack.c.h.b16 %v691
    %v1930 = vunpack.c.l.b16 %v692
    %v1931 = vunpack.c.h.b16 %v692
    %v1932 = vunpack.c.l.b16 %v693
    %v1933 = vunpack.c.h.b16 %v693
    %v1934 = vunpack.c.l.b16 %v694
    %v1935 = vunpack.c.h.b16 %v694
    %v1936 = vunpack.c.l.b16 %v695
    %v1937 = vunpack.c.h.b16 %v695
    %v1938 = vunpack.c.l.b16 %v696
    %v1939 = vunpack.c.h.b16 %v696
    %v1940 = vunpack.c.l.b16 %v697
    %v1941 = vunpack.c.h.b16 %v697
    %v1942 = vunpack.c.l.b16 %v698
    %v1943 = vunpack.c.h.b16 %v698
    %v1944 = vunpack.c.l.b16 %v699
    %v1945 = vunpack.c.h.b16 %v699
    %v1946 = vunpack.c.l.b16 %v700
    %v1947 = vunpack.c.h.b16 %v700
    %v1948 = vunpack.c.l.b16 %v701
    %v1949 = vunpack.c.h.b16 %v701
    %v1950 = vunpack.c.l.b16 %v702
    %v1951 = vunpack.c.h.b16 %v702
    %v1952 = vunpack.c.l.b16 %v703
    %v1953 = vunpack.c.h.b16 %v703
    %v1954 = vunpack.c.l.b16 %v704
    %v1955 = vunpack.c.h.b16 %v704
    %v1956 = vunpack.c.l.b16 %v705
    %v1957 = vunpack.c.h.b16 %v705
    %v1958 = vunpack.c.l.b16 %v706
    %v1959 = vunpack.c.h.b16 %v706
    %v1960 = vunpack.c.l.b16 %v707
    %v1961 = vunpack.c.h.b16 %v707
    %v1962 = vunpack.c.l.b16 %v708
    %v1963 = vunpack.c.h.b16 %v708
    %v1964 = vunpack.c.l.b16 %v709
    %v1965 = vunpack.c.h.b16 %v709
    %v1966 = vunpack.c.l.b16 %v710
    %v1967 = vunpack.c.h.b16 %v710
    %v1968 = vunpack.c.l.b16 %v711
    %v1969 = vunpack.c.h.b16 %v711
    %v1970 = vunpack.c.l.b16 %v712
    %v1971 = vunpack.c.h.b16 %v712
    %v1972 = vunpack.c.l.b16 %v713
    %v1973 = vunpack.c.h.b16 %v713
    %v1974 = vunpack.c.l.b16 %v714
    %v1975 = vunpack.c.h.b16 %v714
    %v1976 = vunpack.c.l.b16 %v715
    %v1977 = vunpack.c.h.b16 %v715
    %v1978 = vunpack.c.l.b16 %v716
    %v1979 = vunpack.c.h.b16 %v716
    %v1980 = vunpack.c.l.b16 %v717
    %v1981 = vunpack.c.h.b16 %v717
    %v1982 = vunpack.c.l.b16 %v718
    %v1983 = vunpack.c.h.b16 %v718
    %v1984 = vunpack.c.l.b16 %v719
    %v1985 = vunpack.c.h.b16 %v719
    %v1986 = vunpack.c.l.b16 %v720
    %v1987 = vunpack.c.h.b16 %v720
    %v1988 = vunpack.c.l.b16 %v721
    %v1989 = vunpack.c.h.b16 %v721
    %v1990 = vunpack.c.l.b16 %v722
    %v1991 = vunpack.c.h.b16 %v722
    %v1992 = vunpack.c.l.b16 %v723
    %v1993 = vunpack.c.h.b16 %v723
    %v1994 = vunpack.c.l.b16 %v724
    %v1995 = vunpack.c.h.b16 %v724
    %v1996 = vunpack.c.l.b16 %v725
    %v1997 = vunpack.c.h.b16 %v725
    %v1998 = vunpack.c.l.b16 %v726
    %v1999 = vunpack.c.h.b16 %v726
    %v2000 = vunpack.c.l.b16 %v727
    %v2001 = vunpack.c.h.b16 %v727
    %v2002 = vunpack.c.l.b16 %v728
    %v2003 = vunpack.c.h.b16 %v728
    %v2004 = vunpack.c.l.b16 %v729
    %v2005 = vunpack.c.h.b16 %v729
    %v2006 = vunpack.c.l.b16 %v730
    %v2007 = vunpack.c.h.b16 %v730
    %v2008 = vunpack.c.l.b16 %v731
    %v2009 = vunpack.c.h.b16 %v731
    %v2010 = vunpack.c.l.b16 %v732
    %v2011 = vunpack.c.h.b16 %v732
    %v2012 = vunpack.c.l.b16 %v733
    %v2013 = vunpack.c.h.b16 %v733
    %v2014 = vunpack.c.l.b16 %v734
    %v2015 = vunpack.c.h.b16 %v734
    %v2016 = vunpack.c.l.b16 %v735
    %v2017 = vunpack.c.h.b16 %v735
    %v2018 = vunpack.c.l.b16 %v736
    %v2019 = vunpack.c.h.b16 %v736
    %v2020 = vunpack.c.l.b16 %v737
    %v2021 = vunpack.c.h.b16 %v737
    %v2022 = vunpack.c.l.b16 %v738
    %v2023 = vunpack.c.h.b16 %v738
    %v2024 = vunpack.c.l.b16 %v739
    %v2025 = vunpack.c.h.b16 %v739
    %v2026 = vunpack.c.l.b16 %v740
    %v2027 = vunpack.c.h.b16 %v740
    %v2028 = vunpack.c.l.b16 %v741
    %v2029 = vunpack.c.h.b16 %v741
    %v2030 = vunpack.c.l.b16 %v742
    %v2031 = vunpack.c.h.b16 %v742
    %v2032 = vunpack.c.l.b16 %v743
    %v2033 = vunpack.c.h.b16 %v743
    %v2034 = vunpack.c.l.b16 %v744
    %v2035 = vunpack.c.h.b16 %v744
    %v2036 = vunpack.c.l.b16 %v745
    %v2037 = vunpack.c.h.b16 %v745
    %v2038 = vunpack.c.l.b16 %v746
    %v2039 = vunpack.c.h.b16 %v746
    %v2040 = vunpack.c.l.b16 %v747
    %v2041 = vunpack.c.h.b16 %v747
    %v2042 = vunpack.c.l.b16 %v748
    %v2043 = vunpack.c.h.b16 %v748
    %v2044 = vunpack.c.l.b16 %v749
    %v2045 = vunpack.c.h.b16 %v749
    %v2046 = vunpack.c.l.b16 %v750
    %v2047 = vunpack.c.h.b16 %v750
    %v2048 = vunpack.c.l.b16 %v751
    %v2049 = vunpack.c.h.b16 %v751
    %v2050 = vunpack.c.l.b16 %v752
    %v2051 = vunpack.c.h.b16 %v752
    %v2052 = vunpack.c.l.b16 %v753
    %v2053 = vunpack.c.h.b16 %v753
    %v2054 = vunpack.c.l.b16 %v754
    %v2055 = vunpack.c.h.b16 %v754
    %v2056 = vunpack.c.l.b16 %v755
    %v2057 = vunpack.c.h.b16 %v755
    %v2058 = vunpack.c.l.b16 %v756
    %v2059 = vunpack.c.h.b16 %v756
    %v2060 = vunpack.c.l.b16 %v757
    %v2061 = vunpack.c.h.b16 %v757
    %v2062 = vunpack.c.l.b16 %v758
    %v2063 = vunpack.c.h.b16 %v758
    %v2064 = vunpack.c.l.b16 %v759
    %v2065 = vunpack.c.h.b16 %v759
    %v2066 = vunpack.c.l.b16 %v760
    %v2067 = vunpack.c.h.b16 %v760
    %v2068 = vunpack.c.l.b16 %v761
    %v2069 = vunpack.c.h.b16 %v761
    %v2070 = vunpack.c.l.b16 %v762
    %v2071 = vunpack.c.h.b16 %v762
    %v2072 = vunpack.c.l.b16 %v763
    %v2073 = vunpack.c.h.b16 %v763
    %v2074 = vunpack.c.l.b16 %v764
    %v2075 = vunpack.c.h.b16 %v764
    %v2076 = vunpack.c.l.b16 %v765
    %v2077 = vunpack.c.h.b16 %v765
    %v2078 = vunpack.c.l.b16 %v766
    %v2079 = vunpack.c.h.b16 %v766
    %v2080 = vunpack.c.l.b16 %v767
    %v2081 = vunpack.c.h.b16 %v767
    %v2082 = vunpack.c.l.b16 %v768
    %v2083 = vunpack.c.h.b16 %v768
    %v2084 = vunpack.c.l.b16 %v769
    %v2085 = vunpack.c.h.b16 %v769
    %v2086 = vunpack.c.l.b16 %v770
    %v2087 = vunpack.c.h.b16 %v770
    %v2088 = vunpack.c.l.b16 %v771
    %v2089 = vunpack.c.h.b16 %v771
    %v2090 = vunpack.c.l.b16 %v772
    %v2091 = vunpack.c.h.b16 %v772
    %v2092 = vunpack.c.l.b16 %v773
    %v2093 = vunpack.c.h.b16 %v773
    %v2094 = vunpack.c.l.b16 %v774
    %v2095 = vunpack.c.h.b16 %v774
    %v2096 = vunpack.c.l.b16 %v775
    %v2097 = vunpack.c.h.b16 %v775
    %v2098 = vunpack.c.l.b16 %v776
    %v2099 = vunpack.c.h.b16 %v776
    %v2100 = vunpack.c.l.b16 %v777
    %v2101 = vunpack.c.h.b16 %v777
    %v2102 = vunpack.c.l.b16 %v778
    %v2103 = vunpack.c.h.b16 %v778
    %v2104 = vunpack.c.l.b16 %v779
    %v2105 = vunpack.c.h.b16 %v779
    %v2106 = vunpack.c.l.b16 %v780
    %v2107 = vunpack.c.h.b16 %v780
    %v2108 = vunpack.c.l.b16 %v781
    %v2109 = vunpack.c.h.b16 %v781
    %v2110 = vunpack.c.l.b16 %v782
    %v2111 = vunpack.c.h.b16 %v782
    %v2112 = vunpack.c.l.b16 %v783
    %v2113 = vunpack.c.h.b16 %v783
    %v2114 = vunpack.c.l.b16 %v784
    %v2115 = vunpack.c.h.b16 %v784
    %v2116 = vunpack.c.l.b16 %v785
    %v2117 = vunpack.c.h.b16 %v785
    %v2118 = vunpack.c.l.b16 %v786
    %v2119 = vunpack.c.h.b16 %v786
    %v2120 = vunpack.c.l.b16 %v787
    %v2121 = vunpack.c.h.b16 %v787
    %v2122 = vunpack.c.l.b16 %v788
    %v2123 = vunpack.c.h.b16 %v788
    %v2124 = vunpack.c.l.b16 %v789
    %v2125 = vunpack.c.h.b16 %v789
    %v2126 = vunpack.c.l.b16 %v790
    %v2127 = vunpack.c.h.b16 %v790
    %v2128 = vunpack.c.l.b16 %v791
    %v2129 = vunpack.c.h.b16 %v791
    %v2130 = vunpack.c.l.b16 %v792
    %v2131 = vunpack.c.h.b16 %v792
    %v2132 = vunpack.c.l.b16 %v793
    %v2133 = vunpack.c.h.b16 %v793
    %v2134 = vunpack.c.l.b16 %v794
    %v2135 = vunpack.c.h.b16 %v794
    %v2136 = vunpack.c.l.b16 %v795
    %v2137 = vunpack.c.h.b16 %v795
    %v2138 = vunpack.c.l.b16 %v796
    %v2139 = vunpack.c.h.b16 %v796
    %v2140 = vunpack.c.l.b16 %v797
    %v2141 = vunpack.c.h.b16 %v797
    %v2142 = vunpack.c.l.b16 %v798
    %v2143 = vunpack.c.h.b16 %v798
    %v2144 = vunpack.c.l.b16 %v799
    %v2145 = vunpack.c.h.b16 %v799
    %v2146 = vunpack.c.l.b16 %v800
    %v2147 = vunpack.c.h.b16 %v800
    %v2148 = vunpack.c.l.b16 %v801
    %v2149 = vunpack.c.h.b16 %v801
    %v2150 = vunpack.c.l.b16 %v802
    %v2151 = vunpack.c.h.b16 %v802
    %v2152 = vunpack.c.l.b16 %v803
    %v2153 = vunpack.c.h.b16 %v803
    %v2154 = vunpack.c.l.b16 %v804
    %v2155 = vunpack.c.h.b16 %v804
    %v2156 = vunpack.c.l.b16 %v805
    %v2157 = vunpack.c.h.b16 %v805
    %v2158 = vunpack.c.l.b16 %v806
    %v2159 = vunpack.c.h.b16 %v806
    %v2160 = vunpack.c.l.b16 %v807
    %v2161 = vunpack.c.h.b16 %v807
    %v2162 = vunpack.c.l.b16 %v808
    %v2163 = vunpack.c.h.b16 %v808
    %v2164 = vunpack.c.l.b16 %v809
    %v2165 = vunpack.c.h.b16 %v809
    %v2166 = vunpack.c.l.b16 %v810
    %v2167 = vunpack.c.h.b16 %v810
    %v2168 = vunpack.c.l.b16 %v811
    %v2169 = vunpack.c.h.b16 %v811
    %v2170 = vunpack.c.l.b16 %v812
    %v2171 = vunpack.c.h.b16 %v812
    %v2172 = vunpack.c.l.b16 %v813
    %v2173 = vunpack.c.h.b16 %v813
    %v2174 = vunpack.c.l.b16 %v814
    %v2175 = vunpack.c.h.b16 %v814
    %v2176 = vunpack.c.l.b16 %v815
    %v2177 = vunpack.c.h.b16 %v815
    %v2178 = vunpack.c.l.b16 %v816
    %v2179 = vunpack.c.h.b16 %v816
    %v2180 = vunpack.c.l.b16 %v817
    %v2181 = vunpack.c.h.b16 %v817
    %v2182 = vunpack.c.l.b16 %v818
    %v2183 = vunpack.c.h.b16 %v818
    %v2184 = vunpack.c.l.b16 %v819
    %v2185 = vunpack.c.h.b16 %v819
    %v2186 = vunpack.c.l.b16 %v820
    %v2187 = vunpack.c.h.b16 %v820
    %v2188 = vunpack.c.l.b16 %v821
    %v2189 = vunpack.c.h.b16 %v821
    %v2190 = vunpack.c.l.b16 %v822
    %v2191 = vunpack.c.h.b16 %v822
    %v2192 = vunpack.c.l.b16 %v823
    %v2193 = vunpack.c.h.b16 %v823
    %v2194 = vunpack.c.l.b16 %v824
    %v2195 = vunpack.c.h.b16 %v824
    %v2196 = vunpack.c.l.b16 %v825
    %v2197 = vunpack.c.h.b16 %v825
    %v2198 = vunpack.c.l.b16 %v826
    %v2199 = vunpack.c.h.b16 %v826
    %v2200 = vunpack.c.l.b16 %v827
    %v2201 = vunpack.c.h.b16 %v827
    %v2202 = vunpack.c.l.b16 %v828
    %v2203 = vunpack.c.h.b16 %v828
    %v2204 = vunpack.c.l.b16 %v829
    %v2205 = vunpack.c.h.b16 %v829
    %v2206 = vunpack.c.l.b16 %v830
    %v2207 = vunpack.c.h.b16 %v830
    %v2208 = vunpack.c.l.b16 %v831
    %v2209 = vunpack.c.h.b16 %v831
    %v2210 = vunpack.c.l.b16 %v832
    %v2211 = vunpack.c.h.b16 %v832
    %v2212 = vunpack.c.l.b16 %v833
    %v2213 = vunpack.c.h.b16 %v833
    %v2214 = vunpack.c.l.b16 %v834
    %v2215 = vunpack.c.h.b16 %v834
    %v2216 = vunpack.c.l.b16 %v835
    %v2217 = vunpack.c.h.b16 %v835
    %v2218 = vunpack.c.l.b16 %v836
    %v2219 = vunpack.c.h.b16 %v836
    %v2220 = vunpack.c.l.b16 %v837
    %v2221 = vunpack.c.h.b16 %v837
    %v2222 = vunpack.c.l.b16 %v838
    %v2223 = vunpack.c.h.b16 %v838
    %v2224 = vunpack.c.l.b16 %v839
    %v2225 = vunpack.c.h.b16 %v839
    %v2226 = vunpack.c.l.b16 %v840
    %v2227 = vunpack.c.h.b16 %v840
    %v2228 = vunpack.c.l.b16 %v841
    %v2229 = vunpack.c.h.b16 %v841
    %v2230 = vunpack.c.l.b16 %v842
    %v2231 = vunpack.c.h.b16 %v842
    %v2232 = vunpack.c.l.b16 %v843
    %v2233 = vunpack.c.h.b16 %v843
    %v2234 = vunpack.c.l.b16 %v844
    %v2235 = vunpack.c.h.b16 %v844
    %v2236 = vunpack.c.l.b16 %v845
    %v2237 = vunpack.c.h.b16 %v845
    %v2238 = vunpack.c.l.b16 %v846
    %v2239 = vunpack.c.h.b16 %v846
    %v2240 = vunpack.c.l.b16 %v847
    %v2241 = vunpack.c.h.b16 %v847
    %v2242 = vunpack.c.l.b16 %v848
    %v2243 = vunpack.c.h.b16 %v848
    %v2244 = vunpack.c.l.b16 %v849
    %v2245 = vunpack.c.h.b16 %v849
    %v2246 = vunpack.c.l.b16 %v850
    %v2247 = vunpack.c.h.b16 %v850
    %v2248 = vunpack.c.l.b16 %v851
    %v2249 = vunpack.c.h.b16 %v851
    %v2250 = vunpack.c.l.b16 %v852
    %v2251 = vunpack.c.h.b16 %v852
    %v2252 = vunpack.c.l.b16 %v853
    %v2253 = vunpack.c.h.b16 %v853
    %v2254 = vunpack.c.l.b16 %v854
    %v2255 = vunpack.c.h.b16 %v854
    %v2256 = vunpack.c.l.b16 %v855
    %v2257 = vunpack.c.h.b16 %v855
    %v2258 = vunpack.c.l.b16 %v856
    %v2259 = vunpack.c.h.b16 %v856
    %v2260 = vunpack.c.l.b16 %v857
    %v2261 = vunpack.c.h.b16 %v857
    %v2262 = vunpack.c.l.b16 %v858
    %v2263 = vunpack.c.h.b16 %v858
    %v2264 = vunpack.c.l.b16 %v859
    %v2265 = vunpack.c.h.b16 %v859
    %v2266 = vunpack.c.l.b16 %v860
    %v2267 = vunpack.c.h.b16 %v860
    %v2268 = vunpack.c.l.b16 %v861
    %v2269 = vunpack.c.h.b16 %v861
    %v2270 = vunpack.c.l.b16 %v862
    %v2271 = vunpack.c.h.b16 %v862
    %v2272 = vunpack.c.l.b16 %v863
    %v2273 = vunpack.c.h.b16 %v863
    %v2274 = vunpack.c.l.b16 %v864
    %v2275 = vunpack.c.h.b16 %v864
    %v2276 = vunpack.c.l.b16 %v865
    %v2277 = vunpack.c.h.b16 %v865
    %v2278 = vunpack.c.l.b16 %v866
    %v2279 = vunpack.c.h.b16 %v866
    %v2280 = vunpack.c.l.b16 %v867
    %v2281 = vunpack.c.h.b16 %v867
    %v2282 = vunpack.c.l.b16 %v868
    %v2283 = vunpack.c.h.b16 %v868
    %v2284 = vunpack.c.l.b16 %v869
    %v2285 = vunpack.c.h.b16 %v869
    %v2286 = vunpack.c.l.b16 %v870
    %v2287 = vunpack.c.h.b16 %v870
    %v2288 = vunpack.c.l.b16 %v871
    %v2289 = vunpack.c.h.b16 %v871
    %v2290 = vunpack.c.l.b16 %v872
    %v2291 = vunpack.c.h.b16 %v872
    %v2292 = vunpack.c.l.b16 %v873
    %v2293 = vunpack.c.h.b16 %v873
    %v2294 = vunpack.c.l.b16 %v874
    %v2295 = vunpack.c.h.b16 %v874
    %v2296 = vunpack.c.l.b16 %v875
    %v2297 = vunpack.c.h.b16 %v875
    %v2298 = vunpack.c.l.b16 %v876
    %v2299 = vunpack.c.h.b16 %v876
    %v2300 = vunpack.c.l.b16 %v877
    %v2301 = vunpack.c.h.b16 %v877
    %v2302 = vunpack.c.l.b16 %v878
    %v2303 = vunpack.c.h.b16 %v878
    %v2304 = vunpack.c.l.b16 %v879
    %v2305 = vunpack.c.h.b16 %v879
    %v2306 = vunpack.c.l.b16 %v880
    %v2307 = vunpack.c.h.b16 %v880
    %v2308 = vunpack.c.l.b16 %v881
    %v2309 = vunpack.c.h.b16 %v881
    %v2310 = vunpack.c.l.b16 %v882
    %v2311 = vunpack.c.h.b16 %v882
    %v2312 = vunpack.c.l.b16 %v883
    %v2313 = vunpack.c.h.b16 %v883
    %v2314 = vunpack.c.l.b16 %v884
    %v2315 = vunpack.c.h.b16 %v884
    %v2316 = vunpack.c.l.b16 %v885
    %v2317 = vunpack.c.h.b16 %v885
    %v2318 = vunpack.c.l.b16 %v886
    %v2319 = vunpack.c.h.b16 %v886
    %v2320 = vunpack.c.l.b16 %v887
    %v2321 = vunpack.c.h.b16 %v887
    %v2322 = vunpack.c.l.b16 %v888
    %v2323 = vunpack.c.h.b16 %v888
    %v2324 = vunpack.c.l.b16 %v889
    %v2325 = vunpack.c.h.b16 %v889
    %v2326 = vunpack.c.l.b16 %v890
    %v2327 = vunpack.c.h.b16 %v890
    %v2328 = vunpack.c.l.b16 %v891
    %v2329 = vunpack.c.h.b16 %v891
    %v2330 = vunpack.c.l.b16 %v892
    %v2331 = vunpack.c.h.b16 %v892
    %v2332 = vunpack.c.l.b16 %v893
    %v2333 = vunpack.c.h.b16 %v893
    %v2334 = vunpack.c.l.b16 %v894
    %v2335 = vunpack.c.h.b16 %v894
    %v2336 = vunpack.c.l.b16 %v895
    %v2337 = vunpack.c.h.b16 %v895
    %v2338 = vunpack.c.l.b16 %v896
    %v2339 = vunpack.c.h.b16 %v896
    %v2340 = vunpack.c.l.b16 %v897
    %v2341 = vunpack.c.h.b16 %v897
    %v2342 = vunpack.c.l.b16 %v898
    %v2343 = vunpack.c.h.b16 %v898
    %v2344 = vunpack.c.l.b16 %v899
    %v2345 = vunpack.c.h.b16 %v899
    %v2346 = vunpack.c.l.b16 %v900
    %v2347 = vunpack.c.h.b16 %v900
    %v2348 = vunpack.c.l.b16 %v901
    %v2349 = vunpack.c.h.b16 %v901
    %v2350 = vunpack.c.l.b16 %v902
    %v2351 = vunpack.c.h.b16 %v902
    %v2352 = vunpack.c.l.b16 %v903
    %v2353 = vunpack.c.h.b16 %v903
    %v2354 = vunpack.c.l.b16 %v904
    %v2355 = vunpack.c.h.b16 %v904
    %v2356 = vunpack.c.l.b16 %v905
    %v2357 = vunpack.c.h.b16 %v905
    %v2358 = vunpack.c.l.b16 %v906
    %v2359 = vunpack.c.h.b16 %v906
    %v2360 = vunpack.c.l.b16 %v907
    %v2361 = vunpack.c.h.b16 %v907
    %v2362 = vunpack.c.l.b16 %v908
    %v2363 = vunpack.c.h.b16 %v908
    %v2364 = vunpack.c.l.b16 %v909
    %v2365 = vunpack.c.h.b16 %v909
    %v2366 = vunpack.c.l.b16 %v910
    %v2367 = vunpack.c.h.b16 %v910
    %v2368 = vunpack.c.l.b16 %v911
    %v2369 = vunpack.c.h.b16 %v911
    %v2370 = vunpack.c.l.b16 %v912
    %v2371 = vunpack.c.h.b16 %v912
    %v2372 = vunpack.c.l.b16 %v913
    %v2373 = vunpack.c.h.b16 %v913
    %v2374 = vunpack.c.l.b16 %v914
    %v2375 = vunpack.c.h.b16 %v914
    %v2376 = vunpack.c.l.b16 %v915
    %v2377 = vunpack.c.h.b16 %v915
    %v2378 = vunpack.c.l.b16 %v916
    %v2379 = vunpack.c.h.b16 %v916
    %v2380 = vunpack.c.l.b16 %v917
    %v2381 = vunpack.c.h.b16 %v917
    %v2382 = vunpack.c.l.b16 %v918
    %v2383 = vunpack.c.h.b16 %v918
    %v2384 = vunpack.c.l.b16 %v919
    %v2385 = vunpack.c.h.b16 %v919
    %v2386 = vunpack.c.l.b16 %v920
    %v2387 = vunpack.c.h.b16 %v920
    %v2388 = vunpack.c.l.b16 %v921
    %v2389 = vunpack.c.h.b16 %v921
    %v2390 = vunpack.c.l.b16 %v922
    %v2391 = vunpack.c.h.b16 %v922
    %v2392 = vunpack.c.l.b16 %v923
    %v2393 = vunpack.c.h.b16 %v923
    %v2394 = vunpack.c.l.b16 %v924
    %v2395 = vunpack.c.h.b16 %v924
    %v2396 = vunpack.c.l.b16 %v925
    %v2397 = vunpack.c.h.b16 %v925
    %v2398 = vunpack.c.l.b16 %v926
    %v2399 = vunpack.c.h.b16 %v926
    %v2400 = vunpack.c.l.b16 %v927
    %v2401 = vunpack.c.h.b16 %v927
    %v2402 = vunpack.c.l.b16 %v928
    %v2403 = vunpack.c.h.b16 %v928
    %v2404 = vunpack.c.l.b16 %v929
    %v2405 = vunpack.c.h.b16 %v929
    %v2406 = vunpack.c.l.b16 %v930
    %v2407 = vunpack.c.h.b16 %v930
    %v2408 = vunpack.c.l.b16 %v931
    %v2409 = vunpack.c.h.b16 %v931
    %v2410 = vunpack.c.l.b16 %v932
    %v2411 = vunpack.c.h.b16 %v932
    %v2412 = vunpack.c.l.b16 %v933
    %v2413 = vunpack.c.h.b16 %v933
    %v2414 = vunpack.c.l.b16 %v934
    %v2415 = vunpack.c.h.b16 %v934
    %v2416 = vunpack.c.l.b16 %v935
    %v2417 = vunpack.c.h.b16 %v935
    %v2418 = vunpack.c.l.b16 %v936
    %v2419 = vunpack.c.h.b16 %v936
    %v2420 = vunpack.c.l.b16 %v937
    %v2421 = vunpack.c.h.b16 %v937
    %v2422 = vunpack.c.l.b16 %v938
    %v2423 = vunpack.c.h.b16 %v938
    %v2424 = vunpack.c.l.b16 %v939
    %v2425 = vunpack.c.h.b16 %v939
    %v2426 = vunpack.c.l.b16 %v940
    %v2427 = vunpack.c.h.b16 %v940
    %v2428 = vunpack.c.l.b16 %v941
    %v2429 = vunpack.c.h.b16 %v941
    %v2430 = vunpack.c.l.b16 %v942
    %v2431 = vunpack.c.h.b16 %v942
    %v2432 = vunpack.c.l.b16 %v943
    %v2433 = vunpack.c.h.b16 %v943
    %v2434 = vunpack.c.l.b16 %v944
    %v2435 = vunpack.c.h.b16 %v944
    %v2436 = vunpack.c.l.b16 %v945
    %v2437 = vunpack.c.h.b16 %v945
    %v2438 = vunpack.c.l.b16 %v946
    %v2439 = vunpack.c.h.b16 %v946
    %v2440 = vunpack.c.l.b16 %v947
    %v2441 = vunpack.c.h.b16 %v947
    %v2442 = vunpack.c.l.b16 %v948
    %v2443 = vunpack.c.h.b16 %v948
    %v2444 = vunpack.c.l.b16 %v949
    %v2445 = vunpack.c.h.b16 %v949
    %v2446 = vunpack.c.l.b16 %v950
    %v2447 = vunpack.c.h.b16 %v950
    %v2448 = vunpack.c.l.b16 %v951
    %v2449 = vunpack.c.h.b16 %v951
    %v2450 = vunpack.c.l.b16 %v952
    %v2451 = vunpack.c.h.b16 %v952
    %v2452 = vunpack.c.l.b16 %v953
    %v2453 = vunpack.c.h.b16 %v953
    %v2454 = vunpack.c.l.b16 %v954
    %v2455 = vunpack.c.h.b16 %v954
    %v2456 = vunpack.c.l.b16 %v955
    %v2457 = vunpack.c.h.b16 %v955
    %v2458 = vunpack.c.l.b16 %v956
    %v2459 = vunpack.c.h.b16 %v956
    %v2460 = vunpack.c.l.b16 %v957
    %v2461 = vunpack.c.h.b16 %v957
    %v2462 = vunpack.c.l.b16 %v958
    %v2463 = vunpack.c.h.b16 %v958
    %v2464 = vunpack.c.l.b16 %v959
    %v2465 = vunpack.c.h.b16 %v959
    %v2466 = vunpack.c.l.b16 %v960
    %v2467 = vunpack.c.h.b16 %v960
    %v2468 = vunpack.c.l.b16 %v961
    %v2469 = vunpack.c.h.b16 %v961
    %v2470 = vunpack.c.l.b16 %v962
    %v2471 = vunpack.c.h.b16 %v962
    %v2472 = vunpack.c.l.b16 %v963
    %v2473 = vunpack.c.h.b16 %v963
    %v2474 = vunpack.c.l.b16 %v964
    %v2475 = vunpack.c.h.b16 %v964
    %v2476 = vunpack.c.l.b16 %v965
    %v2477 = vunpack.c.h.b16 %v965
    %v2478 = vunpack.c.l.b16 %v966
    %v2479 = vunpack.c.h.b16 %v966
    %v2480 = vunpack.c.l.b16 %v967
    %v2481 = vunpack.c.h.b16 %v967
    %v2482 = vunpack.c.l.b16 %v968
    %v2483 = vunpack.c.h.b16 %v968
    %v2484 = vunpack.c.l.b16 %v969
    %v2485 = vunpack.c.h.b16 %v969
    %v2486 = vunpack.c.l.b16 %v970
    %v2487 = vunpack.c.h.b16 %v970
    %v2488 = vunpack.c.l.b16 %v971
    %v2489 = vunpack.c.h.b16 %v971
    %v2490 = vunpack.c.l.b16 %v972
    %v2491 = vunpack.c.h.b16 %v972
    %v2492 = vunpack.c.l.b16 %v973
    %v2493 = vunpack.c.h.b16 %v973
    %v2494 = vunpack.c.l.b16 %v974
    %v2495 = vunpack.c.h.b16 %v974
    %v2496 = vunpack.c.l.b16 %v975
    %v2497 = vunpack.c.h.b16 %v975
    %v2498 = vunpack.c.l.b16 %v976
    %v2499 = vunpack.c.h.b16 %v976
    %v2500 = vunpack.c.l.b16 %v977
    %v2501 = vunpack.c.h.b16 %v977
    %v2502 = vunpack.c.l.b16 %v978
    %v2503 = vunpack.c.h.b16 %v978
    %v2504 = vunpack.c.l.b16 %v979
    %v2505 = vunpack.c.h.b16 %v979
    %v2506 = vunpack.c.l.b16 %v980
    %v2507 = vunpack.c.h.b16 %v980
    %v2508 = vunpack.c.l.b16 %v981
    %v2509 = vunpack.c.h.b16 %v981
    %v2510 = vunpack.c.l.b16 %v982
    %v2511 = vunpack.c.h.b16 %v982
    %v2512 = vunpack.c.l.b16 %v983
    %v2513 = vunpack.c.h.b16 %v983
    %v2514 = vunpack.c.l.b16 %v984
    %v2515 = vunpack.c.h.b16 %v984
    %v2516 = vunpack.c.l.b16 %v985
    %v2517 = vunpack.c.h.b16 %v985
    %v2518 = vunpack.c.l.b16 %v986
    %v2519 = vunpack.c.h.b16 %v986
    %v2520 = vunpack.c.l.b16 %v987
    %v2521 = vunpack.c.h.b16 %v987
    %v2522 = vunpack.c.l.b16 %v988
    %v2523 = vunpack.c.h.b16 %v988
    %v2524 = vunpack.c.l.b16 %v989
    %v2525 = vunpack.c.h.b16 %v989
    %v2526 = vunpack.c.l.b16 %v990
    %v2527 = vunpack.c.h.b16 %v990
    %v2528 = vunpack.c.l.b16 %v991
    %v2529 = vunpack.c.h.b16 %v991
    %v2530 = vunpack.c.l.b16 %v992
    %v2531 = vunpack.c.h.b16 %v992
    %v2532 = vunpack.c.l.b16 %v993
    %v2533 = vunpack.c.h.b16 %v993
    %v2534 = vunpack.c.l.b16 %v994
    %v2535 = vunpack.c.h.b16 %v994
    %v2536 = vunpack.c.l.b16 %v995
    %v2537 = vunpack.c.h.b16 %v995
    %v2538 = vunpack.c.l.b16 %v996
    %v2539 = vunpack.c.h.b16 %v996
    %v2540 = vunpack.c.l.b16 %v997
    %v2541 = vunpack.c.h.b16 %v997
    %v2542 = vunpack.c.l.b16 %v998
    %v2543 = vunpack.c.h.b16 %v998
    %v2544 = vunpack.c.l.b16 %v999
    %v2545 = vunpack.c.h.b16 %v999
    %v2546 = vunpack.c.l.b16 %v1000
    %v2547 = vunpack.c.h.b16 %v1000
    %v2548 = vunpack.c.l.b16 %v1001
    %v2549 = vunpack.c.h.b16 %v1001
    %v2550 = vunpack.c.l.b16 %v1002
    %v2551 = vunpack.c.h.b16 %v1002
    %v2552 = vunpack.c.l.b16 %v1003
    %v2553 = vunpack.c.h.b16 %v1003
    %v2554 = vunpack.c.l.b16 %v1004
    %v2555 = vunpack.c.h.b16 %v1004
    %v2556 = vunpack.c.l.b16 %v1005
    %v2557 = vunpack.c.h.b16 %v1005
    %v2558 = vunpack.c.l.b16 %v1006
    %v2559 = vunpack.c.h.b16 %v1006
    %v2560 = vunpack.c.l.b16 %v1007
    %v2561 = vunpack.c.h.b16 %v1007
    %v2562 = vunpack.c.l.b16 %v1008
    %v2563 = vunpack.c.h.b16 %v1008
    %v2564 = vunpack.c.l.b16 %v1009
    %v2565 = vunpack.c.h.b16 %v1009
    %v2566 = vunpack.c.l.b16 %v1010
    %v2567 = vunpack.c.h.b16 %v1010
    %v2568 = vunpack.c.l.b16 %v1011
    %v2569 = vunpack.c.h.b16 %v1011
    %v2570 = vunpack.c.l.b16 %v1012
    %v2571 = vunpack.c.h.b16 %v1012
    %v2572 = vunpack.c.l.b16 %v1013
    %v2573 = vunpack.c.h.b16 %v1013
    %v2574 = vunpack.c.l.b16 %v1014
    %v2575 = vunpack.c.h.b16 %v1014
    %v2576 = vunpack.c.l.b16 %v1015
    %v2577 = vunpack.c.h.b16 %v1015
    %v2578 = vunpack.c.l.b16 %v1016
    %v2579 = vunpack.c.h.b16 %v1016
    %v2580 = vunpack.c.l.b16 %v1017
    %v2581 = vunpack.c.h.b16 %v1017
    %v2582 = vunpack.c.l.b16 %v1018
    %v2583 = vunpack.c.h.b16 %v1018
    %v2584 = vunpack.c.l.b16 %v1019
    %v2585 = vunpack.c.h.b16 %v1019
    %v2586 = vunpack.c.l.b16 %v1020
    %v2587 = vunpack.c.h.b16 %v1020
    %v2588 = vunpack.c.l.b16 %v1021
    %v2589 = vunpack.c.h.b16 %v1021
    %v2590 = vunpack.c.l.b16 %v1022
    %v2591 = vunpack.c.h.b16 %v1022
    %v2592 = vunpack.c.l.b16 %v1023
    %v2593 = vunpack.c.h.b16 %v1023
    %v2594 = vunpack.c.l.b16 %v1024
    %v2595 = vunpack.c.h.b16 %v1024
    %v2596 = vunpack.c.l.b16 %v1025
    %v2597 = vunpack.c.h.b16 %v1025
    %v2598 = vunpack.c.l.b16 %v1026
    %v2599 = vunpack.c.h.b16 %v1026
    %v2600 = vunpack.c.l.b16 %v1027
    %v2601 = vunpack.c.h.b16 %v1027
    %v2602 = vunpack.c.l.b16 %v1028
    %v2603 = vunpack.c.h.b16 %v1028
    %v2604 = vunpack.c.l.b16 %v1029
    %v2605 = vunpack.c.h.b16 %v1029
    %v2606 = vunpack.c.l.b16 %v1030
    %v2607 = vunpack.c.h.b16 %v1030
    %v2608 = vunpack.c.l.b16 %v1031
    %v2609 = vunpack.c.h.b16 %v1031
    %v2610 = vpack.c.b16 %v1594, %v1586
    %v2611 = vpack.c.b16 %v1595, %v1587
    %v2612 = vpack.c.b16 %v1596, %v1588
    %v2613 = vpack.c.b16 %v1597, %v1589
    %v2614 = vpack.c.b16 %v1598, %v1590
    %v2615 = vpack.c.b16 %v1599, %v1591
    %v2616 = vpack.c.b16 %v1600, %v1592
    %v2617 = vpack.c.b16 %v1601, %v1593
    %v2618 = vpack.c.b16 %v1610, %v1602
    %v2619 = vpack.c.b16 %v1611, %v1603
    %v2620 = vpack.c.b16 %v1612, %v1604
    %v2621 = vpack.c.b16 %v1613, %v1605
    %v2622 = vpack.c.b16 %v1614, %v1606
    %v2623 = vpack.c.b16 %v1615, %v1607
    %v2624 = vpack.c.b16 %v1616, %v1608
    %v2625 = vpack.c.b16 %v1617, %v1609
    %v2626 = vpack.c.b16 %v1626, %v1618
    %v2627 = vpack.c.b16 %v1627, %v1619
    %v2628 = vpack.c.b16 %v1628, %v1620
    %v2629 = vpack.c.b16 %v1629, %v1621
    %v2630 = vpack.c.b16 %v1630, %v1622
    %v2631 = vpack.c.b16 %v1631, %v1623
    %v2632 = vpack.c.b16 %v1632, %v1624
    %v2633 = vpack.c.b16 %v1633, %v1625
    %v2634 = vpack.c.b16 %v1642, %v1634
    %v2635 = vpack.c.b16 %v1643, %v1635
    %v2636 = vpack.c.b16 %v1644, %v1636
    %v2637 = vpack.c.b16 %v1645, %v1637
    %v2638 = vpack.c.b16 %v1646, %v1638
    %v2639 = vpack.c.b16 %v1647, %v1639
    %v2640 = vpack.c.b16 %v1648, %v1640
    %v2641 = vpack.c.b16 %v1649, %v1641
    %v2642 = vpack.c.b16 %v1658, %v1650
    %v2643 = vpack.c.b16 %v1659, %v1651
    %v2644 = vpack.c.b16 %v1660, %v1652
    %v2645 = vpack.c.b16 %v1661, %v1653
    %v2646 = vpack.c.b16 %v1662, %v1654
    %v2647 = vpack.c.b16 %v1663, %v1655
    %v2648 = vpack.c.b16 %v1664, %v1656
    %v2649 = vpack.c.b16 %v1665, %v1657
    %v2650 = vpack.c.b16 %v1674, %v1666
    %v2651 = vpack.c.b16 %v1675, %v1667
    %v2652 = vpack.c.b16 %v1676, %v1668
    %v2653 = vpack.c.b16 %v1677, %v1669
    %v2654 = vpack.c.b16 %v1678, %v1670
    %v2655 = vpack.c.b16 %v1679, %v1671
    %v2656 = vpack.c.b16 %v1680, %v1672
    %v2657 = vpack.c.b16 %v1681, %v1673
    %v2658 = vpack.c.b16 %v1690, %v1682
    %v2659 = vpack.c.b16 %v1691, %v1683
    %v2660 = vpack.c.b16 %v1692, %v1684
    %v2661 = vpack.c.b16 %v1693, %v1685
    %v2662 = vpack.c.b16 %v1694, %v1686
    %v2663 = vpack.c.b16 %v1695, %v1687
    %v2664 = vpack.c.b16 %v1696, %v1688
    %v2665 = vpack.c.b16 %v1697, %v1689
    %v2666 = vpack.c.b16 %v1706, %v1698
    %v2667 = vpack.c.b16 %v1707, %v1699
    %v2668 = vpack.c.b16 %v1708, %v1700
    %v2669 = vpack.c.b16 %v1709, %v1701
    %v2670 = vpack.c.b16 %v1710, %v1702
    %v2671 = vpack.c.b16 %v1711, %v1703
    %v2672 = vpack.c.b16 %v1712, %v1704
    %v2673 = vpack.c.b16 %v1713, %v1705
    %v2674 = vpack.c.b16 %v1722, %v1714
    %v2675 = vpack.c.b16 %v1723, %v1715
    %v2676 = vpack.c.b16 %v1724, %v1716
    %v2677 = vpack.c.b16 %v1725, %v1717
    %v2678 = vpack.c.b16 %v1726, %v1718
    %v2679 = vpack.c.b16 %v1727, %v1719
    %v2680 = vpack.c.b16 %v1728, %v1720
    %v2681 = vpack.c.b16 %v1729, %v1721
    %v2682 = vpack.c.b16 %v1738, %v1730
    %v2683 = vpack.c.b16 %v1739, %v1731
    %v2684 = vpack.c.b16 %v1740, %v1732
    %v2685 = vpack.c.b16 %v1741, %v1733
    %v2686 = vpack.c.b16 %v1742, %v1734
    %v2687 = vpack.c.b16 %v1743, %v1735
    %v2688 = vpack.c.b16 %v1744, %v1736
    %v2689 = vpack.c.b16 %v1745, %v1737
    %v2690 = vpack.c.b16 %v1754, %v1746
    %v2691 = vpack.c.b16 %v1755, %v1747
    %v2692 = vpack.c.b16 %v1756, %v1748
    %v2693 = vpack.c.b16 %v1757, %v1749
    %v2694 = vpack.c.b16 %v1758, %v1750
    %v2695 = vpack.c.b16 %v1759, %v1751
    %v2696 = vpack.c.b16 %v1760, %v1752
    %v2697 = vpack.c.b16 %v1761, %v1753
    %v2698 = vpack.c.b16 %v1770, %v1762
    %v2699 = vpack.c.b16 %v1771, %v1763
    %v2700 = vpack.c.b16 %v1772, %v1764
    %v2701 = vpack.c.b16 %v1773, %v1765
    %v2702 = vpack.c.b16 %v1774, %v1766
    %v2703 = vpack.c.b16 %v1775, %v1767
    %v2704 = vpack.c.b16 %v1776, %v1768
    %v2705 = vpack.c.b16 %v1777, %v1769
    %v2706 = vpack.c.b16 %v1786, %v1778
    %v2707 = vpack.c.b16 %v1787, %v1779
    %v2708 = vpack.c.b16 %v1788, %v1780
    %v2709 = vpack.c.b16 %v1789, %v1781
    %v2710 = vpack.c.b16 %v1790, %v1782
    %v2711 = vpack.c.b16 %v1791, %v1783
    %v2712 = vpack.c.b16 %v1792, %v1784
    %v2713 = vpack.c.b16 %v1793, %v1785
    %v2714 = vpack.c.b16 %v1802, %v1794
    %v2715 = vpack.c.b16 %v1803, %v1795
    %v2716 = vpack.c.b16 %v1804, %v1796
    %v2717 = vpack.c.b16 %v1805, %v1797
    %v2718 = vpack.c.b16 %v1806, %v1798
    %v2719 = vpack.c.b16 %v1807, %v1799
    %v2720 = vpack.c.b16 %v1808, %v1800
    %v2721 = vpack.c.b16 %v1809, %v1801
    %v2722 = vpack.c.b16 %v1818, %v1810
    %v2723 = vpack.c.b16 %v1819, %v1811
    %v2724 = vpack.c.b16 %v1820, %v1812
    %v2725 = vpack.c.b16 %v1821, %v1813
    %v2726 = vpack.c.b16 %v1822, %v1814
    %v2727 = vpack.c.b16 %v1823, %v1815
    %v2728 = vpack.c.b16 %v1824, %v1816
    %v2729 = vpack.c.b16 %v1825, %v1817
    %v2730 = vpack.c.b16 %v1834, %v1826
    %v2731 = vpack.c.b16 %v1835, %v1827
    %v2732 = vpack.c.b16 %v1836, %v1828
    %v2733 = vpack.c.b16 %v1837, %v1829
    %v2734 = vpack.c.b16 %v1838, %v1830
    %v2735 = vpack.c.b16 %v1839, %v1831
    %v2736 = vpack.c.b16 %v1840, %v1832
    %v2737 = vpack.c.b16 %v1841, %v1833
    %v2738 = vpack.c.b16 %v1850, %v1842
    %v2739 = vpack.c.b16 %v1851, %v1843
    %v2740 = vpack.c.b16 %v1852, %v1844
    %v2741 = vpack.c.b16 %v1853, %v1845
    %v2742 = vpack.c.b16 %v1854, %v1846
    %v2743 = vpack.c.b16 %v1855, %v1847
    %v2744 = vpack.c.b16 %v1856, %v1848
    %v2745 = vpack.c.b16 %v1857, %v1849
    %v2746 = vpack.c.b16 %v1866, %v1858
    %v2747 = vpack.c.b16 %v1867, %v1859
    %v2748 = vpack.c.b16 %v1868, %v1860
    %v2749 = vpack.c.b16 %v1869, %v1861
    %v2750 = vpack.c.b16 %v1870, %v1862
    %v2751 = vpack.c.b16 %v1871, %v1863
    %v2752 = vpack.c.b16 %v1872, %v1864
    %v2753 = vpack.c.b16 %v1873, %v1865
    %v2754 = vpack.c.b16 %v1882, %v1874
    %v2755 = vpack.c.b16 %v1883, %v1875
    %v2756 = vpack.c.b16 %v1884, %v1876
    %v2757 = vpack.c.b16 %v1885, %v1877
    %v2758 = vpack.c.b16 %v1886, %v1878
    %v2759 = vpack.c.b16 %v1887, %v1879
    %v2760 = vpack.c.b16 %v1888, %v1880
    %v2761 = vpack.c.b16 %v1889, %v1881
    %v2762 = vpack.c.b16 %v1898, %v1890
    %v2763 = vpack.c.b16 %v1899, %v1891
    %v2764 = vpack.c.b16 %v1900, %v1892
    %v2765 = vpack.c.b16 %v1901, %v1893
    %v2766 = vpack.c.b16 %v1902, %v1894
    %v2767 = vpack.c.b16 %v1903, %v1895
    %v2768 = vpack.c.b16 %v1904, %v1896
    %v2769 = vpack.c.b16 %v1905, %v1897
    %v2770 = vpack.c.b16 %v1914, %v1906
    %v2771 = vpack.c.b16 %v1915, %v1907
    %v2772 = vpack.c.b16 %v1916, %v1908
    %v2773 = vpack.c.b16 %v1917, %v1909
    %v2774 = vpack.c.b16 %v1918, %v1910
    %v2775 = vpack.c.b16 %v1919, %v1911
    %v2776 = vpack.c.b16 %v1920, %v1912
    %v2777 = vpack.c.b16 %v1921, %v1913
    %v2778 = vpack.c.b16 %v1930, %v1922
    %v2779 = vpack.c.b16 %v1931, %v1923
    %v2780 = vpack.c.b16 %v1932, %v1924
    %v2781 = vpack.c.b16 %v1933, %v1925
    %v2782 = vpack.c.b16 %v1934, %v1926
    %v2783 = vpack.c.b16 %v1935, %v1927
    %v2784 = vpack.c.b16 %v1936, %v1928
    %v2785 = vpack.c.b16 %v1937, %v1929
    %v2786 = vpack.c.b16 %v1946, %v1938
    %v2787 = vpack.c.b16 %v1947, %v1939
    %v2788 = vpack.c.b16 %v1948, %v1940
    %v2789 = vpack.c.b16 %v1949, %v1941
    %v2790 = vpack.c.b16 %v1950, %v1942
    %v2791 = vpack.c.b16 %v1951, %v1943
    %v2792 = vpack.c.b16 %v1952, %v1944
    %v2793 = vpack.c.b16 %v1953, %v1945
    %v2794 = vpack.c.b16 %v1962, %v1954
    %v2795 = vpack.c.b16 %v1963, %v1955
    %v2796 = vpack.c.b16 %v1964, %v1956
    %v2797 = vpack.c.b16 %v1965, %v1957
    %v2798 = vpack.c.b16 %v1966, %v1958
    %v2799 = vpack.c.b16 %v1967, %v1959
    %v2800 = vpack.c.b16 %v1968, %v1960
    %v2801 = vpack.c.b16 %v1969, %v1961
    %v2802 = vpack.c.b16 %v1978, %v1970
    %v2803 = vpack.c.b16 %v1979, %v1971
    %v2804 = vpack.c.b16 %v1980, %v1972
    %v2805 = vpack.c.b16 %v1981, %v1973
    %v2806 = vpack.c.b16 %v1982, %v1974
    %v2807 = vpack.c.b16 %v1983, %v1975
    %v2808 = vpack.c.b16 %v1984, %v1976
    %v2809 = vpack.c.b16 %v1985, %v1977
    %v2810 = vpack.c.b16 %v1994, %v1986
    %v2811 = vpack.c.b16 %v1995, %v1987
    %v2812 = vpack.c.b16 %v1996, %v1988
    %v2813 = vpack.c.b16 %v1997, %v1989
    %v2814 = vpack.c.b16 %v1998, %v1990
    %v2815 = vpack.c.b16 %v1999, %v1991
    %v2816 = vpack.c.b16 %v2000, %v1992
    %v2817 = vpack.c.b16 %v2001, %v1993
    %v2818 = vpack.c.b16 %v2010, %v2002
    %v2819 = vpack.c.b16 %v2011, %v2003
    %v2820 = vpack.c.b16 %v2012, %v2004
    %v2821 = vpack.c.b16 %v2013, %v2005
    %v2822 = vpack.c.b16 %v2014, %v2006
    %v2823 = vpack.c.b16 %v2015, %v2007
    %v2824 = vpack.c.b16 %v2016, %v2008
    %v2825 = vpack.c.b16 %v2017, %v2009
    %v2826 = vpack.c.b16 %v2026, %v2018
    %v2827 = vpack.c.b16 %v2027, %v2019
    %v2828 = vpack.c.b16 %v2028, %v2020
    %v2829 = vpack.c.b16 %v2029, %v2021
    %v2830 = vpack.c.b16 %v2030, %v2022
    %v2831 = vpack.c.b16 %v2031, %v2023
    %v2832 = vpack.c.b16 %v2032, %v2024
    %v2833 = vpack.c.b16 %v2033, %v2025
    %v2834 = vpack.c.b16 %v2042, %v2034
    %v2835 = vpack.c.b16 %v2043, %v2035
    %v2836 = vpack.c.b16 %v2044, %v2036
    %v2837 = vpack.c.b16 %v2045, %v2037
    %v2838 = vpack.c.b16 %v2046, %v2038
    %v2839 = vpack.c.b16 %v2047, %v2039
    %v2840 = vpack.c.b16 %v2048, %v2040
    %v2841 = vpack.c.b16 %v2049, %v2041
    %v2842 = vpack.c.b16 %v2058, %v2050
    %v2843 = vpack.c.b16 %v2059, %v2051
    %v2844 = vpack.c.b16 %v2060, %v2052
    %v2845 = vpack.c.b16 %v2061, %v2053
    %v2846 = vpack.c.b16 %v2062, %v2054
    %v2847 = vpack.c.b16 %v2063, %v2055
    %v2848 = vpack.c.b16 %v2064, %v2056
    %v2849 = vpack.c.b16 %v2065, %v2057
    %v2850 = vpack.c.b16 %v2074, %v2066
    %v2851 = vpack.c.b16 %v2075, %v2067
    %v2852 = vpack.c.b16 %v2076, %v2068
    %v2853 = vpack.c.b16 %v2077, %v2069
    %v2854 = vpack.c.b16 %v2078, %v2070
    %v2855 = vpack.c.b16 %v2079, %v2071
    %v2856 = vpack.c.b16 %v2080, %v2072
    %v2857 = vpack.c.b16 %v2081, %v2073
    %v2858 = vpack.c.b16 %v2090, %v2082
    %v2859 = vpack.c.b16 %v2091, %v2083
    %v2860 = vpack.c.b16 %v2092, %v2084
    %v2861 = vpack.c.b16 %v2093, %v2085
    %v2862 = vpack.c.b16 %v2094, %v2086
    %v2863 = vpack.c.b16 %v2095, %v2087
    %v2864 = vpack.c.b16 %v2096, %v2088
    %v2865 = vpack.c.b16 %v2097, %v2089
    %v2866 = vpack.c.b16 %v2106, %v2098
    %v2867 = vpack.c.b16 %v2107, %v2099
    %v2868 = vpack.c.b16 %v2108, %v2100
    %v2869 = vpack.c.b16 %v2109, %v2101
    %v2870 = vpack.c.b16 %v2110, %v2102
    %v2871 = vpack.c.b16 %v2111, %v2103
    %v2872 = vpack.c.b16 %v2112, %v2104
    %v2873 = vpack.c.b16 %v2113, %v2105
    %v2874 = vpack.c.b16 %v2122, %v2114
    %v2875 = vpack.c.b16 %v2123, %v2115
    %v2876 = vpack.c.b16 %v2124, %v2116
    %v2877 = vpack.c.b16 %v2125, %v2117
    %v2878 = vpack.c.b16 %v2126, %v2118
    %v2879 = vpack.c.b16 %v2127, %v2119
    %v2880 = vpack.c.b16 %v2128, %v2120
    %v2881 = vpack.c.b16 %v2129, %v2121
    %v2882 = vpack.c.b16 %v2138, %v2130
    %v2883 = vpack.c.b16 %v2139, %v2131
    %v2884 = vpack.c.b16 %v2140, %v2132
    %v2885 = vpack.c.b16 %v2141, %v2133
    %v2886 = vpack.c.b16 %v2142, %v2134
    %v2887 = vpack.c.b16 %v2143, %v2135
    %v2888 = vpack.c.b16 %v2144, %v2136
    %v2889 = vpack.c.b16 %v2145, %v2137
    %v2890 = vpack.c.b16 %v2154, %v2146
    %v2891 = vpack.c.b16 %v2155, %v2147
    %v2892 = vpack.c.b16 %v2156, %v2148
    %v2893 = vpack.c.b16 %v2157, %v2149
    %v2894 = vpack.c.b16 %v2158, %v2150
    %v2895 = vpack.c.b16 %v2159, %v2151
    %v2896 = vpack.c.b16 %v2160, %v2152
    %v2897 = vpack.c.b16 %v2161, %v2153
    %v2898 = vpack.c.b16 %v2170, %v2162
    %v2899 = vpack.c.b16 %v2171, %v2163
    %v2900 = vpack.c.b16 %v2172, %v2164
    %v2901 = vpack.c.b16 %v2173, %v2165
    %v2902 = vpack.c.b16 %v2174, %v2166
    %v2903 = vpack.c.b16 %v2175, %v2167
    %v2904 = vpack.c.b16 %v2176, %v2168
    %v2905 = vpack.c.b16 %v2177, %v2169
    %v2906 = vpack.c.b16 %v2186, %v2178
    %v2907 = vpack.c.b16 %v2187, %v2179
    %v2908 = vpack.c.b16 %v2188, %v2180
    %v2909 = vpack.c.b16 %v2189, %v2181
    %v2910 = vpack.c.b16 %v2190, %v2182
    %v2911 = vpack.c.b16 %v2191, %v2183
    %v2912 = vpack.c.b16 %v2192, %v2184
    %v2913 = vpack.c.b16 %v2193, %v2185
    %v2914 = vpack.c.b16 %v2202, %v2194
    %v2915 = vpack.c.b16 %v2203, %v2195
    %v2916 = vpack.c.b16 %v2204, %v2196
    %v2917 = vpack.c.b16 %v2205, %v2197
    %v2918 = vpack.c.b16 %v2206, %v2198
    %v2919 = vpack.c.b16 %v2207, %v2199
    %v2920 = vpack.c.b16 %v2208, %v2200
    %v2921 = vpack.c.b16 %v2209, %v2201
    %v2922 = vpack.c.b16 %v2218, %v2210
    %v2923 = vpack.c.b16 %v2219, %v2211
    %v2924 = vpack.c.b16 %v2220, %v2212
    %v2925 = vpack.c.b16 %v2221, %v2213
    %v2926 = vpack.c.b16 %v2222, %v2214
    %v2927 = vpack.c.b16 %v2223, %v2215
    %v2928 = vpack.c.b16 %v2224, %v2216
    %v2929 = vpack.c.b16 %v2225, %v2217
    %v2930 = vpack.c.b16 %v2234, %v2226
    %v2931 = vpack.c.b16 %v2235, %v2227
    %v2932 = vpack.c.b16 %v2236, %v2228
    %v2933 = vpack.c.b16 %v2237, %v2229
    %v2934 = vpack.c.b16 %v2238, %v2230
    %v2935 = vpack.c.b16 %v2239, %v2231
    %v2936 = vpack.c.b16 %v2240, %v2232
    %v2937 = vpack.c.b16 %v2241, %v2233
    %v2938 = vpack.c.b16 %v2250, %v2242
    %v2939 = vpack.c.b16 %v2251, %v2243
    %v2940 = vpack.c.b16 %v2252, %v2244
    %v2941 = vpack.c.b16 %v2253, %v2245
    %v2942 = vpack.c.b16 %v2254, %v2246
    %v2943 = vpack.c.b16 %v2255, %v2247
    %v2944 = vpack.c.b16 %v2256, %v2248
    %v2945 = vpack.c.b16 %v2257, %v2249
    %v2946 = vpack.c.b16 %v2266, %v2258
    %v2947 = vpack.c.b16 %v2267, %v2259
    %v2948 = vpack.c.b16 %v2268, %v2260
    %v2949 = vpack.c.b16 %v2269, %v2261
    %v2950 = vpack.c.b16 %v2270, %v2262
    %v2951 = vpack.c.b16 %v2271, %v2263
    %v2952 = vpack.c.b16 %v2272, %v2264
    %v2953 = vpack.c.b16 %v2273, %v2265
    %v2954 = vpack.c.b16 %v2282, %v2274
    %v2955 = vpack.c.b16 %v2283, %v2275
    %v2956 = vpack.c.b16 %v2284, %v2276
    %v2957 = vpack.c.b16 %v2285, %v2277
    %v2958 = vpack.c.b16 %v2286, %v2278
    %v2959 = vpack.c.b16 %v2287, %v2279
    %v2960 = vpack.c.b16 %v2288, %v2280
    %v2961 = vpack.c.b16 %v2289, %v2281
    %v2962 = vpack.c.b16 %v2298, %v2290
    %v2963 = vpack.c.b16 %v2299, %v2291
    %v2964 = vpack.c.b16 %v2300, %v2292
    %v2965 = vpack.c.b16 %v2301, %v2293
    %v2966 = vpack.c.b16 %v2302, %v2294
    %v2967 = vpack.c.b16 %v2303, %v2295
    %v2968 = vpack.c.b16 %v2304, %v2296
    %v2969 = vpack.c.b16 %v2305, %v2297
    %v2970 = vpack.c.b16 %v2314, %v2306
    %v2971 = vpack.c.b16 %v2315, %v2307
    %v2972 = vpack.c.b16 %v2316, %v2308
    %v2973 = vpack.c.b16 %v2317, %v2309
    %v2974 = vpack.c.b16 %v2318, %v2310
    %v2975 = vpack.c.b16 %v2319, %v2311
    %v2976 = vpack.c.b16 %v2320, %v2312
    %v2977 = vpack.c.b16 %v2321, %v2313
    %v2978 = vpack.c.b16 %v2330, %v2322
    %v2979 = vpack.c.b16 %v2331, %v2323
    %v2980 = vpack.c.b16 %v2332, %v2324
    %v2981 = vpack.c.b16 %v2333, %v2325
    %v2982 = vpack.c.b16 %v2334, %v2326
    %v2983 = vpack.c.b16 %v2335, %v2327
    %v2984 = vpack.c.b16 %v2336, %v2328
    %v2985 = vpack.c.b16 %v2337, %v2329
    %v2986 = vpack.c.b16 %v2346, %v2338
    %v2987 = vpack.c.b16 %v2347, %v2339
    %v2988 = vpack.c.b16 %v2348, %v2340
    %v2989 = vpack.c.b16 %v2349, %v2341
    %v2990 = vpack.c.b16 %v2350, %v2342
    %v2991 = vpack.c.b16 %v2351, %v2343
    %v2992 = vpack.c.b16 %v2352, %v2344
    %v2993 = vpack.c.b16 %v2353, %v2345
    %v2994 = vpack.c.b16 %v2362, %v2354
    %v2995 = vpack.c.b16 %v2363, %v2355
    %v2996 = vpack.c.b16 %v2364, %v2356
    %v2997 = vpack.c.b16 %v2365, %v2357
    %v2998 = vpack.c.b16 %v2366, %v2358
    %v2999 = vpack.c.b16 %v2367, %v2359
    %v3000 = vpack.c.b16 %v2368, %v2360
    %v3001 = vpack.c.b16 %v2369, %v2361
    %v3002 = vpack.c.b16 %v2378, %v2370
    %v3003 = vpack.c.b16 %v2379, %v2371
    %v3004 = vpack.c.b16 %v2380, %v2372
    %v3005 = vpack.c.b16 %v2381, %v2373
    %v3006 = vpack.c.b16 %v2382, %v2374
    %v3007 = vpack.c.b16 %v2383, %v2375
    %v3008 = vpack.c.b16 %v2384, %v2376
    %v3009 = vpack.c.b16 %v2385, %v2377
    %v3010 = vpack.c.b16 %v2394, %v2386
    %v3011 = vpack.c.b16 %v2395, %v2387
    %v3012 = vpack.c.b16 %v2396, %v2388
    %v3013 = vpack.c.b16 %v2397, %v2389
    %v3014 = vpack.c.b16 %v2398, %v2390
    %v3015 = vpack.c.b16 %v2399, %v2391
    %v3016 = vpack.c.b16 %v2400, %v2392
    %v3017 = vpack.c.b16 %v2401, %v2393
    %v3018 = vpack.c.b16 %v2410, %v2402
    %v3019 = vpack.c.b16 %v2411, %v2403
    %v3020 = vpack.c.b16 %v2412, %v2404
    %v3021 = vpack.c.b16 %v2413, %v2405
    %v3022 = vpack.c.b16 %v2414, %v2406
    %v3023 = vpack.c.b16 %v2415, %v2407
    %v3024 = vpack.c.b16 %v2416, %v2408
    %v3025 = vpack.c.b16 %v2417, %v2409
    %v3026 = vpack.c.b16 %v2426, %v2418
    %v3027 = vpack.c.b16 %v2427, %v2419
    %v3028 = vpack.c.b16 %v2428, %v2420
    %v3029 = vpack.c.b16 %v2429, %v2421
    %v3030 = vpack.c.b16 %v2430, %v2422
    %v3031 = vpack.c.b16 %v2431, %v2423
    %v3032 = vpack.c.b16 %v2432, %v2424
    %v3033 = vpack.c.b16 %v2433, %v2425
    %v3034 = vpack.c.b16 %v2442, %v2434
    %v3035 = vpack.c.b16 %v2443, %v2435
    %v3036 = vpack.c.b16 %v2444, %v2436
    %v3037 = vpack.c.b16 %v2445, %v2437
    %v3038 = vpack.c.b16 %v2446, %v2438
    %v3039 = vpack.c.b16 %v2447, %v2439
    %v3040 = vpack.c.b16 %v2448, %v2440
    %v3041 = vpack.c.b16 %v2449, %v2441
    %v3042 = vpack.c.b16 %v2458, %v2450
    %v3043 = vpack.c.b16 %v2459, %v2451
    %v3044 = vpack.c.b16 %v2460, %v2452
    %v3045 = vpack.c.b16 %v2461, %v2453
    %v3046 = vpack.c.b16 %v2462, %v2454
    %v3047 = vpack.c.b16 %v2463, %v2455
    %v3048 = vpack.c.b16 %v2464, %v2456
    %v3049 = vpack.c.b16 %v2465, %v2457
    %v3050 = vpack.c.b16 %v2474, %v2466
    %v3051 = vpack.c.b16 %v2475, %v2467
    %v3052 = vpack.c.b16 %v2476, %v2468
    %v3053 = vpack.c.b16 %v2477, %v2469
    %v3054 = vpack.c.b16 %v2478, %v2470
    %v3055 = vpack.c.b16 %v2479, %v2471
    %v3056 = vpack.c.b16 %v2480, %v2472
    %v3057 = vpack.c.b16 %v2481, %v2473
    %v3058 = vpack.c.b16 %v2490, %v2482
    %v3059 = vpack.c.b16 %v2491, %v2483
    %v3060 = vpack.c.b16 %v2492, %v2484
    %v3061 = vpack.c.b16 %v2493, %v2485
    %v3062 = vpack.c.b16 %v2494, %v2486
    %v3063 = vpack.c.b16 %v2495, %v2487
    %v3064 = vpack.c.b16 %v2496, %v2488
    %v3065 = vpack.c.b16 %v2497, %v2489
    %v3066 = vpack.c.b16 %v2506, %v2498
    %v3067 = vpack.c.b16 %v2507, %v2499
    %v3068 = vpack.c.b16 %v2508, %v2500
    %v3069 = vpack.c.b16 %v2509, %v2501
    %v3070 = vpack.c.b16 %v2510, %v2502
    %v3071 = vpack.c.b16 %v2511, %v2503
    %v3072 = vpack.c.b16 %v2512, %v2504
    %v3073 = vpack.c.b16 %v2513, %v2505
    %v3074 = vpack.c.b16 %v2522, %v2514
    %v3075 = vpack.c.b16 %v2523, %v2515
    %v3076 = vpack.c.b16 %v2524, %v2516
    %v3077 = vpack.c.b16 %v2525, %v2517
    %v3078 = vpack.c.b16 %v2526, %v2518
    %v3079 = vpack.c.b16 %v2527, %v2519
    %v3080 = vpack.c.b16 %v2528, %v2520
    %v3081 = vpack.c.b16 %v2529, %v2521
    %v3082 = vpack.c.b16 %v2538, %v2530
    %v3083 = vpack.c.b16 %v2539, %v2531
    %v3084 = vpack.c.b16 %v2540, %v2532
    %v3085 = vpack.c.b16 %v2541, %v2533
    %v3086 = vpack.c.b16 %v2542, %v2534
    %v3087 = vpack.c.b16 %v2543, %v2535
    %v3088 = vpack.c.b16 %v2544, %v2536
    %v3089 = vpack.c.b16 %v2545, %v2537
    %v3090 = vpack.c.b16 %v2554, %v2546
    %v3091 = vpack.c.b16 %v2555, %v2547
    %v3092 = vpack.c.b16 %v2556, %v2548
    %v3093 = vpack.c.b16 %v2557, %v2549
    %v3094 = vpack.c.b16 %v2558, %v2550
    %v3095 = vpack.c.b16 %v2559, %v2551
    %v3096 = vpack.c.b16 %v2560, %v2552
    %v3097 = vpack.c.b16 %v2561, %v2553
    %v3098 = vpack.c.b16 %v2570, %v2562
    %v3099 = vpack.c.b16 %v2571, %v2563
    %v3100 = vpack.c.b16 %v2572, %v2564
    %v3101 = vpack.c.b16 %v2573, %v2565
    %v3102 = vpack.c.b16 %v2574, %v2566
    %v3103 = vpack.c.b16 %v2575, %v2567
    %v3104 = vpack.c.b16 %v2576, %v2568
    %v3105 = vpack.c.b16 %v2577, %v2569
    %v3106 = vpack.c.b16 %v2586, %v2578
    %v3107 = vpack.c.b16 %v2587, %v2579
    %v3108 = vpack.c.b16 %v2588, %v2580
    %v3109 = vpack.c.b16 %v2589, %v2581
    %v3110 = vpack.c.b16 %v2590, %v2582
    %v3111 = vpack.c.b16 %v2591, %v2583
    %v3112 = vpack.c.b16 %v2592, %v2584
    %v3113 = vpack.c.b16 %v2593, %v2585
    %v3114 = vpack.c.b16 %v2602, %v2594
    %v3115 = vpack.c.b16 %v2603, %v2595
    %v3116 = vpack.c.b16 %v2604, %v2596
    %v3117 = vpack.c.b16 %v2605, %v2597
    %v3118 = vpack.c.b16 %v2606, %v2598
    %v3119 = vpack.c.b16 %v2607, %v2599
    %v3120 = vpack.c.b16 %v2608, %v2600
    %v3121 = vpack.c.b16 %v2609, %v2601
    %3634 = vmatprep.subr.bf16.mxu0 %v2667
    %3635 = vmatpush1.bf16.msra.mxu0 %v2666
    %3636 = vmatprep.subr.bf16.mxu0 %v2659
    %3637 = vmatpush1.bf16.msra.mxu0 %v2658
    %3638 = vmatprep.subr.bf16.mxu0 %v2651
    %3639 = vmatpush1.bf16.msra.mxu0 %v2650
    %3640 = vmatprep.subr.bf16.mxu0 %v2643
    %3641 = vmatpush1.bf16.msra.mxu0 %v2642
    %3642 = vmatprep.subr.bf16.mxu0 %v2635
    %3643 = vmatpush1.bf16.msra.mxu0 %v2634
    %3644 = vmatprep.subr.bf16.mxu0 %v2627
    %3645 = vmatpush1.bf16.msra.mxu0 %v2626
    %3646 = vmatprep.subr.bf16.mxu0 %v2619
    %3647 = vmatpush1.bf16.msra.mxu0 %v2618
    %3648 = vmatprep.subr.bf16.mxu0 %v2611
    %3649 = vmatpush1.bf16.msra.mxu0 %v2610
    %3650 = vmatprep.subr.bf16.mxu0 %v2731
    %3651 = vmatpush2.bf16.msra.mxu0 %v2730
    %3652 = vmatprep.subr.bf16.mxu0 %v2723
    %3653 = vmatpush2.bf16.msra.mxu0 %v2722
    %3654 = vmatprep.subr.bf16.mxu0 %v2715
    %3655 = vmatpush2.bf16.msra.mxu0 %v2714
    %3656 = vmatprep.subr.bf16.mxu0 %v2707
    %3657 = vmatpush2.bf16.msra.mxu0 %v2706
    %3658 = vmatprep.subr.bf16.mxu0 %v2699
    %3659 = vmatpush2.bf16.msra.mxu0 %v2698
    %3660 = vmatprep.subr.bf16.mxu0 %v2691
    %3661 = vmatpush2.bf16.msra.mxu0 %v2690
    %3662 = vmatprep.subr.bf16.mxu0 %v2683
    %3663 = vmatpush2.bf16.msra.mxu0 %v2682
    %3664 = vmatprep.subr.bf16.mxu0 %v2675
    %3665 = vmatpush2.bf16.msra.mxu0 %v2674
    %3666 = vmatprep.mubr.bf16.mxu0 %v513
    %3667 = vmatmul.mubr.bf16.gmra.mxu0 %v512
    %v3668 = vpop.f32.mrf.mxu0
    %v3669 = vadd.f32 %v1037, %v3668
    %v3670 = vpop.f32.mrf.mxu0
    %v3671 = vadd.f32 %v1041, %v3670
    %v3672 = vpop.f32.mrf.mxu0
    %v3673 = vadd.f32 %v1037, %v3672
    %v3674 = vpop.f32.mrf.mxu0
    %v3675 = vadd.f32 %v1041, %v3674
    %3676 = vdwg.mxu0
    %3677 = vmatprep.subr.bf16.mxu0 %v2795
    %3678 = vmatpush1.bf16.msra.mxu0 %v2794
    %3679 = vmatprep.subr.bf16.mxu0 %v2787
    %3680 = vmatpush1.bf16.msra.mxu0 %v2786
    %3681 = vmatprep.subr.bf16.mxu0 %v2779
    %3682 = vmatpush1.bf16.msra.mxu0 %v2778
    %3683 = vmatprep.subr.bf16.mxu0 %v2771
    %3684 = vmatpush1.bf16.msra.mxu0 %v2770
    %3685 = vmatprep.subr.bf16.mxu0 %v2763
    %3686 = vmatpush1.bf16.msra.mxu0 %v2762
    %3687 = vmatprep.subr.bf16.mxu0 %v2755
    %3688 = vmatpush1.bf16.msra.mxu0 %v2754
    %3689 = vmatprep.subr.bf16.mxu0 %v2747
    %3690 = vmatpush1.bf16.msra.mxu0 %v2746
    %3691 = vmatprep.subr.bf16.mxu0 %v2739
    %3692 = vmatpush1.bf16.msra.mxu0 %v2738
    %3693 = vmatprep.subr.bf16.mxu0 %v2859
    %3694 = vmatpush2.bf16.msra.mxu0 %v2858
    %3695 = vmatprep.subr.bf16.mxu0 %v2851
    %3696 = vmatpush2.bf16.msra.mxu0 %v2850
    %3697 = vmatprep.subr.bf16.mxu0 %v2843
    %3698 = vmatpush2.bf16.msra.mxu0 %v2842
    %3699 = vmatprep.subr.bf16.mxu0 %v2835
    %3700 = vmatpush2.bf16.msra.mxu0 %v2834
    %3701 = vmatprep.subr.bf16.mxu0 %v2827
    %3702 = vmatpush2.bf16.msra.mxu0 %v2826
    %3703 = vmatprep.subr.bf16.mxu0 %v2819
    %3704 = vmatpush2.bf16.msra.mxu0 %v2818
    %3705 = vmatprep.subr.bf16.mxu0 %v2811
    %3706 = vmatpush2.bf16.msra.mxu0 %v2810
    %3707 = vmatprep.subr.bf16.mxu0 %v2803
    %3708 = vmatpush2.bf16.msra.mxu0 %v2802
    %3709 = vmatprep.mubr.bf16.mxu0 %v515
    %3710 = vmatmul.mubr.bf16.gmra.mxu0 %v514
    %v3711 = vpop.f32.mrf.mxu0
    %v3712 = vadd.f32 %v3669, %v3711
    %v3713 = vpop.f32.mrf.mxu0
    %v3714 = vadd.f32 %v3671, %v3713
    %v3715 = vpop.f32.mrf.mxu0
    %v3716 = vadd.f32 %v3673, %v3715
    %v3717 = vpop.f32.mrf.mxu0
    %v3718 = vadd.f32 %v3675, %v3717
    %3719 = vdwg.mxu0
    %3720 = vmatprep.subr.bf16.mxu0 %v2923
    %3721 = vmatpush1.bf16.msra.mxu0 %v2922
    %3722 = vmatprep.subr.bf16.mxu0 %v2915
    %3723 = vmatpush1.bf16.msra.mxu0 %v2914
    %3724 = vmatprep.subr.bf16.mxu0 %v2907
    %3725 = vmatpush1.bf16.msra.mxu0 %v2906
    %3726 = vmatprep.subr.bf16.mxu0 %v2899
    %3727 = vmatpush1.bf16.msra.mxu0 %v2898
    %3728 = vmatprep.subr.bf16.mxu0 %v2891
    %3729 = vmatpush1.bf16.msra.mxu0 %v2890
    %3730 = vmatprep.subr.bf16.mxu0 %v2883
    %3731 = vmatpush1.bf16.msra.mxu0 %v2882
    %3732 = vmatprep.subr.bf16.mxu0 %v2875
    %3733 = vmatpush1.bf16.msra.mxu0 %v2874
    %3734 = vmatprep.subr.bf16.mxu0 %v2867
    %3735 = vmatpush1.bf16.msra.mxu0 %v2866
    %3736 = vmatprep.subr.bf16.mxu0 %v2987
    %3737 = vmatpush2.bf16.msra.mxu0 %v2986
    %3738 = vmatprep.subr.bf16.mxu0 %v2979
    %3739 = vmatpush2.bf16.msra.mxu0 %v2978
    %3740 = vmatprep.subr.bf16.mxu0 %v2971
    %3741 = vmatpush2.bf16.msra.mxu0 %v2970
    %3742 = vmatprep.subr.bf16.mxu0 %v2963
    %3743 = vmatpush2.bf16.msra.mxu0 %v2962
    %3744 = vmatprep.subr.bf16.mxu0 %v2955
    %3745 = vmatpush2.bf16.msra.mxu0 %v2954
    %3746 = vmatprep.subr.bf16.mxu0 %v2947
    %3747 = vmatpush2.bf16.msra.mxu0 %v2946
    %3748 = vmatprep.subr.bf16.mxu0 %v2939
    %3749 = vmatpush2.bf16.msra.mxu0 %v2938
    %3750 = vmatprep.subr.bf16.mxu0 %v2931
    %3751 = vmatpush2.bf16.msra.mxu0 %v2930
    %3752 = vmatprep.mubr.bf16.mxu0 %v517
    %3753 = vmatmul.mubr.bf16.gmra.mxu0 %v516
    %v3754 = vpop.f32.mrf.mxu0
    %v3755 = vadd.f32 %v3712, %v3754
    %v3756 = vpop.f32.mrf.mxu0
    %v3757 = vadd.f32 %v3714, %v3756
    %v3758 = vpop.f32.mrf.mxu0
    %v3759 = vadd.f32 %v3716, %v3758
    %v3760 = vpop.f32.mrf.mxu0
    %v3761 = vadd.f32 %v3718, %v3760
    %3762 = vdwg.mxu0
    %3763 = vmatprep.subr.bf16.mxu0 %v3051
    %3764 = vmatpush1.bf16.msra.mxu0 %v3050
    %3765 = vmatprep.subr.bf16.mxu0 %v3043
    %3766 = vmatpush1.bf16.msra.mxu0 %v3042
    %3767 = vmatprep.subr.bf16.mxu0 %v3035
    %3768 = vmatpush1.bf16.msra.mxu0 %v3034
    %3769 = vmatprep.subr.bf16.mxu0 %v3027
    %3770 = vmatpush1.bf16.msra.mxu0 %v3026
    %3771 = vmatprep.subr.bf16.mxu0 %v3019
    %3772 = vmatpush1.bf16.msra.mxu0 %v3018
    %3773 = vmatprep.subr.bf16.mxu0 %v3011
    %3774 = vmatpush1.bf16.msra.mxu0 %v3010
    %3775 = vmatprep.subr.bf16.mxu0 %v3003
    %3776 = vmatpush1.bf16.msra.mxu0 %v3002
    %3777 = vmatprep.subr.bf16.mxu0 %v2995
    %3778 = vmatpush1.bf16.msra.mxu0 %v2994
    %3779 = vmatprep.subr.bf16.mxu0 %v3115
    %3780 = vmatpush2.bf16.msra.mxu0 %v3114
    %3781 = vmatprep.subr.bf16.mxu0 %v3107
    %3782 = vmatpush2.bf16.msra.mxu0 %v3106
    %3783 = vmatprep.subr.bf16.mxu0 %v3099
    %3784 = vmatpush2.bf16.msra.mxu0 %v3098
    %3785 = vmatprep.subr.bf16.mxu0 %v3091
    %3786 = vmatpush2.bf16.msra.mxu0 %v3090
    %3787 = vmatprep.subr.bf16.mxu0 %v3083
    %3788 = vmatpush2.bf16.msra.mxu0 %v3082
    %3789 = vmatprep.subr.bf16.mxu0 %v3075
    %3790 = vmatpush2.bf16.msra.mxu0 %v3074
    %3791 = vmatprep.subr.bf16.mxu0 %v3067
    %3792 = vmatpush2.bf16.msra.mxu0 %v3066
    %3793 = vmatprep.subr.bf16.mxu0 %v3059
    %3794 = vmatpush2.bf16.msra.mxu0 %v3058
    %3795 = vmatprep.mubr.bf16.mxu0 %v519
    %3796 = vmatmul.mubr.bf16.gmra.mxu0 %v518
    %v3797 = vpop.f32.mrf.mxu0
    %v3798 = vadd.f32 %v3755, %v3797
    %v3799 = vpop.f32.mrf.mxu0
    %v3800 = vadd.f32 %v3757, %v3799
    %v3801 = vpop.f32.mrf.mxu0
    %v3802 = vadd.f32 %v3759, %v3801
    %v3803 = vpop.f32.mrf.mxu0
    %v3804 = vadd.f32 %v3761, %v3803
    %3805 = vdwg.mxu0
    %3806 = vmatprep.subr.bf16.mxu0 %v2669
    %3807 = vmatpush1.bf16.msra.mxu0 %v2668
    %3808 = vmatprep.subr.bf16.mxu0 %v2661
    %3809 = vmatpush1.bf16.msra.mxu0 %v2660
    %3810 = vmatprep.subr.bf16.mxu0 %v2653
    %3811 = vmatpush1.bf16.msra.mxu0 %v2652
    %3812 = vmatprep.subr.bf16.mxu0 %v2645
    %3813 = vmatpush1.bf16.msra.mxu0 %v2644
    %3814 = vmatprep.subr.bf16.mxu0 %v2637
    %3815 = vmatpush1.bf16.msra.mxu0 %v2636
    %3816 = vmatprep.subr.bf16.mxu0 %v2629
    %3817 = vmatpush1.bf16.msra.mxu0 %v2628
    %3818 = vmatprep.subr.bf16.mxu0 %v2621
    %3819 = vmatpush1.bf16.msra.mxu0 %v2620
    %3820 = vmatprep.subr.bf16.mxu0 %v2613
    %3821 = vmatpush1.bf16.msra.mxu0 %v2612
    %3822 = vmatprep.subr.bf16.mxu0 %v2733
    %3823 = vmatpush2.bf16.msra.mxu0 %v2732
    %3824 = vmatprep.subr.bf16.mxu0 %v2725
    %3825 = vmatpush2.bf16.msra.mxu0 %v2724
    %3826 = vmatprep.subr.bf16.mxu0 %v2717
    %3827 = vmatpush2.bf16.msra.mxu0 %v2716
    %3828 = vmatprep.subr.bf16.mxu0 %v2709
    %3829 = vmatpush2.bf16.msra.mxu0 %v2708
    %3830 = vmatprep.subr.bf16.mxu0 %v2701
    %3831 = vmatpush2.bf16.msra.mxu0 %v2700
    %3832 = vmatprep.subr.bf16.mxu0 %v2693
    %3833 = vmatpush2.bf16.msra.mxu0 %v2692
    %3834 = vmatprep.subr.bf16.mxu0 %v2685
    %3835 = vmatpush2.bf16.msra.mxu0 %v2684
    %3836 = vmatprep.subr.bf16.mxu0 %v2677
    %3837 = vmatpush2.bf16.msra.mxu0 %v2676
    %3838 = vmatprep.mubr.bf16.mxu0 %v513
    %3839 = vmatmul.mubr.bf16.gmra.mxu0 %v512
    %v3840 = vpop.f32.mrf.mxu0
    %v3841 = vadd.f32 %v1045, %v3840
    %v3842 = vpop.f32.mrf.mxu0
    %v3843 = vadd.f32 %v1049, %v3842
    %v3844 = vpop.f32.mrf.mxu0
    %v3845 = vadd.f32 %v1045, %v3844
    %v3846 = vpop.f32.mrf.mxu0
    %v3847 = vadd.f32 %v1049, %v3846
    %3848 = vdwg.mxu0
    %3849 = vmatprep.subr.bf16.mxu0 %v2797
    %3850 = vmatpush1.bf16.msra.mxu0 %v2796
    %3851 = vmatprep.subr.bf16.mxu0 %v2789
    %3852 = vmatpush1.bf16.msra.mxu0 %v2788
    %3853 = vmatprep.subr.bf16.mxu0 %v2781
    %3854 = vmatpush1.bf16.msra.mxu0 %v2780
    %3855 = vmatprep.subr.bf16.mxu0 %v2773
    %3856 = vmatpush1.bf16.msra.mxu0 %v2772
    %3857 = vmatprep.subr.bf16.mxu0 %v2765
    %3858 = vmatpush1.bf16.msra.mxu0 %v2764
    %3859 = vmatprep.subr.bf16.mxu0 %v2757
    %3860 = vmatpush1.bf16.msra.mxu0 %v2756
    %3861 = vmatprep.subr.bf16.mxu0 %v2749
    %3862 = vmatpush1.bf16.msra.mxu0 %v2748
    %3863 = vmatprep.subr.bf16.mxu0 %v2741
    %3864 = vmatpush1.bf16.msra.mxu0 %v2740
    %3865 = vmatprep.subr.bf16.mxu0 %v2861
    %3866 = vmatpush2.bf16.msra.mxu0 %v2860
    %3867 = vmatprep.subr.bf16.mxu0 %v2853
    %3868 = vmatpush2.bf16.msra.mxu0 %v2852
    %3869 = vmatprep.subr.bf16.mxu0 %v2845
    %3870 = vmatpush2.bf16.msra.mxu0 %v2844
    %3871 = vmatprep.subr.bf16.mxu0 %v2837
    %3872 = vmatpush2.bf16.msra.mxu0 %v2836
    %3873 = vmatprep.subr.bf16.mxu0 %v2829
    %3874 = vmatpush2.bf16.msra.mxu0 %v2828
    %3875 = vmatprep.subr.bf16.mxu0 %v2821
    %3876 = vmatpush2.bf16.msra.mxu0 %v2820
    %3877 = vmatprep.subr.bf16.mxu0 %v2813
    %3878 = vmatpush2.bf16.msra.mxu0 %v2812
    %3879 = vmatprep.subr.bf16.mxu0 %v2805
    %3880 = vmatpush2.bf16.msra.mxu0 %v2804
    %3881 = vmatprep.mubr.bf16.mxu0 %v515
    %3882 = vmatmul.mubr.bf16.gmra.mxu0 %v514
    %v3883 = vpop.f32.mrf.mxu0
    %v3884 = vadd.f32 %v3841, %v3883
    %v3885 = vpop.f32.mrf.mxu0
    %v3886 = vadd.f32 %v3843, %v3885
    %v3887 = vpop.f32.mrf.mxu0
    %v3888 = vadd.f32 %v3845, %v3887
    %v3889 = vpop.f32.mrf.mxu0
    %v3890 = vadd.f32 %v3847, %v3889
    %3891 = vdwg.mxu0
    %3892 = vmatprep.subr.bf16.mxu0 %v2925
    %3893 = vmatpush1.bf16.msra.mxu0 %v2924
    %3894 = vmatprep.subr.bf16.mxu0 %v2917
    %3895 = vmatpush1.bf16.msra.mxu0 %v2916
    %3896 = vmatprep.subr.bf16.mxu0 %v2909
    %3897 = vmatpush1.bf16.msra.mxu0 %v2908
    %3898 = vmatprep.subr.bf16.mxu0 %v2901
    %3899 = vmatpush1.bf16.msra.mxu0 %v2900
    %3900 = vmatprep.subr.bf16.mxu0 %v2893
    %3901 = vmatpush1.bf16.msra.mxu0 %v2892
    %3902 = vmatprep.subr.bf16.mxu0 %v2885
    %3903 = vmatpush1.bf16.msra.mxu0 %v2884
    %3904 = vmatprep.subr.bf16.mxu0 %v2877
    %3905 = vmatpush1.bf16.msra.mxu0 %v2876
    %3906 = vmatprep.subr.bf16.mxu0 %v2869
    %3907 = vmatpush1.bf16.msra.mxu0 %v2868
    %3908 = vmatprep.subr.bf16.mxu0 %v2989
    %3909 = vmatpush2.bf16.msra.mxu0 %v2988
    %3910 = vmatprep.subr.bf16.mxu0 %v2981
    %3911 = vmatpush2.bf16.msra.mxu0 %v2980
    %3912 = vmatprep.subr.bf16.mxu0 %v2973
    %3913 = vmatpush2.bf16.msra.mxu0 %v2972
    %3914 = vmatprep.subr.bf16.mxu0 %v2965
    %3915 = vmatpush2.bf16.msra.mxu0 %v2964
    %3916 = vmatprep.subr.bf16.mxu0 %v2957
    %3917 = vmatpush2.bf16.msra.mxu0 %v2956
    %3918 = vmatprep.subr.bf16.mxu0 %v2949
    %3919 = vmatpush2.bf16.msra.mxu0 %v2948
    %3920 = vmatprep.subr.bf16.mxu0 %v2941
    %3921 = vmatpush2.bf16.msra.mxu0 %v2940
    %3922 = vmatprep.subr.bf16.mxu0 %v2933
    %3923 = vmatpush2.bf16.msra.mxu0 %v2932
    %3924 = vmatprep.mubr.bf16.mxu0 %v517
    %3925 = vmatmul.mubr.bf16.gmra.mxu0 %v516
    %v3926 = vpop.f32.mrf.mxu0
    %v3927 = vadd.f32 %v3884, %v3926
    %v3928 = vpop.f32.mrf.mxu0
    %v3929 = vadd.f32 %v3886, %v3928
    %v3930 = vpop.f32.mrf.mxu0
    %v3931 = vadd.f32 %v3888, %v3930
    %v3932 = vpop.f32.mrf.mxu0
    %v3933 = vadd.f32 %v3890, %v3932
    %3934 = vdwg.mxu0
    %3935 = vmatprep.subr.bf16.mxu0 %v3053
    %3936 = vmatpush1.bf16.msra.mxu0 %v3052
    %3937 = vmatprep.subr.bf16.mxu0 %v3045
    %3938 = vmatpush1.bf16.msra.mxu0 %v3044
    %3939 = vmatprep.subr.bf16.mxu0 %v3037
    %3940 = vmatpush1.bf16.msra.mxu0 %v3036
    %3941 = vmatprep.subr.bf16.mxu0 %v3029
    %3942 = vmatpush1.bf16.msra.mxu0 %v3028
    %3943 = vmatprep.subr.bf16.mxu0 %v3021
    %3944 = vmatpush1.bf16.msra.mxu0 %v3020
    %3945 = vmatprep.subr.bf16.mxu0 %v3013
    %3946 = vmatpush1.bf16.msra.mxu0 %v3012
    %3947 = vmatprep.subr.bf16.mxu0 %v3005
    %3948 = vmatpush1.bf16.msra.mxu0 %v3004
    %3949 = vmatprep.subr.bf16.mxu0 %v2997
    %3950 = vmatpush1.bf16.msra.mxu0 %v2996
    %3951 = vmatprep.subr.bf16.mxu0 %v3117
    %3952 = vmatpush2.bf16.msra.mxu0 %v3116
    %3953 = vmatprep.subr.bf16.mxu0 %v3109
    %3954 = vmatpush2.bf16.msra.mxu0 %v3108
    %3955 = vmatprep.subr.bf16.mxu0 %v3101
    %3956 = vmatpush2.bf16.msra.mxu0 %v3100
    %3957 = vmatprep.subr.bf16.mxu0 %v3093
    %3958 = vmatpush2.bf16.msra.mxu0 %v3092
    %3959 = vmatprep.subr.bf16.mxu0 %v3085
    %3960 = vmatpush2.bf16.msra.mxu0 %v3084
    %3961 = vmatprep.subr.bf16.mxu0 %v3077
    %3962 = vmatpush2.bf16.msra.mxu0 %v3076
    %3963 = vmatprep.subr.bf16.mxu0 %v3069
    %3964 = vmatpush2.bf16.msra.mxu0 %v3068
    %3965 = vmatprep.subr.bf16.mxu0 %v3061
    %3966 = vmatpush2.bf16.msra.mxu0 %v3060
    %3967 = vmatprep.mubr.bf16.mxu0 %v519
    %3968 = vmatmul.mubr.bf16.gmra.mxu0 %v518
    %v3969 = vpop.f32.mrf.mxu0
    %v3970 = vadd.f32 %v3927, %v3969
    %v3971 = vpop.f32.mrf.mxu0
    %v3972 = vadd.f32 %v3929, %v3971
    %v3973 = vpop.f32.mrf.mxu0
    %v3974 = vadd.f32 %v3931, %v3973
    %v3975 = vpop.f32.mrf.mxu0
    %v3976 = vadd.f32 %v3933, %v3975
    %3977 = vdwg.mxu0
    %3978 = vmatprep.subr.bf16.mxu0 %v2671
    %3979 = vmatpush1.bf16.msra.mxu0 %v2670
    %3980 = vmatprep.subr.bf16.mxu0 %v2663
    %3981 = vmatpush1.bf16.msra.mxu0 %v2662
    %3982 = vmatprep.subr.bf16.mxu0 %v2655
    %3983 = vmatpush1.bf16.msra.mxu0 %v2654
    %3984 = vmatprep.subr.bf16.mxu0 %v2647
    %3985 = vmatpush1.bf16.msra.mxu0 %v2646
    %3986 = vmatprep.subr.bf16.mxu0 %v2639
    %3987 = vmatpush1.bf16.msra.mxu0 %v2638
    %3988 = vmatprep.subr.bf16.mxu0 %v2631
    %3989 = vmatpush1.bf16.msra.mxu0 %v2630
    %3990 = vmatprep.subr.bf16.mxu0 %v2623
    %3991 = vmatpush1.bf16.msra.mxu0 %v2622
    %3992 = vmatprep.subr.bf16.mxu0 %v2615
    %3993 = vmatpush1.bf16.msra.mxu0 %v2614
    %3994 = vmatprep.subr.bf16.mxu0 %v2735
    %3995 = vmatpush2.bf16.msra.mxu0 %v2734
    %3996 = vmatprep.subr.bf16.mxu0 %v2727
    %3997 = vmatpush2.bf16.msra.mxu0 %v2726
    %3998 = vmatprep.subr.bf16.mxu0 %v2719
    %3999 = vmatpush2.bf16.msra.mxu0 %v2718
    %4000 = vmatprep.subr.bf16.mxu0 %v2711
    %4001 = vmatpush2.bf16.msra.mxu0 %v2710
    %4002 = vmatprep.subr.bf16.mxu0 %v2703
    %4003 = vmatpush2.bf16.msra.mxu0 %v2702
    %4004 = vmatprep.subr.bf16.mxu0 %v2695
    %4005 = vmatpush2.bf16.msra.mxu0 %v2694
    %4006 = vmatprep.subr.bf16.mxu0 %v2687
    %4007 = vmatpush2.bf16.msra.mxu0 %v2686
    %4008 = vmatprep.subr.bf16.mxu0 %v2679
    %4009 = vmatpush2.bf16.msra.mxu0 %v2678
    %4010 = vmatprep.mubr.bf16.mxu0 %v513
    %4011 = vmatmul.mubr.bf16.gmra.mxu0 %v512
    %v4012 = vpop.f32.mrf.mxu0
    %v4013 = vadd.f32 %v1053, %v4012
    %v4014 = vpop.f32.mrf.mxu0
    %v4015 = vadd.f32 %v1057, %v4014
    %v4016 = vpop.f32.mrf.mxu0
    %v4017 = vadd.f32 %v1053, %v4016
    %v4018 = vpop.f32.mrf.mxu0
    %v4019 = vadd.f32 %v1057, %v4018
    %4020 = vdwg.mxu0
    %4021 = vmatprep.subr.bf16.mxu0 %v2799
    %4022 = vmatpush1.bf16.msra.mxu0 %v2798
    %4023 = vmatprep.subr.bf16.mxu0 %v2791
    %4024 = vmatpush1.bf16.msra.mxu0 %v2790
    %4025 = vmatprep.subr.bf16.mxu0 %v2783
    %4026 = vmatpush1.bf16.msra.mxu0 %v2782
    %4027 = vmatprep.subr.bf16.mxu0 %v2775
    %4028 = vmatpush1.bf16.msra.mxu0 %v2774
    %4029 = vmatprep.subr.bf16.mxu0 %v2767
    %4030 = vmatpush1.bf16.msra.mxu0 %v2766
    %4031 = vmatprep.subr.bf16.mxu0 %v2759
    %4032 = vmatpush1.bf16.msra.mxu0 %v2758
    %4033 = vmatprep.subr.bf16.mxu0 %v2751
    %4034 = vmatpush1.bf16.msra.mxu0 %v2750
    %4035 = vmatprep.subr.bf16.mxu0 %v2743
    %4036 = vmatpush1.bf16.msra.mxu0 %v2742
    %4037 = vmatprep.subr.bf16.mxu0 %v2863
    %4038 = vmatpush2.bf16.msra.mxu0 %v2862
    %4039 = vmatprep.subr.bf16.mxu0 %v2855
    %4040 = vmatpush2.bf16.msra.mxu0 %v2854
    %4041 = vmatprep.subr.bf16.mxu0 %v2847
    %4042 = vmatpush2.bf16.msra.mxu0 %v2846
    %4043 = vmatprep.subr.bf16.mxu0 %v2839
    %4044 = vmatpush2.bf16.msra.mxu0 %v2838
    %4045 = vmatprep.subr.bf16.mxu0 %v2831
    %4046 = vmatpush2.bf16.msra.mxu0 %v2830
    %4047 = vmatprep.subr.bf16.mxu0 %v2823
    %4048 = vmatpush2.bf16.msra.mxu0 %v2822
    %4049 = vmatprep.subr.bf16.mxu0 %v2815
    %4050 = vmatpush2.bf16.msra.mxu0 %v2814
    %4051 = vmatprep.subr.bf16.mxu0 %v2807
    %4052 = vmatpush2.bf16.msra.mxu0 %v2806
    %4053 = vmatprep.mubr.bf16.mxu0 %v515
    %4054 = vmatmul.mubr.bf16.gmra.mxu0 %v514
    %v4055 = vpop.f32.mrf.mxu0
    %v4056 = vadd.f32 %v4013, %v4055
    %v4057 = vpop.f32.mrf.mxu0
    %v4058 = vadd.f32 %v4015, %v4057
    %v4059 = vpop.f32.mrf.mxu0
    %v4060 = vadd.f32 %v4017, %v4059
    %v4061 = vpop.f32.mrf.mxu0
    %v4062 = vadd.f32 %v4019, %v4061
    %4063 = vdwg.mxu0
    %4064 = vmatprep.subr.bf16.mxu0 %v2927
    %4065 = vmatpush1.bf16.msra.mxu0 %v2926
    %4066 = vmatprep.subr.bf16.mxu0 %v2919
    %4067 = vmatpush1.bf16.msra.mxu0 %v2918
    %4068 = vmatprep.subr.bf16.mxu0 %v2911
    %4069 = vmatpush1.bf16.msra.mxu0 %v2910
    %4070 = vmatprep.subr.bf16.mxu0 %v2903
    %4071 = vmatpush1.bf16.msra.mxu0 %v2902
    %4072 = vmatprep.subr.bf16.mxu0 %v2895
    %4073 = vmatpush1.bf16.msra.mxu0 %v2894
    %4074 = vmatprep.subr.bf16.mxu0 %v2887
    %4075 = vmatpush1.bf16.msra.mxu0 %v2886
    %4076 = vmatprep.subr.bf16.mxu0 %v2879
    %4077 = vmatpush1.bf16.msra.mxu0 %v2878
    %4078 = vmatprep.subr.bf16.mxu0 %v2871
    %4079 = vmatpush1.bf16.msra.mxu0 %v2870
    %4080 = vmatprep.subr.bf16.mxu0 %v2991
    %4081 = vmatpush2.bf16.msra.mxu0 %v2990
    %4082 = vmatprep.subr.bf16.mxu0 %v2983
    %4083 = vmatpush2.bf16.msra.mxu0 %v2982
    %4084 = vmatprep.subr.bf16.mxu0 %v2975
    %4085 = vmatpush2.bf16.msra.mxu0 %v2974
    %4086 = vmatprep.subr.bf16.mxu0 %v2967
    %4087 = vmatpush2.bf16.msra.mxu0 %v2966
    %4088 = vmatprep.subr.bf16.mxu0 %v2959
    %4089 = vmatpush2.bf16.msra.mxu0 %v2958
    %4090 = vmatprep.subr.bf16.mxu0 %v2951
    %4091 = vmatpush2.bf16.msra.mxu0 %v2950
    %4092 = vmatprep.subr.bf16.mxu0 %v2943
    %4093 = vmatpush2.bf16.msra.mxu0 %v2942
    %4094 = vmatprep.subr.bf16.mxu0 %v2935
    %4095 = vmatpush2.bf16.msra.mxu0 %v2934
    %4096 = vmatprep.mubr.bf16.mxu0 %v517
    %4097 = vmatmul.mubr.bf16.gmra.mxu0 %v516
    %v4098 = vpop.f32.mrf.mxu0
    %v4099 = vadd.f32 %v4056, %v4098
    %v4100 = vpop.f32.mrf.mxu0
    %v4101 = vadd.f32 %v4058, %v4100
    %v4102 = vpop.f32.mrf.mxu0
    %v4103 = vadd.f32 %v4060, %v4102
    %v4104 = vpop.f32.mrf.mxu0
    %v4105 = vadd.f32 %v4062, %v4104
    %4106 = vdwg.mxu0
    %4107 = vmatprep.subr.bf16.mxu0 %v3055
    %4108 = vmatpush1.bf16.msra.mxu0 %v3054
    %4109 = vmatprep.subr.bf16.mxu0 %v3047
    %4110 = vmatpush1.bf16.msra.mxu0 %v3046
    %4111 = vmatprep.subr.bf16.mxu0 %v3039
    %4112 = vmatpush1.bf16.msra.mxu0 %v3038
    %4113 = vmatprep.subr.bf16.mxu0 %v3031
    %4114 = vmatpush1.bf16.msra.mxu0 %v3030
    %4115 = vmatprep.subr.bf16.mxu0 %v3023
    %4116 = vmatpush1.bf16.msra.mxu0 %v3022
    %4117 = vmatprep.subr.bf16.mxu0 %v3015
    %4118 = vmatpush1.bf16.msra.mxu0 %v3014
    %4119 = vmatprep.subr.bf16.mxu0 %v3007
    %4120 = vmatpush1.bf16.msra.mxu0 %v3006
    %4121 = vmatprep.subr.bf16.mxu0 %v2999
    %4122 = vmatpush1.bf16.msra.mxu0 %v2998
    %4123 = vmatprep.subr.bf16.mxu0 %v3119
    %4124 = vmatpush2.bf16.msra.mxu0 %v3118
    %4125 = vmatprep.subr.bf16.mxu0 %v3111
    %4126 = vmatpush2.bf16.msra.mxu0 %v3110
    %4127 = vmatprep.subr.bf16.mxu0 %v3103
    %4128 = vmatpush2.bf16.msra.mxu0 %v3102
    %4129 = vmatprep.subr.bf16.mxu0 %v3095
    %4130 = vmatpush2.bf16.msra.mxu0 %v3094
    %4131 = vmatprep.subr.bf16.mxu0 %v3087
    %4132 = vmatpush2.bf16.msra.mxu0 %v3086
    %4133 = vmatprep.subr.bf16.mxu0 %v3079
    %4134 = vmatpush2.bf16.msra.mxu0 %v3078
    %4135 = vmatprep.subr.bf16.mxu0 %v3071
    %4136 = vmatpush2.bf16.msra.mxu0 %v3070
    %4137 = vmatprep.subr.bf16.mxu0 %v3063
    %4138 = vmatpush2.bf16.msra.mxu0 %v3062
    %4139 = vmatprep.mubr.bf16.mxu0 %v519
    %4140 = vmatmul.mubr.bf16.gmra.mxu0 %v518
    %v4141 = vpop.f32.mrf.mxu0
    %v4142 = vadd.f32 %v4099, %v4141
    %v4143 = vpop.f32.mrf.mxu0
    %v4144 = vadd.f32 %v4101, %v4143
    %v4145 = vpop.f32.mrf.mxu0
    %v4146 = vadd.f32 %v4103, %v4145
    %v4147 = vpop.f32.mrf.mxu0
    %v4148 = vadd.f32 %v4105, %v4147
    %4149 = vdwg.mxu0
    %4150 = vmatprep.subr.bf16.mxu0 %v2673
    %4151 = vmatpush1.bf16.msra.mxu0 %v2672
    %4152 = vmatprep.subr.bf16.mxu0 %v2665
    %4153 = vmatpush1.bf16.msra.mxu0 %v2664
    %4154 = vmatprep.subr.bf16.mxu0 %v2657
    %4155 = vmatpush1.bf16.msra.mxu0 %v2656
    %4156 = vmatprep.subr.bf16.mxu0 %v2649
    %4157 = vmatpush1.bf16.msra.mxu0 %v2648
    %4158 = vmatprep.subr.bf16.mxu0 %v2641
    %4159 = vmatpush1.bf16.msra.mxu0 %v2640
    %4160 = vmatprep.subr.bf16.mxu0 %v2633
    %4161 = vmatpush1.bf16.msra.mxu0 %v2632
    %4162 = vmatprep.subr.bf16.mxu0 %v2625
    %4163 = vmatpush1.bf16.msra.mxu0 %v2624
    %4164 = vmatprep.subr.bf16.mxu0 %v2617
    %4165 = vmatpush1.bf16.msra.mxu0 %v2616
    %4166 = vmatprep.subr.bf16.mxu0 %v2737
    %4167 = vmatpush2.bf16.msra.mxu0 %v2736
    %4168 = vmatprep.subr.bf16.mxu0 %v2729
    %4169 = vmatpush2.bf16.msra.mxu0 %v2728
    %4170 = vmatprep.subr.bf16.mxu0 %v2721
    %4171 = vmatpush2.bf16.msra.mxu0 %v2720
    %4172 = vmatprep.subr.bf16.mxu0 %v2713
    %4173 = vmatpush2.bf16.msra.mxu0 %v2712
    %4174 = vmatprep.subr.bf16.mxu0 %v2705
    %4175 = vmatpush2.bf16.msra.mxu0 %v2704
    %4176 = vmatprep.subr.bf16.mxu0 %v2697
    %4177 = vmatpush2.bf16.msra.mxu0 %v2696
    %4178 = vmatprep.subr.bf16.mxu0 %v2689
    %4179 = vmatpush2.bf16.msra.mxu0 %v2688
    %4180 = vmatprep.subr.bf16.mxu0 %v2681
    %4181 = vmatpush2.bf16.msra.mxu0 %v2680
    %4182 = vmatprep.mubr.bf16.mxu0 %v513
    %4183 = vmatmul.mubr.bf16.gmra.mxu0 %v512
    %v4184 = vpop.f32.mrf.mxu0
    %v4185 = vadd.f32 %v1061, %v4184
    %v4186 = vpop.f32.mrf.mxu0
    %v4187 = vadd.f32 %v1065, %v4186
    %v4188 = vpop.f32.mrf.mxu0
    %v4189 = vadd.f32 %v1061, %v4188
    %v4190 = vpop.f32.mrf.mxu0
    %v4191 = vadd.f32 %v1065, %v4190
    %4192 = vdwg.mxu0
    %4193 = vmatprep.subr.bf16.mxu0 %v2801
    %4194 = vmatpush1.bf16.msra.mxu0 %v2800
    %4195 = vmatprep.subr.bf16.mxu0 %v2793
    %4196 = vmatpush1.bf16.msra.mxu0 %v2792
    %4197 = vmatprep.subr.bf16.mxu0 %v2785
    %4198 = vmatpush1.bf16.msra.mxu0 %v2784
    %4199 = vmatprep.subr.bf16.mxu0 %v2777
    %4200 = vmatpush1.bf16.msra.mxu0 %v2776
    %4201 = vmatprep.subr.bf16.mxu0 %v2769
    %4202 = vmatpush1.bf16.msra.mxu0 %v2768
    %4203 = vmatprep.subr.bf16.mxu0 %v2761
    %4204 = vmatpush1.bf16.msra.mxu0 %v2760
    %4205 = vmatprep.subr.bf16.mxu0 %v2753
    %4206 = vmatpush1.bf16.msra.mxu0 %v2752
    %4207 = vmatprep.subr.bf16.mxu0 %v2745
    %4208 = vmatpush1.bf16.msra.mxu0 %v2744
    %4209 = vmatprep.subr.bf16.mxu0 %v2865
    %4210 = vmatpush2.bf16.msra.mxu0 %v2864
    %4211 = vmatprep.subr.bf16.mxu0 %v2857
    %4212 = vmatpush2.bf16.msra.mxu0 %v2856
    %4213 = vmatprep.subr.bf16.mxu0 %v2849
    %4214 = vmatpush2.bf16.msra.mxu0 %v2848
    %4215 = vmatprep.subr.bf16.mxu0 %v2841
    %4216 = vmatpush2.bf16.msra.mxu0 %v2840
    %4217 = vmatprep.subr.bf16.mxu0 %v2833
    %4218 = vmatpush2.bf16.msra.mxu0 %v2832
    %4219 = vmatprep.subr.bf16.mxu0 %v2825
    %4220 = vmatpush2.bf16.msra.mxu0 %v2824
    %4221 = vmatprep.subr.bf16.mxu0 %v2817
    %4222 = vmatpush2.bf16.msra.mxu0 %v2816
    %4223 = vmatprep.subr.bf16.mxu0 %v2809
    %4224 = vmatpush2.bf16.msra.mxu0 %v2808
    %4225 = vmatprep.mubr.bf16.mxu0 %v515
    %4226 = vmatmul.mubr.bf16.gmra.mxu0 %v514
    %v4227 = vpop.f32.mrf.mxu0
    %v4228 = vadd.f32 %v4185, %v4227
    %v4229 = vpop.f32.mrf.mxu0
    %v4230 = vadd.f32 %v4187, %v4229
    %v4231 = vpop.f32.mrf.mxu0
    %v4232 = vadd.f32 %v4189, %v4231
    %v4233 = vpop.f32.mrf.mxu0
    %v4234 = vadd.f32 %v4191, %v4233
    %4235 = vdwg.mxu0
    %4236 = vmatprep.subr.bf16.mxu0 %v2929
    %4237 = vmatpush1.bf16.msra.mxu0 %v2928
    %4238 = vmatprep.subr.bf16.mxu0 %v2921
    %4239 = vmatpush1.bf16.msra.mxu0 %v2920
    %4240 = vmatprep.subr.bf16.mxu0 %v2913
    %4241 = vmatpush1.bf16.msra.mxu0 %v2912
    %4242 = vmatprep.subr.bf16.mxu0 %v2905
    %4243 = vmatpush1.bf16.msra.mxu0 %v2904
    %4244 = vmatprep.subr.bf16.mxu0 %v2897
    %4245 = vmatpush1.bf16.msra.mxu0 %v2896
    %4246 = vmatprep.subr.bf16.mxu0 %v2889
    %4247 = vmatpush1.bf16.msra.mxu0 %v2888
    %4248 = vmatprep.subr.bf16.mxu0 %v2881
    %4249 = vmatpush1.bf16.msra.mxu0 %v2880
    %4250 = vmatprep.subr.bf16.mxu0 %v2873
    %4251 = vmatpush1.bf16.msra.mxu0 %v2872
    %4252 = vmatprep.subr.bf16.mxu0 %v2993
    %4253 = vmatpush2.bf16.msra.mxu0 %v2992
    %4254 = vmatprep.subr.bf16.mxu0 %v2985
    %4255 = vmatpush2.bf16.msra.mxu0 %v2984
    %4256 = vmatprep.subr.bf16.mxu0 %v2977
    %4257 = vmatpush2.bf16.msra.mxu0 %v2976
    %4258 = vmatprep.subr.bf16.mxu0 %v2969
    %4259 = vmatpush2.bf16.msra.mxu0 %v2968
    %4260 = vmatprep.subr.bf16.mxu0 %v2961
    %4261 = vmatpush2.bf16.msra.mxu0 %v2960
    %4262 = vmatprep.subr.bf16.mxu0 %v2953
    %4263 = vmatpush2.bf16.msra.mxu0 %v2952
    %4264 = vmatprep.subr.bf16.mxu0 %v2945
    %4265 = vmatpush2.bf16.msra.mxu0 %v2944
    %4266 = vmatprep.subr.bf16.mxu0 %v2937
    %4267 = vmatpush2.bf16.msra.mxu0 %v2936
    %4268 = vmatprep.mubr.bf16.mxu0 %v517
    %4269 = vmatmul.mubr.bf16.gmra.mxu0 %v516
    %v4270 = vpop.f32.mrf.mxu0
    %v4271 = vadd.f32 %v4228, %v4270
    %v4272 = vpop.f32.mrf.mxu0
    %v4273 = vadd.f32 %v4230, %v4272
    %v4274 = vpop.f32.mrf.mxu0
    %v4275 = vadd.f32 %v4232, %v4274
    %v4276 = vpop.f32.mrf.mxu0
    %v4277 = vadd.f32 %v4234, %v4276
    %4278 = vdwg.mxu0
    %4279 = vmatprep.subr.bf16.mxu0 %v3057
    %4280 = vmatpush1.bf16.msra.mxu0 %v3056
    %4281 = vmatprep.subr.bf16.mxu0 %v3049
    %4282 = vmatpush1.bf16.msra.mxu0 %v3048
    %4283 = vmatprep.subr.bf16.mxu0 %v3041
    %4284 = vmatpush1.bf16.msra.mxu0 %v3040
    %4285 = vmatprep.subr.bf16.mxu0 %v3033
    %4286 = vmatpush1.bf16.msra.mxu0 %v3032
    %4287 = vmatprep.subr.bf16.mxu0 %v3025
    %4288 = vmatpush1.bf16.msra.mxu0 %v3024
    %4289 = vmatprep.subr.bf16.mxu0 %v3017
    %4290 = vmatpush1.bf16.msra.mxu0 %v3016
    %4291 = vmatprep.subr.bf16.mxu0 %v3009
    %4292 = vmatpush1.bf16.msra.mxu0 %v3008
    %4293 = vmatprep.subr.bf16.mxu0 %v3001
    %4294 = vmatpush1.bf16.msra.mxu0 %v3000
    %4295 = vmatprep.subr.bf16.mxu0 %v3121
    %4296 = vmatpush2.bf16.msra.mxu0 %v3120
    %4297 = vmatprep.subr.bf16.mxu0 %v3113
    %4298 = vmatpush2.bf16.msra.mxu0 %v3112
    %4299 = vmatprep.subr.bf16.mxu0 %v3105
    %4300 = vmatpush2.bf16.msra.mxu0 %v3104
    %4301 = vmatprep.subr.bf16.mxu0 %v3097
    %4302 = vmatpush2.bf16.msra.mxu0 %v3096
    %4303 = vmatprep.subr.bf16.mxu0 %v3089
    %4304 = vmatpush2.bf16.msra.mxu0 %v3088
    %4305 = vmatprep.subr.bf16.mxu0 %v3081
    %4306 = vmatpush2.bf16.msra.mxu0 %v3080
    %4307 = vmatprep.subr.bf16.mxu0 %v3073
    %4308 = vmatpush2.bf16.msra.mxu0 %v3072
    %4309 = vmatprep.subr.bf16.mxu0 %v3065
    %4310 = vmatpush2.bf16.msra.mxu0 %v3064
    %4311 = vmatprep.mubr.bf16.mxu0 %v519
    %4312 = vmatmul.mubr.bf16.gmra.mxu0 %v518
    %v4313 = vpop.f32.mrf.mxu0
    %v4314 = vadd.f32 %v4271, %v4313
    %v4315 = vpop.f32.mrf.mxu0
    %v4316 = vadd.f32 %v4273, %v4315
    %v4317 = vpop.f32.mrf.mxu0
    %v4318 = vadd.f32 %v4275, %v4317
    %v4319 = vpop.f32.mrf.mxu0
    %v4320 = vadd.f32 %v4277, %v4319
    %4321 = vdwg.mxu0
    %v4322 = vmax.f32 %v3798, 0.0
    %v4323 = vmax.f32 %v3800, 0.0
    %v4324 = vmax.f32 %v3970, 0.0
    %v4325 = vmax.f32 %v3972, 0.0
    %v4326 = vmax.f32 %v4142, 0.0
    %v4327 = vmax.f32 %v4144, 0.0
    %v4328 = vmax.f32 %v4314, 0.0
    %v4329 = vmax.f32 %v4316, 0.0
    %v4330 = vmax.f32 %v3802, 0.0
    %v4331 = vmax.f32 %v3804, 0.0
    %v4332 = vmax.f32 %v3974, 0.0
    %v4333 = vmax.f32 %v3976, 0.0
    %v4334 = vmax.f32 %v4146, 0.0
    %v4335 = vmax.f32 %v4148, 0.0
    %v4336 = vmax.f32 %v4318, 0.0
    %v4337 = vmax.f32 %v4320, 0.0
    %v4338 = vpack.c.bf16 %v4330, %v4322
    %v4339 = vpack.c.bf16 %v4331, %v4323
    %v4340 = vpack.c.bf16 %v4332, %v4324
    %v4341 = vpack.c.bf16 %v4333, %v4325
    %v4342 = vpack.c.bf16 %v4334, %v4326
    %v4343 = vpack.c.bf16 %v4335, %v4327
    %v4344 = vpack.c.bf16 %v4336, %v4328
    %v4345 = vpack.c.bf16 %v4337, %v4329
    %v4346 = vld [vmem:[#allocation11] sm:$0xf]
    %v4347 = vld [vmem:[#allocation11 + $0x4] sm:$0xf]
    %v4348 = vld [vmem:[#allocation11 + $0x8] sm:$0xf]
    %v4349 = vld [vmem:[#allocation11 + $0xc] sm:$0xf]
    %v4350 = vld [vmem:[#allocation11 + $0x10] sm:$0xf]
    %v4351 = vld [vmem:[#allocation11 + $0x14] sm:$0xf]
    %v4352 = vld [vmem:[#allocation11 + $0x18] sm:$0xf]
    %v4353 = vld [vmem:[#allocation11 + $0x1c] sm:$0xf]
    %v4354 = vld [vmem:[#allocation11 + $0x20] sm:$0xf]
    %v4355 = vld [vmem:[#allocation11 + $0x24] sm:$0xf]
    %v4356 = vld [vmem:[#allocation11 + $0x28] sm:$0xf]
    %v4357 = vld [vmem:[#allocation11 + $0x2c] sm:$0xf]
    %v4358 = vld [vmem:[#allocation11 + $0x30] sm:$0xf]
    %v4359 = vld [vmem:[#allocation11 + $0x34] sm:$0xf]
    %v4360 = vld [vmem:[#allocation11 + $0x38] sm:$0xf]
    %v4361 = vld [vmem:[#allocation11 + $0x3c] sm:$0xf]
    %v4362 = vld [vmem:[#allocation11 + $0x40] sm:$0xf]
    %v4363 = vld [vmem:[#allocation11 + $0x44] sm:$0xf]
    %v4364 = vld [vmem:[#allocation11 + $0x48] sm:$0xf]
    %v4365 = vld [vmem:[#allocation11 + $0x4c] sm:$0xf]
    %v4366 = vld [vmem:[#allocation11 + $0x50] sm:$0xf]
    %v4367 = vld [vmem:[#allocation11 + $0x54] sm:$0xf]
    %v4368 = vld [vmem:[#allocation11 + $0x58] sm:$0xf]
    %v4369 = vld [vmem:[#allocation11 + $0x5c] sm:$0xf]
    %v4370 = vld [vmem:[#allocation11 + $0x60] sm:$0xf]
    %v4371 = vld [vmem:[#allocation11 + $0x64] sm:$0xf]
    %v4372 = vld [vmem:[#allocation11 + $0x68] sm:$0xf]
    %v4373 = vld [vmem:[#allocation11 + $0x6c] sm:$0xf]
    %v4374 = vld [vmem:[#allocation11 + $0x70] sm:$0xf]
    %v4375 = vld [vmem:[#allocation11 + $0x74] sm:$0xf]
    %v4376 = vld [vmem:[#allocation11 + $0x78] sm:$0xf]
    %v4377 = vld [vmem:[#allocation11 + $0x7c] sm:$0xf]
    %v4378 = vld [vmem:[#allocation11 + $0x80] sm:$0xf]
    %v4379 = vld [vmem:[#allocation11 + $0x84] sm:$0xf]
    %v4380 = vld [vmem:[#allocation11 + $0x88] sm:$0xf]
    %v4381 = vld [vmem:[#allocation11 + $0x8c] sm:$0xf]
    %v4382 = vld [vmem:[#allocation11 + $0x90] sm:$0xf]
    %v4383 = vld [vmem:[#allocation11 + $0x94] sm:$0xf]
    %v4384 = vld [vmem:[#allocation11 + $0x98] sm:$0xf]
    %v4385 = vld [vmem:[#allocation11 + $0x9c] sm:$0xf]
    %v4386 = vld [vmem:[#allocation11 + $0xa0] sm:$0xf]
    %v4387 = vld [vmem:[#allocation11 + $0xa4] sm:$0xf]
    %v4388 = vld [vmem:[#allocation11 + $0xa8] sm:$0xf]
    %v4389 = vld [vmem:[#allocation11 + $0xac] sm:$0xf]
    %v4390 = vld [vmem:[#allocation11 + $0xb0] sm:$0xf]
    %v4391 = vld [vmem:[#allocation11 + $0xb4] sm:$0xf]
    %v4392 = vld [vmem:[#allocation11 + $0xb8] sm:$0xf]
    %v4393 = vld [vmem:[#allocation11 + $0xbc] sm:$0xf]
    %v4394 = vld [vmem:[#allocation11 + $0xc0] sm:$0xf]
    %v4395 = vld [vmem:[#allocation11 + $0xc4] sm:$0xf]
    %v4396 = vld [vmem:[#allocation11 + $0xc8] sm:$0xf]
    %v4397 = vld [vmem:[#allocation11 + $0xcc] sm:$0xf]
    %v4398 = vld [vmem:[#allocation11 + $0xd0] sm:$0xf]
    %v4399 = vld [vmem:[#allocation11 + $0xd4] sm:$0xf]
    %v4400 = vld [vmem:[#allocation11 + $0xd8] sm:$0xf]
    %v4401 = vld [vmem:[#allocation11 + $0xdc] sm:$0xf]
    %v4402 = vld [vmem:[#allocation11 + $0xe0] sm:$0xf]
    %v4403 = vld [vmem:[#allocation11 + $0xe4] sm:$0xf]
    %v4404 = vld [vmem:[#allocation11 + $0xe8] sm:$0xf]
    %v4405 = vld [vmem:[#allocation11 + $0xec] sm:$0xf]
    %v4406 = vld [vmem:[#allocation11 + $0xf0] sm:$0xf]
    %v4407 = vld [vmem:[#allocation11 + $0xf4] sm:$0xf]
    %v4408 = vld [vmem:[#allocation11 + $0xf8] sm:$0xf]
    %v4409 = vld [vmem:[#allocation11 + $0xfc] sm:$0xf]
    %v4410 = vld [vmem:[#allocation11 + $0x100] sm:$0xf]
    %v4411 = vld [vmem:[#allocation11 + $0x104] sm:$0xf]
    %v4412 = vld [vmem:[#allocation11 + $0x108] sm:$0xf]
    %v4413 = vld [vmem:[#allocation11 + $0x10c] sm:$0xf]
    %v4414 = vld [vmem:[#allocation11 + $0x110] sm:$0xf]
    %v4415 = vld [vmem:[#allocation11 + $0x114] sm:$0xf]
    %v4416 = vld [vmem:[#allocation11 + $0x118] sm:$0xf]
    %v4417 = vld [vmem:[#allocation11 + $0x11c] sm:$0xf]
    %v4418 = vld [vmem:[#allocation11 + $0x120] sm:$0xf]
    %v4419 = vld [vmem:[#allocation11 + $0x124] sm:$0xf]
    %v4420 = vld [vmem:[#allocation11 + $0x128] sm:$0xf]
    %v4421 = vld [vmem:[#allocation11 + $0x12c] sm:$0xf]
    %v4422 = vld [vmem:[#allocation11 + $0x130] sm:$0xf]
    %v4423 = vld [vmem:[#allocation11 + $0x134] sm:$0xf]
    %v4424 = vld [vmem:[#allocation11 + $0x138] sm:$0xf]
    %v4425 = vld [vmem:[#allocation11 + $0x13c] sm:$0xf]
    %v4426 = vld [vmem:[#allocation11 + $0x140] sm:$0xf]
    %v4427 = vld [vmem:[#allocation11 + $0x144] sm:$0xf]
    %v4428 = vld [vmem:[#allocation11 + $0x148] sm:$0xf]
    %v4429 = vld [vmem:[#allocation11 + $0x14c] sm:$0xf]
    %v4430 = vld [vmem:[#allocation11 + $0x150] sm:$0xf]
    %v4431 = vld [vmem:[#allocation11 + $0x154] sm:$0xf]
    %v4432 = vld [vmem:[#allocation11 + $0x158] sm:$0xf]
    %v4433 = vld [vmem:[#allocation11 + $0x15c] sm:$0xf]
    %v4434 = vld [vmem:[#allocation11 + $0x160] sm:$0xf]
    %v4435 = vld [vmem:[#allocation11 + $0x164] sm:$0xf]
    %v4436 = vld [vmem:[#allocation11 + $0x168] sm:$0xf]
    %v4437 = vld [vmem:[#allocation11 + $0x16c] sm:$0xf]
    %v4438 = vld [vmem:[#allocation11 + $0x170] sm:$0xf]
    %v4439 = vld [vmem:[#allocation11 + $0x174] sm:$0xf]
    %v4440 = vld [vmem:[#allocation11 + $0x178] sm:$0xf]
    %v4441 = vld [vmem:[#allocation11 + $0x17c] sm:$0xf]
    %v4442 = vld [vmem:[#allocation11 + $0x180] sm:$0xf]
    %v4443 = vld [vmem:[#allocation11 + $0x184] sm:$0xf]
    %v4444 = vld [vmem:[#allocation11 + $0x188] sm:$0xf]
    %v4445 = vld [vmem:[#allocation11 + $0x18c] sm:$0xf]
    %v4446 = vld [vmem:[#allocation11 + $0x190] sm:$0xf]
    %v4447 = vld [vmem:[#allocation11 + $0x194] sm:$0xf]
    %v4448 = vld [vmem:[#allocation11 + $0x198] sm:$0xf]
    %v4449 = vld [vmem:[#allocation11 + $0x19c] sm:$0xf]
    %v4450 = vld [vmem:[#allocation11 + $0x1a0] sm:$0xf]
    %v4451 = vld [vmem:[#allocation11 + $0x1a4] sm:$0xf]
    %v4452 = vld [vmem:[#allocation11 + $0x1a8] sm:$0xf]
    %v4453 = vld [vmem:[#allocation11 + $0x1ac] sm:$0xf]
    %v4454 = vld [vmem:[#allocation11 + $0x1b0] sm:$0xf]
    %v4455 = vld [vmem:[#allocation11 + $0x1b4] sm:$0xf]
    %v4456 = vld [vmem:[#allocation11 + $0x1b8] sm:$0xf]
    %v4457 = vld [vmem:[#allocation11 + $0x1bc] sm:$0xf]
    %v4458 = vld [vmem:[#allocation11 + $0x1c0] sm:$0xf]
    %v4459 = vld [vmem:[#allocation11 + $0x1c4] sm:$0xf]
    %v4460 = vld [vmem:[#allocation11 + $0x1c8] sm:$0xf]
    %v4461 = vld [vmem:[#allocation11 + $0x1cc] sm:$0xf]
    %v4462 = vld [vmem:[#allocation11 + $0x1d0] sm:$0xf]
    %v4463 = vld [vmem:[#allocation11 + $0x1d4] sm:$0xf]
    %v4464 = vld [vmem:[#allocation11 + $0x1d8] sm:$0xf]
    %v4465 = vld [vmem:[#allocation11 + $0x1dc] sm:$0xf]
    %v4466 = vld [vmem:[#allocation11 + $0x1e0] sm:$0xf]
    %v4467 = vld [vmem:[#allocation11 + $0x1e4] sm:$0xf]
    %v4468 = vld [vmem:[#allocation11 + $0x1e8] sm:$0xf]
    %v4469 = vld [vmem:[#allocation11 + $0x1ec] sm:$0xf]
    %v4470 = vld [vmem:[#allocation11 + $0x1f0] sm:$0xf]
    %v4471 = vld [vmem:[#allocation11 + $0x1f4] sm:$0xf]
    %v4472 = vld [vmem:[#allocation11 + $0x1f8] sm:$0xf]
    %v4473 = vld [vmem:[#allocation11 + $0x1fc] sm:$0xf]
    %v4474 = vld [vmem:[#allocation13] sm:$0x1]
    %v4476 = vlaneseq
    %v4477 = vshrl.u32 %v4476, 7
    %v4478 = vsub.s32 0, %v4477
    %v4479 = vrot.slane %v4474, %v4478
    %v4609 = vunpack.c.l.b16 %v4346
    %v4610 = vunpack.c.l.b16 %v4347
    %v4611 = vunpack.c.l.b16 %v4348
    %v4612 = vunpack.c.l.b16 %v4349
    %v4613 = vunpack.c.l.b16 %v4350
    %v4614 = vunpack.c.l.b16 %v4351
    %v4615 = vunpack.c.l.b16 %v4352
    %v4616 = vunpack.c.l.b16 %v4353
    %v4617 = vunpack.c.l.b16 %v4354
    %v4618 = vunpack.c.l.b16 %v4355
    %v4619 = vunpack.c.l.b16 %v4356
    %v4620 = vunpack.c.l.b16 %v4357
    %v4621 = vunpack.c.l.b16 %v4358
    %v4622 = vunpack.c.l.b16 %v4359
    %v4623 = vunpack.c.l.b16 %v4360
    %v4624 = vunpack.c.l.b16 %v4361
    %v4625 = vunpack.c.l.b16 %v4362
    %v4626 = vunpack.c.l.b16 %v4363
    %v4627 = vunpack.c.l.b16 %v4364
    %v4628 = vunpack.c.l.b16 %v4365
    %v4629 = vunpack.c.l.b16 %v4366
    %v4630 = vunpack.c.l.b16 %v4367
    %v4631 = vunpack.c.l.b16 %v4368
    %v4632 = vunpack.c.l.b16 %v4369
    %v4633 = vunpack.c.l.b16 %v4370
    %v4634 = vunpack.c.l.b16 %v4371
    %v4635 = vunpack.c.l.b16 %v4372
    %v4636 = vunpack.c.l.b16 %v4373
    %v4637 = vunpack.c.l.b16 %v4374
    %v4638 = vunpack.c.l.b16 %v4375
    %v4639 = vunpack.c.l.b16 %v4376
    %v4640 = vunpack.c.l.b16 %v4377
    %v4641 = vunpack.c.l.b16 %v4378
    %v4642 = vunpack.c.l.b16 %v4379
    %v4643 = vunpack.c.l.b16 %v4380
    %v4644 = vunpack.c.l.b16 %v4381
    %v4645 = vunpack.c.l.b16 %v4382
    %v4646 = vunpack.c.l.b16 %v4383
    %v4647 = vunpack.c.l.b16 %v4384
    %v4648 = vunpack.c.l.b16 %v4385
    %v4649 = vunpack.c.l.b16 %v4386
    %v4650 = vunpack.c.l.b16 %v4387
    %v4651 = vunpack.c.l.b16 %v4388
    %v4652 = vunpack.c.l.b16 %v4389
    %v4653 = vunpack.c.l.b16 %v4390
    %v4654 = vunpack.c.l.b16 %v4391
    %v4655 = vunpack.c.l.b16 %v4392
    %v4656 = vunpack.c.l.b16 %v4393
    %v4657 = vunpack.c.l.b16 %v4394
    %v4658 = vunpack.c.l.b16 %v4395
    %v4659 = vunpack.c.l.b16 %v4396
    %v4660 = vunpack.c.l.b16 %v4397
    %v4661 = vunpack.c.l.b16 %v4398
    %v4662 = vunpack.c.l.b16 %v4399
    %v4663 = vunpack.c.l.b16 %v4400
    %v4664 = vunpack.c.l.b16 %v4401
    %v4665 = vunpack.c.l.b16 %v4402
    %v4666 = vunpack.c.l.b16 %v4403
    %v4667 = vunpack.c.l.b16 %v4404
    %v4668 = vunpack.c.l.b16 %v4405
    %v4669 = vunpack.c.l.b16 %v4406
    %v4670 = vunpack.c.l.b16 %v4407
    %v4671 = vunpack.c.l.b16 %v4408
    %v4672 = vunpack.c.l.b16 %v4409
    %v4673 = vunpack.c.l.b16 %v4410
    %v4674 = vunpack.c.l.b16 %v4411
    %v4675 = vunpack.c.l.b16 %v4412
    %v4676 = vunpack.c.l.b16 %v4413
    %v4677 = vunpack.c.l.b16 %v4414
    %v4678 = vunpack.c.l.b16 %v4415
    %v4679 = vunpack.c.l.b16 %v4416
    %v4680 = vunpack.c.l.b16 %v4417
    %v4681 = vunpack.c.l.b16 %v4418
    %v4682 = vunpack.c.l.b16 %v4419
    %v4683 = vunpack.c.l.b16 %v4420
    %v4684 = vunpack.c.l.b16 %v4421
    %v4685 = vunpack.c.l.b16 %v4422
    %v4686 = vunpack.c.l.b16 %v4423
    %v4687 = vunpack.c.l.b16 %v4424
    %v4688 = vunpack.c.l.b16 %v4425
    %v4689 = vunpack.c.l.b16 %v4426
    %v4690 = vunpack.c.l.b16 %v4427
    %v4691 = vunpack.c.l.b16 %v4428
    %v4692 = vunpack.c.l.b16 %v4429
    %v4693 = vunpack.c.l.b16 %v4430
    %v4694 = vunpack.c.l.b16 %v4431
    %v4695 = vunpack.c.l.b16 %v4432
    %v4696 = vunpack.c.l.b16 %v4433
    %v4697 = vunpack.c.l.b16 %v4434
    %v4698 = vunpack.c.l.b16 %v4435
    %v4699 = vunpack.c.l.b16 %v4436
    %v4700 = vunpack.c.l.b16 %v4437
    %v4701 = vunpack.c.l.b16 %v4438
    %v4702 = vunpack.c.l.b16 %v4439
    %v4703 = vunpack.c.l.b16 %v4440
    %v4704 = vunpack.c.l.b16 %v4441
    %v4705 = vunpack.c.l.b16 %v4442
    %v4706 = vunpack.c.l.b16 %v4443
    %v4707 = vunpack.c.l.b16 %v4444
    %v4708 = vunpack.c.l.b16 %v4445
    %v4709 = vunpack.c.l.b16 %v4446
    %v4710 = vunpack.c.l.b16 %v4447
    %v4711 = vunpack.c.l.b16 %v4448
    %v4712 = vunpack.c.l.b16 %v4449
    %v4713 = vunpack.c.l.b16 %v4450
    %v4714 = vunpack.c.l.b16 %v4451
    %v4715 = vunpack.c.l.b16 %v4452
    %v4716 = vunpack.c.l.b16 %v4453
    %v4717 = vunpack.c.l.b16 %v4454
    %v4718 = vunpack.c.l.b16 %v4455
    %v4719 = vunpack.c.l.b16 %v4456
    %v4720 = vunpack.c.l.b16 %v4457
    %v4721 = vunpack.c.l.b16 %v4458
    %v4722 = vunpack.c.l.b16 %v4459
    %v4723 = vunpack.c.l.b16 %v4460
    %v4724 = vunpack.c.l.b16 %v4461
    %v4725 = vunpack.c.l.b16 %v4462
    %v4726 = vunpack.c.l.b16 %v4463
    %v4727 = vunpack.c.l.b16 %v4464
    %v4728 = vunpack.c.l.b16 %v4465
    %v4729 = vunpack.c.l.b16 %v4466
    %v4730 = vunpack.c.l.b16 %v4467
    %v4731 = vunpack.c.l.b16 %v4468
    %v4732 = vunpack.c.l.b16 %v4469
    %v4733 = vunpack.c.l.b16 %v4470
    %v4734 = vunpack.c.l.b16 %v4471
    %v4735 = vunpack.c.l.b16 %v4472
    %v4736 = vunpack.c.l.b16 %v4473
    %v4737 = vpack.c.b16 %v4610, %v4609
    %v4738 = vpack.c.b16 %v4612, %v4611
    %v4739 = vpack.c.b16 %v4614, %v4613
    %v4740 = vpack.c.b16 %v4616, %v4615
    %v4741 = vpack.c.b16 %v4618, %v4617
    %v4742 = vpack.c.b16 %v4620, %v4619
    %v4743 = vpack.c.b16 %v4622, %v4621
    %v4744 = vpack.c.b16 %v4624, %v4623
    %v4745 = vpack.c.b16 %v4626, %v4625
    %v4746 = vpack.c.b16 %v4628, %v4627
    %v4747 = vpack.c.b16 %v4630, %v4629
    %v4748 = vpack.c.b16 %v4632, %v4631
    %v4749 = vpack.c.b16 %v4634, %v4633
    %v4750 = vpack.c.b16 %v4636, %v4635
    %v4751 = vpack.c.b16 %v4638, %v4637
    %v4752 = vpack.c.b16 %v4640, %v4639
    %v4753 = vpack.c.b16 %v4642, %v4641
    %v4754 = vpack.c.b16 %v4644, %v4643
    %v4755 = vpack.c.b16 %v4646, %v4645
    %v4756 = vpack.c.b16 %v4648, %v4647
    %v4757 = vpack.c.b16 %v4650, %v4649
    %v4758 = vpack.c.b16 %v4652, %v4651
    %v4759 = vpack.c.b16 %v4654, %v4653
    %v4760 = vpack.c.b16 %v4656, %v4655
    %v4761 = vpack.c.b16 %v4658, %v4657
    %v4762 = vpack.c.b16 %v4660, %v4659
    %v4763 = vpack.c.b16 %v4662, %v4661
    %v4764 = vpack.c.b16 %v4664, %v4663
    %v4765 = vpack.c.b16 %v4666, %v4665
    %v4766 = vpack.c.b16 %v4668, %v4667
    %v4767 = vpack.c.b16 %v4670, %v4669
    %v4768 = vpack.c.b16 %v4672, %v4671
    %v4769 = vpack.c.b16 %v4674, %v4673
    %v4770 = vpack.c.b16 %v4676, %v4675
    %v4771 = vpack.c.b16 %v4678, %v4677
    %v4772 = vpack.c.b16 %v4680, %v4679
    %v4773 = vpack.c.b16 %v4682, %v4681
    %v4774 = vpack.c.b16 %v4684, %v4683
    %v4775 = vpack.c.b16 %v4686, %v4685
    %v4776 = vpack.c.b16 %v4688, %v4687
    %v4777 = vpack.c.b16 %v4690, %v4689
    %v4778 = vpack.c.b16 %v4692, %v4691
    %v4779 = vpack.c.b16 %v4694, %v4693
    %v4780 = vpack.c.b16 %v4696, %v4695
    %v4781 = vpack.c.b16 %v4698, %v4697
    %v4782 = vpack.c.b16 %v4700, %v4699
    %v4783 = vpack.c.b16 %v4702, %v4701
    %v4784 = vpack.c.b16 %v4704, %v4703
    %v4785 = vpack.c.b16 %v4706, %v4705
    %v4786 = vpack.c.b16 %v4708, %v4707
    %v4787 = vpack.c.b16 %v4710, %v4709
    %v4788 = vpack.c.b16 %v4712, %v4711
    %v4789 = vpack.c.b16 %v4714, %v4713
    %v4790 = vpack.c.b16 %v4716, %v4715
    %v4791 = vpack.c.b16 %v4718, %v4717
    %v4792 = vpack.c.b16 %v4720, %v4719
    %v4793 = vpack.c.b16 %v4722, %v4721
    %v4794 = vpack.c.b16 %v4724, %v4723
    %v4795 = vpack.c.b16 %v4726, %v4725
    %v4796 = vpack.c.b16 %v4728, %v4727
    %v4797 = vpack.c.b16 %v4730, %v4729
    %v4798 = vpack.c.b16 %v4732, %v4731
    %v4799 = vpack.c.b16 %v4734, %v4733
    %v4800 = vpack.c.b16 %v4736, %v4735
    %4865 = vmatprep.subr.bf16.mxu0 0
    %4866 = vmatpush1.bf16.msra.mxu0 %v4744
    %4867 = vmatprep.subr.bf16.mxu0 0
    %4868 = vmatpush1.bf16.msra.mxu0 %v4743
    %4869 = vmatprep.subr.bf16.mxu0 0
    %4870 = vmatpush1.bf16.msra.mxu0 %v4742
    %4871 = vmatprep.subr.bf16.mxu0 0
    %4872 = vmatpush1.bf16.msra.mxu0 %v4741
    %4873 = vmatprep.subr.bf16.mxu0 0
    %4874 = vmatpush1.bf16.msra.mxu0 %v4740
    %4875 = vmatprep.subr.bf16.mxu0 0
    %4876 = vmatpush1.bf16.msra.mxu0 %v4739
    %4877 = vmatprep.subr.bf16.mxu0 0
    %4878 = vmatpush1.bf16.msra.mxu0 %v4738
    %4879 = vmatprep.subr.bf16.mxu0 0
    %4880 = vmatpush1.bf16.msra.mxu0 %v4737
    %4881 = vmatprep.subr.bf16.mxu0 0
    %4882 = vmatpush2.bf16.msra.mxu0 %v4752
    %4883 = vmatprep.subr.bf16.mxu0 0
    %4884 = vmatpush2.bf16.msra.mxu0 %v4751
    %4885 = vmatprep.subr.bf16.mxu0 0
    %4886 = vmatpush2.bf16.msra.mxu0 %v4750
    %4887 = vmatprep.subr.bf16.mxu0 0
    %4888 = vmatpush2.bf16.msra.mxu0 %v4749
    %4889 = vmatprep.subr.bf16.mxu0 0
    %4890 = vmatpush2.bf16.msra.mxu0 %v4748
    %4891 = vmatprep.subr.bf16.mxu0 0
    %4892 = vmatpush2.bf16.msra.mxu0 %v4747
    %4893 = vmatprep.subr.bf16.mxu0 0
    %4894 = vmatpush2.bf16.msra.mxu0 %v4746
    %4895 = vmatprep.subr.bf16.mxu0 0
    %4896 = vmatpush2.bf16.msra.mxu0 %v4745
    %4897 = vmatprep.mubr.bf16.mxu0 %v4339
    %4898 = vmatmul.mubr.bf16.gmra.mxu0 %v4338
    %v4899 = vpop.f32.mrf.mxu0
    %v4900 = vadd.f32 %v4479, %v4899
    %v4901 = vpop.f32.mrf.mxu0
    %v4902 = vpop.f32.mrf.mxu0
    %v4903 = vadd.f32 %v4479, %v4902
    %v4904 = vpop.f32.mrf.mxu0
    %4905 = vdwg.mxu0
    %4906 = vmatprep.subr.bf16.mxu0 0
    %4907 = vmatpush1.bf16.msra.mxu0 %v4760
    %4908 = vmatprep.subr.bf16.mxu0 0
    %4909 = vmatpush1.bf16.msra.mxu0 %v4759
    %4910 = vmatprep.subr.bf16.mxu0 0
    %4911 = vmatpush1.bf16.msra.mxu0 %v4758
    %4912 = vmatprep.subr.bf16.mxu0 0
    %4913 = vmatpush1.bf16.msra.mxu0 %v4757
    %4914 = vmatprep.subr.bf16.mxu0 0
    %4915 = vmatpush1.bf16.msra.mxu0 %v4756
    %4916 = vmatprep.subr.bf16.mxu0 0
    %4917 = vmatpush1.bf16.msra.mxu0 %v4755
    %4918 = vmatprep.subr.bf16.mxu0 0
    %4919 = vmatpush1.bf16.msra.mxu0 %v4754
    %4920 = vmatprep.subr.bf16.mxu0 0
    %4921 = vmatpush1.bf16.msra.mxu0 %v4753
    %4922 = vmatprep.subr.bf16.mxu0 0
    %4923 = vmatpush2.bf16.msra.mxu0 %v4768
    %4924 = vmatprep.subr.bf16.mxu0 0
    %4925 = vmatpush2.bf16.msra.mxu0 %v4767
    %4926 = vmatprep.subr.bf16.mxu0 0
    %4927 = vmatpush2.bf16.msra.mxu0 %v4766
    %4928 = vmatprep.subr.bf16.mxu0 0
    %4929 = vmatpush2.bf16.msra.mxu0 %v4765
    %4930 = vmatprep.subr.bf16.mxu0 0
    %4931 = vmatpush2.bf16.msra.mxu0 %v4764
    %4932 = vmatprep.subr.bf16.mxu0 0
    %4933 = vmatpush2.bf16.msra.mxu0 %v4763
    %4934 = vmatprep.subr.bf16.mxu0 0
    %4935 = vmatpush2.bf16.msra.mxu0 %v4762
    %4936 = vmatprep.subr.bf16.mxu0 0
    %4937 = vmatpush2.bf16.msra.mxu0 %v4761
    %4938 = vmatprep.mubr.bf16.mxu0 %v4341
    %4939 = vmatmul.mubr.bf16.gmra.mxu0 %v4340
    %v4940 = vpop.f32.mrf.mxu0
    %v4941 = vadd.f32 %v4900, %v4940
    %v4942 = vpop.f32.mrf.mxu0
    %v4943 = vpop.f32.mrf.mxu0
    %v4944 = vadd.f32 %v4903, %v4943
    %v4945 = vpop.f32.mrf.mxu0
    %4946 = vdwg.mxu0
    %4947 = vmatprep.subr.bf16.mxu0 0
    %4948 = vmatpush1.bf16.msra.mxu0 %v4776
    %4949 = vmatprep.subr.bf16.mxu0 0
    %4950 = vmatpush1.bf16.msra.mxu0 %v4775
    %4951 = vmatprep.subr.bf16.mxu0 0
    %4952 = vmatpush1.bf16.msra.mxu0 %v4774
    %4953 = vmatprep.subr.bf16.mxu0 0
    %4954 = vmatpush1.bf16.msra.mxu0 %v4773
    %4955 = vmatprep.subr.bf16.mxu0 0
    %4956 = vmatpush1.bf16.msra.mxu0 %v4772
    %4957 = vmatprep.subr.bf16.mxu0 0
    %4958 = vmatpush1.bf16.msra.mxu0 %v4771
    %4959 = vmatprep.subr.bf16.mxu0 0
    %4960 = vmatpush1.bf16.msra.mxu0 %v4770
    %4961 = vmatprep.subr.bf16.mxu0 0
    %4962 = vmatpush1.bf16.msra.mxu0 %v4769
    %4963 = vmatprep.subr.bf16.mxu0 0
    %4964 = vmatpush2.bf16.msra.mxu0 %v4784
    %4965 = vmatprep.subr.bf16.mxu0 0
    %4966 = vmatpush2.bf16.msra.mxu0 %v4783
    %4967 = vmatprep.subr.bf16.mxu0 0
    %4968 = vmatpush2.bf16.msra.mxu0 %v4782
    %4969 = vmatprep.subr.bf16.mxu0 0
    %4970 = vmatpush2.bf16.msra.mxu0 %v4781
    %4971 = vmatprep.subr.bf16.mxu0 0
    %4972 = vmatpush2.bf16.msra.mxu0 %v4780
    %4973 = vmatprep.subr.bf16.mxu0 0
    %4974 = vmatpush2.bf16.msra.mxu0 %v4779
    %4975 = vmatprep.subr.bf16.mxu0 0
    %4976 = vmatpush2.bf16.msra.mxu0 %v4778
    %4977 = vmatprep.subr.bf16.mxu0 0
    %4978 = vmatpush2.bf16.msra.mxu0 %v4777
    %4979 = vmatprep.mubr.bf16.mxu0 %v4343
    %4980 = vmatmul.mubr.bf16.gmra.mxu0 %v4342
    %v4981 = vpop.f32.mrf.mxu0
    %v4982 = vadd.f32 %v4941, %v4981
    %v4983 = vpop.f32.mrf.mxu0
    %v4984 = vpop.f32.mrf.mxu0
    %v4985 = vadd.f32 %v4944, %v4984
    %v4986 = vpop.f32.mrf.mxu0
    %4987 = vdwg.mxu0
    %4988 = vmatprep.subr.bf16.mxu0 0
    %4989 = vmatpush1.bf16.msra.mxu0 %v4792
    %4990 = vmatprep.subr.bf16.mxu0 0
    %4991 = vmatpush1.bf16.msra.mxu0 %v4791
    %4992 = vmatprep.subr.bf16.mxu0 0
    %4993 = vmatpush1.bf16.msra.mxu0 %v4790
    %4994 = vmatprep.subr.bf16.mxu0 0
    %4995 = vmatpush1.bf16.msra.mxu0 %v4789
    %4996 = vmatprep.subr.bf16.mxu0 0
    %4997 = vmatpush1.bf16.msra.mxu0 %v4788
    %4998 = vmatprep.subr.bf16.mxu0 0
    %4999 = vmatpush1.bf16.msra.mxu0 %v4787
    %5000 = vmatprep.subr.bf16.mxu0 0
    %5001 = vmatpush1.bf16.msra.mxu0 %v4786
    %5002 = vmatprep.subr.bf16.mxu0 0
    %5003 = vmatpush1.bf16.msra.mxu0 %v4785
    %5004 = vmatprep.subr.bf16.mxu0 0
    %5005 = vmatpush2.bf16.msra.mxu0 %v4800
    %5006 = vmatprep.subr.bf16.mxu0 0
    %5007 = vmatpush2.bf16.msra.mxu0 %v4799
    %5008 = vmatprep.subr.bf16.mxu0 0
    %5009 = vmatpush2.bf16.msra.mxu0 %v4798
    %5010 = vmatprep.subr.bf16.mxu0 0
    %5011 = vmatpush2.bf16.msra.mxu0 %v4797
    %5012 = vmatprep.subr.bf16.mxu0 0
    %5013 = vmatpush2.bf16.msra.mxu0 %v4796
    %5014 = vmatprep.subr.bf16.mxu0 0
    %5015 = vmatpush2.bf16.msra.mxu0 %v4795
    %5016 = vmatprep.subr.bf16.mxu0 0
    %5017 = vmatpush2.bf16.msra.mxu0 %v4794
    %5018 = vmatprep.subr.bf16.mxu0 0
    %5019 = vmatpush2.bf16.msra.mxu0 %v4793
    %5020 = vmatprep.mubr.bf16.mxu0 %v4345
    %5021 = vmatmul.mubr.bf16.gmra.mxu0 %v4344
    %v5022 = vpop.f32.mrf.mxu0
    %v5023 = vadd.f32 %v4982, %v5022
    %v5024 = vpop.f32.mrf.mxu0
    %v5025 = vpop.f32.mrf.mxu0
    %v5026 = vadd.f32 %v4985, %v5025
    %v5027 = vpop.f32.mrf.mxu0
    %5028 = vdwg.mxu0
    %v5029 = vsub.f32 0.0, %v5023
    %v5030 = vsub.f32 0.0, %v5026
    %v5031 = vmul.f32 %v5029, 1.442695
    %v5032 = vpow.pop %v5031
    %v5033 = vmul.f32 %v5030, 1.442695
    %v5034 = vpow.pop %v5033
    %v5035 = vadd.f32 %v5032, 1.0
    %v5036 = vadd.f32 %v5034, 1.0
    %v5037 = vrcp.pop %v5035
    %v5038 = vrcp.pop %v5036
    %5039 = vst [vmem:[#allocation14] sm:$0xff] %v5037
    %5040 = vst [vmem:[#allocation14 + $0x8] sm:$0xff] %v5038
    // Predicated region
    $region58: #{tpu_custom_call.1} parent=1 // pred_check
      _
    $region59: #{tpu_custom_call.1} parent=1 // pred_check_branch
      %5042 = sbr.rel (0) target = $region61
    $region60: #{tpu_custom_call.1} parent=1 // pred_region
      %s5044 = ssub.s32 256, 32
      %5045 = vsyncadd [#allocation4], %s5044
      %s5046 = sshll.u32 [#allocation14], 4
      %s5047 = int_to_ptr.vmem [resolvable:$true] %s5046
      %5052 = dma.vmem_to_hbm [thread:$0]  %s5047, 32, %s7, [#allocation4], 32, 32, 2
    $region61: #{tpu_custom_call.1} parent=1 // pred_fallthru
      _
    // Predicated region
    $region62: #{tpu_custom_call.1} parent=1 // pred_check
      _
    $region63: #{tpu_custom_call.1} parent=1 // pred_check_branch
      %5054 = sbr.rel (0) target = $region65
    $region64: #{tpu_custom_call.1} parent=1 // pred_region
      %5055 = dma.done [#allocation4], 256
    $region65: #{tpu_custom_call.1} parent=1 // pred_fallthru
      _
    %5056 = vsyncpa [#allocation3], 1
    %5057 = vsyncpa [#allocation6], 1
    %5058 = vsyncpa [#allocation9], 1
    %5059 = vsyncpa [#allocation12], 1
    %5060 = vsyncpa [#allocation4], 1

</llo_original>
